<compile_context>
chip_gen: v7x
topology: tpu7x:2x2x1
jax: 0.10.0
libtpu: 0.0.40
codegen_flags: <defaults>
</compile_context>

<pallas_src>
import math
import jax
import jax.numpy as jnp
from jax import lax
from jax.experimental import pallas as pl
from jax.experimental.pallas import tpu as pltpu

# ----- small "CLIP-like" config -----
B, S, D, H, LAYERS, P = 2, 8, 64, 4, 2, 32   # batch, seq, width, heads, layers, proj
DH = D // H
HID = 4 * D
EPS = 1e-5
BS = B * S


def _ln(x, g, b):
    """LayerNorm over last dim (used both inside the kernel and in the reference)."""
    mu = jnp.mean(x, axis=-1, keepdims=True)
    var = jnp.mean(jnp.square(x - mu), axis=-1, keepdims=True)
    return (x - mu) * lax.rsqrt(var + EPS) * g + b


def _bf16_dot(x, w):
    """MXU matmul: bf16 operands, f32 accumulation."""
    return jnp.dot(x.astype(jnp.bfloat16), w.astype(jnp.bfloat16),
                   preferred_element_type=jnp.float32)


# ---------------- fused Pallas kernel ----------------

def text_encoder_kernel(prompts_ref, pos_ref, eot_ref,
                        wqkv_ref, bqkv_ref, wo_ref,
                        w1_ref, b1_ref, w2_ref,
                        vecs_ref, lnf_ref, proj_ref,
                        o_ref):
    # x = prompts + positional_embedding, kept as a flat (B*S, D) f32 slab.
    x = (prompts_ref[...] + pos_ref[...][None, :, :]).reshape(BS, D)

    # Additive causal mask (CLIP build_attention_mask), hoisted out of the loop.
    row = lax.broadcasted_iota(jnp.int32, (S, S), 0)
    col = lax.broadcasted_iota(jnp.int32, (S, S), 1)
    neg_mask = jnp.where(col <= row, 0.0, -1e30).astype(jnp.float32)[None, :, :]

    for l in range(LAYERS):                                # static unroll (LAYERS=2)
        vecs = vecs_ref[l]                                 # (6, D) packed LN/bias slab
        ln1_g, ln1_b = vecs[0:1, :], vecs[1:2, :]
        ln2_g, ln2_b = vecs[2:3, :], vecs[3:4, :]
        bo, b2 = vecs[4:5, :], vecs[5:6, :]

        # ---- multi-head self-attention (causal) ----
        h = _ln(x, ln1_g, ln1_b)
        # q-columns of wqkv/bqkv are pre-scaled by 1/sqrt(DH) at pack time.
        qkv = _bf16_dot(h, wqkv_ref[l]) + bqkv_ref[l]      # (BS, 3D) f32

        attn_o = jnp.zeros((BS, D), jnp.float32)
        for hh in range(H):                                # static head loop (H=4)
            qh = qkv[:, 0 * D + hh * DH: 0 * D + (hh + 1) * DH] \
                .reshape(B, S, DH).astype(jnp.bfloat16)
            kh = qkv[:, 1 * D + hh * DH: 1 * D + (hh + 1) * DH] \
                .reshape(B, S, DH).astype(jnp.bfloat16)
            vh = qkv[:, 2 * D + hh * DH: 2 * D + (hh + 1) * DH] \
                .reshape(B, S, DH).astype(jnp.bfloat16)
            s = jnp.einsum('bqd,bkd->bqk', qh, kh,
                           preferred_element_type=jnp.float32)        # (B, S, S) f32
            s = s + neg_mask
            s = s - jnp.max(s, axis=-1, keepdims=True)
            p = jnp.exp(s)
            p = p * pl.reciprocal(jnp.sum(p, axis=-1, keepdims=True), approx=True)
            hv = jnp.einsum('bqk,bkd->bqd', p.astype(jnp.bfloat16), vh,
                            preferred_element_type=jnp.float32)       # (B, S, DH) f32
            # Head-major output projection accumulate (no lane concat).
            attn_o = attn_o + _bf16_dot(hv.reshape(BS, DH), wo_ref[l, hh])

        x = x + attn_o + bo                                # residual 1

        # ---- MLP: Linear -> QuickGELU -> Linear (elementwise math stays f32) ----
        h2 = _ln(x, ln2_g, ln2_b)
        m = _bf16_dot(h2, w1_ref[l]) + b1_ref[l]           # (BS, HID)
        z = jnp.exp(-1.702 * m)                            # QuickGELU: m * sigmoid(1.702 m)
        m = m * pl.reciprocal(1.0 + z, approx=True)
        x = x + _bf16_dot(m, w2_ref[l]) + b2               # residual 2

    # ---- EOT-row gather (one-hot matmul), ln_final, text_projection ----
    row_ids = lax.broadcasted_iota(jnp.int32, (B, BS), 1)
    targets = eot_ref[...] + S * lax.broadcasted_iota(jnp.int32, (B, 1), 0)
    sel = (row_ids == targets).astype(jnp.float32)                     # (B, BS)
    x_eot = jnp.dot(sel, x, preferred_element_type=jnp.float32)        # (B, D)
    x_eot = _ln(x_eot, lnf_ref[0:1, :], lnf_ref[1:2, :])
    o_ref[...] = jnp.dot(x_eot, proj_ref[...],
                         preferred_element_type=jnp.float32)           # (B, P)


# ---------------- parameter packing (done ONCE, outside the call path) -------

def pack_params(params):
    """Stack per-layer weights, fuse QKV (q pre-scaled by 1/sqrt(DH)), pack tiny
    LN/bias vectors, make wo head-major, and cast bulk matmul weights to bf16."""
    blocks = params['blocks']
    scale = 1.0 / math.sqrt(DH)
    stack = lambda key: jnp.stack([blk[key] for blk in blocks])
    wqkv = jnp.stack([jnp.concatenate([blk['wq'] * scale, blk['wk'], blk['wv']], axis=1)
                      for blk in blocks]).astype(jnp.bfloat16)          # (L, D, 3D)
    bqkv = jnp.stack([jnp.concatenate([blk['bq'] * scale, blk['bk'], blk['bv']], axis=1)
                      for blk in blocks])                               # (L, 1, 3D) f32
    wo_hm = jnp.stack([blk['wo'].reshape(H, DH, D) for blk in blocks]) \
        .astype(jnp.bfloat16)                                           # (L, H, DH, D)
    vecs = jnp.stack([jnp.concatenate([blk['ln1_g'], blk['ln1_b'],
                                       blk['ln2_g'], blk['ln2_b'],
                                       blk['bo'], blk['b2']], axis=0)
                      for blk in blocks])                               # (L, 6, D) f32
    return dict(
        pos=params['pos'],
        wqkv=wqkv, bqkv=bqkv,
        wo=wo_hm,
        w1=stack('w1').astype(jnp.bfloat16),
        b1=stack('b1'),
        w2=stack('w2').astype(jnp.bfloat16),
        vecs=vecs,
        lnf=jnp.concatenate([params['lnf_g'], params['lnf_b']], axis=0),  # (2, D)
        proj=params['proj'],                                              # f32 (tiny, error-sensitive)
    )


# ---------------- wrapper ----------------

def _cost_estimate():
    # MXU flops per layer per token: qkv + wo + 2 MLP matmuls + attention.
    per_tok_layer = 2 * (D * 3 * D + D * D + 2 * D * HID) + 4 * S * D
    flops = LAYERS * BS * per_tok_layer + 2 * B * BS * D + 2 * B * D * P
    transcendentals = LAYERS * BS * (H * S + HID)          # softmax exp + GELU exp
    weight_bytes = LAYERS * (D * 3 * D + D * D + 2 * D * HID) * 2 \
        + LAYERS * (3 * D + HID + 6 * D) * 4 + (2 * D + D * P) * 4
    act_bytes = (B * S * D + S * D + B * P) * 4 + B * 4
    return pl.CostEstimate(flops=flops, transcendentals=transcendentals,
                           bytes_accessed=weight_bytes + act_bytes)


def make_text_encoder():
    vmem = pl.BlockSpec(memory_space=pltpu.MemorySpace.VMEM)
    call = pl.pallas_call(
        text_encoder_kernel,
        out_shape=jax.ShapeDtypeStruct((B, P), jnp.float32),
        in_specs=[vmem] * 12,
        out_specs=vmem,
        cost_estimate=_cost_estimate(),
    )

    @jax.jit
    def fwd(prompts, tokenized_prompts, kp):
        # argmax over token ids (EOT position) — plain-JAX glue, fed as int32 indices.
        eot = jnp.argmax(tokenized_prompts, axis=-1).astype(jnp.int32).reshape(B, 1)
        return call(prompts, kp['pos'], eot,
                    kp['wqkv'], kp['bqkv'], kp['wo'],
                    kp['w1'], kp['b1'], kp['w2'],
                    kp['vecs'], kp['lnf'], kp['proj'])

    return fwd


# ---------------- deterministic parameter init ----------------

def init_params(key):
    keys = iter(jax.random.split(key, 8 + LAYERS * 16))

    def nrm(shape, scale=0.02):
        return (scale * jax.random.normal(next(keys), shape)).astype(jnp.float32)

    params = {
        'pos': nrm((S, D), 0.01),                 # positional_embedding
        'lnf_g': jnp.ones((1, D), jnp.float32),   # ln_final
        'lnf_b': jnp.zeros((1, D), jnp.float32),
        'proj': nrm((D, P), D ** -0.5),           # text_projection
        'blocks': [],
    }
    for _ in range(LAYERS):
        params['blocks'].append({
            'ln1_g': jnp.ones((1, D), jnp.float32),
            'ln1_b': jnp.zeros((1, D), jnp.float32),
            'wq': nrm((D, D)), 'wk': nrm((D, D)), 'wv': nrm((D, D)),
            'bq': nrm((1, D), 0.01), 'bk': nrm((1, D), 0.01), 'bv': nrm((1, D), 0.01),
            'wo': nrm((D, D)), 'bo': nrm((1, D), 0.01),
            'ln2_g': jnp.ones((1, D), jnp.float32),
            'ln2_b': jnp.zeros((1, D), jnp.float32),
            'w1': nrm((D, HID)), 'b1': nrm((1, HID), 0.01),
            'w2': nrm((HID, D)), 'b2': nrm((1, D), 0.01),
        })
    return params


# ---------------- pure-JAX f32 reference for correctness ----------------

def _ref_block(x, p):
    h = _ln(x, p['ln1_g'], p['ln1_b'])
    q = (h @ p['wq'] + p['bq']).reshape(B, S, H, DH)
    k = (h @ p['wk'] + p['bk']).reshape(B, S, H, DH)
    v = (h @ p['wv'] + p['bv']).reshape(B, S, H, DH)
    s = jnp.einsum('bqhd,bkhd->bhqk', q, k) / math.sqrt(DH)
    mask = jnp.tril(jnp.ones((S, S), bool))
    s = jnp.where(mask, s, -1e30)
    a = jax.nn.softmax(s, axis=-1)
    o = jnp.einsum('bhqk,bkhd->bqhd', a, v).reshape(B, S, D)
    x = x + (o @ p['wo'] + p['bo'])
    h2 = _ln(x, p['ln2_g'], p['ln2_b'])
    m = h2 @ p['w1'] + p['b1']
    m = m * jax.nn.sigmoid(1.702 * m)
    return x + (m @ p['w2'] + p['b2'])


def ref_text_encoder(prompts, tokenized, params):
    x = prompts + params['pos']
    for p in params['blocks']:
        x = _ref_block(x, p)
    x = _ln(x, params['lnf_g'], params['lnf_b'])
    eot = jnp.argmax(tokenized, axis=-1)
    return x[jnp.arange(B), eot] @ params['proj']


if __name__ == "__main__":
    key = jax.random.PRNGKey(0)
    kp_, kt_, kw_ = jax.random.split(key, 3)
    params = init_params(kw_)

    prompts = jax.random.normal(kp_, (B, S, D), jnp.float32)
    # synthetic tokenized prompts: one "EOT" (largest token id) per row
    tokenized = jax.random.randint(kt_, (B, S), 1, 100).astype(jnp.int32)
    eot_pos = jnp.array([S - 1, S // 2], jnp.int32)
    tokenized = tokenized.at[jnp.arange(B), eot_pos].set(30000)

    # Pack weights ONCE (outside the per-call path), build the jitted forward.
    packed = jax.block_until_ready(pack_params(params))
    fwd = make_text_encoder()

    out = fwd(prompts, tokenized, packed)
    out = jax.block_until_ready(out)

    ref = ref_text_encoder(prompts, tokenized, params)
    assert out.shape == (B, P)
    assert jnp.allclose(out, ref, rtol=2e-2, atol=2e-2)
    print("KERNEL_OK")
</pallas_src>

<mosaic_0001>
module attributes {stable_mosaic.version = 11 : i64} {
  func.func @text_encoder_kernel(%arg0: memref<2x8x64xf32, #tpu.memory_space<vmem>>, %arg1: memref<8x64xf32, #tpu.memory_space<vmem>>, %arg2: memref<2x1xi32, #tpu.memory_space<vmem>>, %arg3: memref<2x64x192xbf16, #tpu.memory_space<vmem>>, %arg4: memref<2x1x192xf32, #tpu.memory_space<vmem>>, %arg5: memref<2x4x16x64xbf16, #tpu.memory_space<vmem>>, %arg6: memref<2x64x256xbf16, #tpu.memory_space<vmem>>, %arg7: memref<2x1x256xf32, #tpu.memory_space<vmem>>, %arg8: memref<2x256x64xbf16, #tpu.memory_space<vmem>>, %arg9: memref<2x6x64xf32, #tpu.memory_space<vmem>>, %arg10: memref<2x64xf32, #tpu.memory_space<vmem>>, %arg11: memref<64x32xf32, #tpu.memory_space<vmem>>, %arg12: memref<2x32xf32, #tpu.memory_space<vmem>>) attributes {dimension_semantics = [], scalar_prefetch = 0 : i64, scratch_operands = 0 : i64, tpu.core_type = #tpu.core_type<tc>} {
    %c0 = arith.constant 0 : index
    %c0_0 = arith.constant 0 : index
    %c0_1 = arith.constant 0 : index
    %0 = vector.load %arg0[%c0, %c0_0, %c0_1] : memref<2x8x64xf32, #tpu.memory_space<vmem>>, vector<2x8x64xf32>
    %c0_2 = arith.constant 0 : index
    %c0_3 = arith.constant 0 : index
    %1 = vector.load %arg1[%c0_2, %c0_3] : memref<8x64xf32, #tpu.memory_space<vmem>>, vector<8x64xf32>
    %2 = vector.shape_cast %1 : vector<8x64xf32> to vector<1x8x64xf32>
    %3 = vector.broadcast %2 : vector<1x8x64xf32> to vector<2x8x64xf32>
    %4 = arith.addf %0, %3 : vector<2x8x64xf32>
    %5 = vector.shape_cast %4 : vector<2x8x64xf32> to vector<16x64xf32>
    %6 = tpu.iota {dimensions = array<i32: 0>} : vector<8x8xi32>
    %7 = tpu.iota {dimensions = array<i32: 1>} : vector<8x8xi32>
    %8 = arith.cmpi sle, %7, %6 : vector<8x8xi32>
    %cst = arith.constant 0.000000e+00 : f32
    %cst_4 = arith.constant -1.000000e+30 : f32
    %9 = vector.broadcast %cst : f32 to vector<8x8xf32>
    %10 = vector.broadcast %cst_4 : f32 to vector<8x8xf32>
    %11 = arith.select %8, %9, %10 : vector<8x8xi1>, vector<8x8xf32>
    %12 = vector.shape_cast %11 : vector<8x8xf32> to vector<1x8x8xf32>
    %c0_5 = arith.constant 0 : index
    %c0_6 = arith.constant 0 : index
    %c0_7 = arith.constant 0 : index
    %13 = vector.load %arg9[%c0_5, %c0_6, %c0_7] : memref<2x6x64xf32, #tpu.memory_space<vmem>>, vector<1x6x64xf32>
    %14 = vector.shape_cast %13 : vector<1x6x64xf32> to vector<6x64xf32>
    %15 = vector.extract_strided_slice %14 {offsets = [0, 0], sizes = [1, 64], strides = [1, 1]} : vector<6x64xf32> to vector<1x64xf32>
    %16 = vector.extract_strided_slice %14 {offsets = [1, 0], sizes = [1, 64], strides = [1, 1]} : vector<6x64xf32> to vector<1x64xf32>
    %17 = vector.extract_strided_slice %14 {offsets = [2, 0], sizes = [1, 64], strides = [1, 1]} : vector<6x64xf32> to vector<1x64xf32>
    %18 = vector.extract_strided_slice %14 {offsets = [3, 0], sizes = [1, 64], strides = [1, 1]} : vector<6x64xf32> to vector<1x64xf32>
    %19 = vector.extract_strided_slice %14 {offsets = [4, 0], sizes = [1, 64], strides = [1, 1]} : vector<6x64xf32> to vector<1x64xf32>
    %20 = vector.extract_strided_slice %14 {offsets = [5, 0], sizes = [1, 64], strides = [1, 1]} : vector<6x64xf32> to vector<1x64xf32>
    %cst_8 = arith.constant dense<0.000000e+00> : vector<16xf32>
    %21 = vector.multi_reduction <add>, %5, %cst_8 [1] : vector<16x64xf32> to vector<16xf32>
    %22 = vector.shape_cast %21 : vector<16xf32> to vector<16x1xf32>
    %cst_9 = arith.constant 6.400000e+01 : f32
    %23 = vector.broadcast %cst_9 : f32 to vector<16x1xf32>
    %24 = arith.divf %22, %23 : vector<16x1xf32>
    %25 = vector.broadcast %24 : vector<16x1xf32> to vector<16x64xf32>
    %26 = arith.subf %5, %25 : vector<16x64xf32>
    %27 = arith.mulf %26, %26 : vector<16x64xf32>
    %cst_10 = arith.constant dense<0.000000e+00> : vector<16xf32>
    %28 = vector.multi_reduction <add>, %27, %cst_10 [1] : vector<16x64xf32> to vector<16xf32>
    %29 = vector.shape_cast %28 : vector<16xf32> to vector<16x1xf32>
    %cst_11 = arith.constant 6.400000e+01 : f32
    %30 = vector.broadcast %cst_11 : f32 to vector<16x1xf32>
    %31 = arith.divf %29, %30 : vector<16x1xf32>
    %32 = vector.broadcast %24 : vector<16x1xf32> to vector<16x64xf32>
    %33 = arith.subf %5, %32 : vector<16x64xf32>
    %cst_12 = arith.constant 9.99999974E-6 : f32
    %34 = vector.broadcast %cst_12 : f32 to vector<16x1xf32>
    %35 = arith.addf %31, %34 : vector<16x1xf32>
    %36 = math.rsqrt %35 : vector<16x1xf32>
    %37 = vector.broadcast %36 : vector<16x1xf32> to vector<16x64xf32>
    %38 = arith.mulf %33, %37 : vector<16x64xf32>
    %39 = vector.broadcast %15 : vector<1x64xf32> to vector<16x64xf32>
    %40 = arith.mulf %38, %39 : vector<16x64xf32>
    %41 = vector.broadcast %16 : vector<1x64xf32> to vector<16x64xf32>
    %42 = arith.addf %40, %41 : vector<16x64xf32>
    %c0_13 = arith.constant 0 : index
    %c0_14 = arith.constant 0 : index
    %c0_15 = arith.constant 0 : index
    %43 = vector.load %arg3[%c0_13, %c0_14, %c0_15] : memref<2x64x192xbf16, #tpu.memory_space<vmem>>, vector<1x64x192xbf16>
    %44 = vector.shape_cast %43 : vector<1x64x192xbf16> to vector<64x192xbf16>
    %45 = arith.truncf %42 : vector<16x64xf32> to vector<16x64xbf16>
    %cst_16 = arith.constant dense<0.000000e+00> : vector<16x192xf32>
    %46 = tpu.matmul %45, %44, %cst_16 {dimension_numbers = #tpu.dot_dimension_numbers<[1], [0], [0], [1], [0, 0, 1, 1], [], []>} : vector<16x64xbf16>, vector<64x192xbf16>, vector<16x192xf32> -> vector<16x192xf32>
    %c0_17 = arith.constant 0 : index
    %c0_18 = arith.constant 0 : index
    %c0_19 = arith.constant 0 : index
    %47 = vector.load %arg4[%c0_17, %c0_18, %c0_19] : memref<2x1x192xf32, #tpu.memory_space<vmem>>, vector<1x1x192xf32>
    %48 = vector.shape_cast %47 : vector<1x1x192xf32> to vector<1x192xf32>
    %49 = vector.broadcast %48 : vector<1x192xf32> to vector<16x192xf32>
    %50 = arith.addf %46, %49 : vector<16x192xf32>
    %cst_20 = arith.constant 0.000000e+00 : f32
    %51 = vector.broadcast %cst_20 : f32 to vector<16x64xf32>
    %52 = vector.extract_strided_slice %50 {offsets = [0, 0], sizes = [16, 16], strides = [1, 1]} : vector<16x192xf32> to vector<16x16xf32>
    %53 = vector.shape_cast %52 : vector<16x16xf32> to vector<2x8x16xf32>
    %54 = arith.truncf %53 : vector<2x8x16xf32> to vector<2x8x16xbf16>
    %55 = vector.extract_strided_slice %50 {offsets = [0, 64], sizes = [16, 16], strides = [1, 1]} : vector<16x192xf32> to vector<16x16xf32>
    %56 = vector.shape_cast %55 : vector<16x16xf32> to vector<2x8x16xf32>
    %57 = arith.truncf %56 : vector<2x8x16xf32> to vector<2x8x16xbf16>
    %58 = vector.extract_strided_slice %50 {offsets = [0, 128], sizes = [16, 16], strides = [1, 1]} : vector<16x192xf32> to vector<16x16xf32>
    %59 = vector.shape_cast %58 : vector<16x16xf32> to vector<2x8x16xf32>
    %60 = arith.truncf %59 : vector<2x8x16xf32> to vector<2x8x16xbf16>
    "tpu.trace_start"() <{level = 10 : i32, message = "bqd,bkd->bqk"}> : () -> ()
    %cst_21 = arith.constant dense<0.000000e+00> : vector<2x8x8xf32>
    %61 = tpu.matmul %54, %57, %cst_21 {dimension_numbers = #tpu.dot_dimension_numbers<[2], [2], [1], [1], [0, 0, 0, 1, 1, 1], [0], [0]>} : vector<2x8x16xbf16>, vector<2x8x16xbf16>, vector<2x8x8xf32> -> vector<2x8x8xf32>
    "tpu.trace_stop"() : () -> ()
    %62 = vector.broadcast %12 : vector<1x8x8xf32> to vector<2x8x8xf32>
    %63 = arith.addf %61, %62 : vector<2x8x8xf32>
    %cst_22 = arith.constant dense<0xFF800000> : vector<2x8xf32>
    %64 = vector.multi_reduction <maximumf>, %63, %cst_22 [2] : vector<2x8x8xf32> to vector<2x8xf32>
    %65 = vector.shape_cast %64 : vector<2x8xf32> to vector<2x8x1xf32>
    %66 = vector.broadcast %65 : vector<2x8x1xf32> to vector<2x8x8xf32>
    %67 = arith.subf %63, %66 : vector<2x8x8xf32>
    %68 = math.exp %67 : vector<2x8x8xf32>
    %cst_23 = arith.constant dense<0.000000e+00> : vector<2x8xf32>
    %69 = vector.multi_reduction <add>, %68, %cst_23 [2] : vector<2x8x8xf32> to vector<2x8xf32>
    %70 = vector.shape_cast %69 : vector<2x8xf32> to vector<2x8x1xf32>
    %71 = tpu.reciprocal %70 {approx = true} : vector<2x8x1xf32> -> vector<2x8x1xf32>
    %72 = vector.broadcast %71 : vector<2x8x1xf32> to vector<2x8x8xf32>
    %73 = arith.mulf %68, %72 : vector<2x8x8xf32>
    %74 = arith.truncf %73 : vector<2x8x8xf32> to vector<2x8x8xbf16>
    "tpu.trace_start"() <{level = 10 : i32, message = "bqk,bkd->bqd"}> : () -> ()
    %cst_24 = arith.constant dense<0.000000e+00> : vector<2x8x16xf32>
    %75 = tpu.matmul %74, %60, %cst_24 {dimension_numbers = #tpu.dot_dimension_numbers<[2], [1], [1], [2], [0, 0, 0, 1, 1, 2], [0], [0]>} : vector<2x8x8xbf16>, vector<2x8x16xbf16>, vector<2x8x16xf32> -> vector<2x8x16xf32>
    "tpu.trace_stop"() : () -> ()
    %76 = vector.shape_cast %75 : vector<2x8x16xf32> to vector<16x16xf32>
    %c0_25 = arith.constant 0 : index
    %c0_26 = arith.constant 0 : index
    %c0_27 = arith.constant 0 : index
    %c0_28 = arith.constant 0 : index
    %77 = vector.load %arg5[%c0_25, %c0_26, %c0_27, %c0_28] : memref<2x4x16x64xbf16, #tpu.memory_space<vmem>>, vector<1x1x16x64xbf16>
    %78 = vector.shape_cast %77 : vector<1x1x16x64xbf16> to vector<16x64xbf16>
    %79 = arith.truncf %76 : vector<16x16xf32> to vector<16x16xbf16>
    %cst_29 = arith.constant dense<0.000000e+00> : vector<16x64xf32>
    %80 = tpu.matmul %79, %78, %cst_29 {dimension_numbers = #tpu.dot_dimension_numbers<[1], [0], [0], [1], [0, 0, 1, 1], [], []>} : vector<16x16xbf16>, vector<16x64xbf16>, vector<16x64xf32> -> vector<16x64xf32>
    %81 = arith.addf %51, %80 : vector<16x64xf32>
    %82 = vector.extract_strided_slice %50 {offsets = [0, 16], sizes = [16, 16], strides = [1, 1]} : vector<16x192xf32> to vector<16x16xf32>
    %83 = vector.shape_cast %82 : vector<16x16xf32> to vector<2x8x16xf32>
    %84 = arith.truncf %83 : vector<2x8x16xf32> to vector<2x8x16xbf16>
    %85 = vector.extract_strided_slice %50 {offsets = [0, 80], sizes = [16, 16], strides = [1, 1]} : vector<16x192xf32> to vector<16x16xf32>
    %86 = vector.shape_cast %85 : vector<16x16xf32> to vector<2x8x16xf32>
    %87 = arith.truncf %86 : vector<2x8x16xf32> to vector<2x8x16xbf16>
    %88 = vector.extract_strided_slice %50 {offsets = [0, 144], sizes = [16, 16], strides = [1, 1]} : vector<16x192xf32> to vector<16x16xf32>
    %89 = vector.shape_cast %88 : vector<16x16xf32> to vector<2x8x16xf32>
    %90 = arith.truncf %89 : vector<2x8x16xf32> to vector<2x8x16xbf16>
    "tpu.trace_start"() <{level = 10 : i32, message = "bqd,bkd->bqk"}> : () -> ()
    %cst_30 = arith.constant dense<0.000000e+00> : vector<2x8x8xf32>
    %91 = tpu.matmul %84, %87, %cst_30 {dimension_numbers = #tpu.dot_dimension_numbers<[2], [2], [1], [1], [0, 0, 0, 1, 1, 1], [0], [0]>} : vector<2x8x16xbf16>, vector<2x8x16xbf16>, vector<2x8x8xf32> -> vector<2x8x8xf32>
    "tpu.trace_stop"() : () -> ()
    %92 = vector.broadcast %12 : vector<1x8x8xf32> to vector<2x8x8xf32>
    %93 = arith.addf %91, %92 : vector<2x8x8xf32>
    %cst_31 = arith.constant dense<0xFF800000> : vector<2x8xf32>
    %94 = vector.multi_reduction <maximumf>, %93, %cst_31 [2] : vector<2x8x8xf32> to vector<2x8xf32>
    %95 = vector.shape_cast %94 : vector<2x8xf32> to vector<2x8x1xf32>
    %96 = vector.broadcast %95 : vector<2x8x1xf32> to vector<2x8x8xf32>
    %97 = arith.subf %93, %96 : vector<2x8x8xf32>
    %98 = math.exp %97 : vector<2x8x8xf32>
    %cst_32 = arith.constant dense<0.000000e+00> : vector<2x8xf32>
    %99 = vector.multi_reduction <add>, %98, %cst_32 [2] : vector<2x8x8xf32> to vector<2x8xf32>
    %100 = vector.shape_cast %99 : vector<2x8xf32> to vector<2x8x1xf32>
    %101 = tpu.reciprocal %100 {approx = true} : vector<2x8x1xf32> -> vector<2x8x1xf32>
    %102 = vector.broadcast %101 : vector<2x8x1xf32> to vector<2x8x8xf32>
    %103 = arith.mulf %98, %102 : vector<2x8x8xf32>
    %104 = arith.truncf %103 : vector<2x8x8xf32> to vector<2x8x8xbf16>
    "tpu.trace_start"() <{level = 10 : i32, message = "bqk,bkd->bqd"}> : () -> ()
    %cst_33 = arith.constant dense<0.000000e+00> : vector<2x8x16xf32>
    %105 = tpu.matmul %104, %90, %cst_33 {dimension_numbers = #tpu.dot_dimension_numbers<[2], [1], [1], [2], [0, 0, 0, 1, 1, 2], [0], [0]>} : vector<2x8x8xbf16>, vector<2x8x16xbf16>, vector<2x8x16xf32> -> vector<2x8x16xf32>
    "tpu.trace_stop"() : () -> ()
    %106 = vector.shape_cast %105 : vector<2x8x16xf32> to vector<16x16xf32>
    %c0_34 = arith.constant 0 : index
    %c1 = arith.constant 1 : index
    %c0_35 = arith.constant 0 : index
    %c0_36 = arith.constant 0 : index
    %107 = vector.load %arg5[%c0_34, %c1, %c0_35, %c0_36] : memref<2x4x16x64xbf16, #tpu.memory_space<vmem>>, vector<1x1x16x64xbf16>
    %108 = vector.shape_cast %107 : vector<1x1x16x64xbf16> to vector<16x64xbf16>
    %109 = arith.truncf %106 : vector<16x16xf32> to vector<16x16xbf16>
    %cst_37 = arith.constant dense<0.000000e+00> : vector<16x64xf32>
    %110 = tpu.matmul %109, %108, %cst_37 {dimension_numbers = #tpu.dot_dimension_numbers<[1], [0], [0], [1], [0, 0, 1, 1], [], []>} : vector<16x16xbf16>, vector<16x64xbf16>, vector<16x64xf32> -> vector<16x64xf32>
    %111 = arith.addf %81, %110 : vector<16x64xf32>
    %112 = vector.extract_strided_slice %50 {offsets = [0, 32], sizes = [16, 16], strides = [1, 1]} : vector<16x192xf32> to vector<16x16xf32>
    %113 = vector.shape_cast %112 : vector<16x16xf32> to vector<2x8x16xf32>
    %114 = arith.truncf %113 : vector<2x8x16xf32> to vector<2x8x16xbf16>
    %115 = vector.extract_strided_slice %50 {offsets = [0, 96], sizes = [16, 16], strides = [1, 1]} : vector<16x192xf32> to vector<16x16xf32>
    %116 = vector.shape_cast %115 : vector<16x16xf32> to vector<2x8x16xf32>
    %117 = arith.truncf %116 : vector<2x8x16xf32> to vector<2x8x16xbf16>
    %118 = vector.extract_strided_slice %50 {offsets = [0, 160], sizes = [16, 16], strides = [1, 1]} : vector<16x192xf32> to vector<16x16xf32>
    %119 = vector.shape_cast %118 : vector<16x16xf32> to vector<2x8x16xf32>
    %120 = arith.truncf %119 : vector<2x8x16xf32> to vector<2x8x16xbf16>
    "tpu.trace_start"() <{level = 10 : i32, message = "bqd,bkd->bqk"}> : () -> ()
    %cst_38 = arith.constant dense<0.000000e+00> : vector<2x8x8xf32>
    %121 = tpu.matmul %114, %117, %cst_38 {dimension_numbers = #tpu.dot_dimension_numbers<[2], [2], [1], [1], [0, 0, 0, 1, 1, 1], [0], [0]>} : vector<2x8x16xbf16>, vector<2x8x16xbf16>, vector<2x8x8xf32> -> vector<2x8x8xf32>
    "tpu.trace_stop"() : () -> ()
    %122 = vector.broadcast %12 : vector<1x8x8xf32> to vector<2x8x8xf32>
    %123 = arith.addf %121, %122 : vector<2x8x8xf32>
    %cst_39 = arith.constant dense<0xFF800000> : vector<2x8xf32>
    %124 = vector.multi_reduction <maximumf>, %123, %cst_39 [2] : vector<2x8x8xf32> to vector<2x8xf32>
    %125 = vector.shape_cast %124 : vector<2x8xf32> to vector<2x8x1xf32>
    %126 = vector.broadcast %125 : vector<2x8x1xf32> to vector<2x8x8xf32>
    %127 = arith.subf %123, %126 : vector<2x8x8xf32>
    %128 = math.exp %127 : vector<2x8x8xf32>
    %cst_40 = arith.constant dense<0.000000e+00> : vector<2x8xf32>
    %129 = vector.multi_reduction <add>, %128, %cst_40 [2] : vector<2x8x8xf32> to vector<2x8xf32>
    %130 = vector.shape_cast %129 : vector<2x8xf32> to vector<2x8x1xf32>
    %131 = tpu.reciprocal %130 {approx = true} : vector<2x8x1xf32> -> vector<2x8x1xf32>
    %132 = vector.broadcast %131 : vector<2x8x1xf32> to vector<2x8x8xf32>
    %133 = arith.mulf %128, %132 : vector<2x8x8xf32>
    %134 = arith.truncf %133 : vector<2x8x8xf32> to vector<2x8x8xbf16>
    "tpu.trace_start"() <{level = 10 : i32, message = "bqk,bkd->bqd"}> : () -> ()
    %cst_41 = arith.constant dense<0.000000e+00> : vector<2x8x16xf32>
    %135 = tpu.matmul %134, %120, %cst_41 {dimension_numbers = #tpu.dot_dimension_numbers<[2], [1], [1], [2], [0, 0, 0, 1, 1, 2], [0], [0]>} : vector<2x8x8xbf16>, vector<2x8x16xbf16>, vector<2x8x16xf32> -> vector<2x8x16xf32>
    "tpu.trace_stop"() : () -> ()
    %136 = vector.shape_cast %135 : vector<2x8x16xf32> to vector<16x16xf32>
    %c0_42 = arith.constant 0 : index
    %c2 = arith.constant 2 : index
    %c0_43 = arith.constant 0 : index
    %c0_44 = arith.constant 0 : index
    %137 = vector.load %arg5[%c0_42, %c2, %c0_43, %c0_44] : memref<2x4x16x64xbf16, #tpu.memory_space<vmem>>, vector<1x1x16x64xbf16>
    %138 = vector.shape_cast %137 : vector<1x1x16x64xbf16> to vector<16x64xbf16>
    %139 = arith.truncf %136 : vector<16x16xf32> to vector<16x16xbf16>
    %cst_45 = arith.constant dense<0.000000e+00> : vector<16x64xf32>
    %140 = tpu.matmul %139, %138, %cst_45 {dimension_numbers = #tpu.dot_dimension_numbers<[1], [0], [0], [1], [0, 0, 1, 1], [], []>} : vector<16x16xbf16>, vector<16x64xbf16>, vector<16x64xf32> -> vector<16x64xf32>
    %141 = arith.addf %111, %140 : vector<16x64xf32>
    %142 = vector.extract_strided_slice %50 {offsets = [0, 48], sizes = [16, 16], strides = [1, 1]} : vector<16x192xf32> to vector<16x16xf32>
    %143 = vector.shape_cast %142 : vector<16x16xf32> to vector<2x8x16xf32>
    %144 = arith.truncf %143 : vector<2x8x16xf32> to vector<2x8x16xbf16>
    %145 = vector.extract_strided_slice %50 {offsets = [0, 112], sizes = [16, 16], strides = [1, 1]} : vector<16x192xf32> to vector<16x16xf32>
    %146 = vector.shape_cast %145 : vector<16x16xf32> to vector<2x8x16xf32>
    %147 = arith.truncf %146 : vector<2x8x16xf32> to vector<2x8x16xbf16>
    %148 = vector.extract_strided_slice %50 {offsets = [0, 176], sizes = [16, 16], strides = [1, 1]} : vector<16x192xf32> to vector<16x16xf32>
    %149 = vector.shape_cast %148 : vector<16x16xf32> to vector<2x8x16xf32>
    %150 = arith.truncf %149 : vector<2x8x16xf32> to vector<2x8x16xbf16>
    "tpu.trace_start"() <{level = 10 : i32, message = "bqd,bkd->bqk"}> : () -> ()
    %cst_46 = arith.constant dense<0.000000e+00> : vector<2x8x8xf32>
    %151 = tpu.matmul %144, %147, %cst_46 {dimension_numbers = #tpu.dot_dimension_numbers<[2], [2], [1], [1], [0, 0, 0, 1, 1, 1], [0], [0]>} : vector<2x8x16xbf16>, vector<2x8x16xbf16>, vector<2x8x8xf32> -> vector<2x8x8xf32>
    "tpu.trace_stop"() : () -> ()
    %152 = vector.broadcast %12 : vector<1x8x8xf32> to vector<2x8x8xf32>
    %153 = arith.addf %151, %152 : vector<2x8x8xf32>
    %cst_47 = arith.constant dense<0xFF800000> : vector<2x8xf32>
    %154 = vector.multi_reduction <maximumf>, %153, %cst_47 [2] : vector<2x8x8xf32> to vector<2x8xf32>
    %155 = vector.shape_cast %154 : vector<2x8xf32> to vector<2x8x1xf32>
    %156 = vector.broadcast %155 : vector<2x8x1xf32> to vector<2x8x8xf32>
    %157 = arith.subf %153, %156 : vector<2x8x8xf32>
    %158 = math.exp %157 : vector<2x8x8xf32>
    %cst_48 = arith.constant dense<0.000000e+00> : vector<2x8xf32>
    %159 = vector.multi_reduction <add>, %158, %cst_48 [2] : vector<2x8x8xf32> to vector<2x8xf32>
    %160 = vector.shape_cast %159 : vector<2x8xf32> to vector<2x8x1xf32>
    %161 = tpu.reciprocal %160 {approx = true} : vector<2x8x1xf32> -> vector<2x8x1xf32>
    %162 = vector.broadcast %161 : vector<2x8x1xf32> to vector<2x8x8xf32>
    %163 = arith.mulf %158, %162 : vector<2x8x8xf32>
    %164 = arith.truncf %163 : vector<2x8x8xf32> to vector<2x8x8xbf16>
    "tpu.trace_start"() <{level = 10 : i32, message = "bqk,bkd->bqd"}> : () -> ()
    %cst_49 = arith.constant dense<0.000000e+00> : vector<2x8x16xf32>
    %165 = tpu.matmul %164, %150, %cst_49 {dimension_numbers = #tpu.dot_dimension_numbers<[2], [1], [1], [2], [0, 0, 0, 1, 1, 2], [0], [0]>} : vector<2x8x8xbf16>, vector<2x8x16xbf16>, vector<2x8x16xf32> -> vector<2x8x16xf32>
    "tpu.trace_stop"() : () -> ()
    %166 = vector.shape_cast %165 : vector<2x8x16xf32> to vector<16x16xf32>
    %c0_50 = arith.constant 0 : index
    %c3 = arith.constant 3 : index
    %c0_51 = arith.constant 0 : index
    %c0_52 = arith.constant 0 : index
    %167 = vector.load %arg5[%c0_50, %c3, %c0_51, %c0_52] : memref<2x4x16x64xbf16, #tpu.memory_space<vmem>>, vector<1x1x16x64xbf16>
    %168 = vector.shape_cast %167 : vector<1x1x16x64xbf16> to vector<16x64xbf16>
    %169 = arith.truncf %166 : vector<16x16xf32> to vector<16x16xbf16>
    %cst_53 = arith.constant dense<0.000000e+00> : vector<16x64xf32>
    %170 = tpu.matmul %169, %168, %cst_53 {dimension_numbers = #tpu.dot_dimension_numbers<[1], [0], [0], [1], [0, 0, 1, 1], [], []>} : vector<16x16xbf16>, vector<16x64xbf16>, vector<16x64xf32> -> vector<16x64xf32>
    %171 = arith.addf %141, %170 : vector<16x64xf32>
    %172 = arith.addf %5, %171 : vector<16x64xf32>
    %173 = vector.broadcast %19 : vector<1x64xf32> to vector<16x64xf32>
    %174 = arith.addf %172, %173 : vector<16x64xf32>
    %cst_54 = arith.constant dense<0.000000e+00> : vector<16xf32>
    %175 = vector.multi_reduction <add>, %174, %cst_54 [1] : vector<16x64xf32> to vector<16xf32>
    %176 = vector.shape_cast %175 : vector<16xf32> to vector<16x1xf32>
    %cst_55 = arith.constant 6.400000e+01 : f32
    %177 = vector.broadcast %cst_55 : f32 to vector<16x1xf32>
    %178 = arith.divf %176, %177 : vector<16x1xf32>
    %179 = vector.broadcast %178 : vector<16x1xf32> to vector<16x64xf32>
    %180 = arith.subf %174, %179 : vector<16x64xf32>
    %181 = arith.mulf %180, %180 : vector<16x64xf32>
    %cst_56 = arith.constant dense<0.000000e+00> : vector<16xf32>
    %182 = vector.multi_reduction <add>, %181, %cst_56 [1] : vector<16x64xf32> to vector<16xf32>
    %183 = vector.shape_cast %182 : vector<16xf32> to vector<16x1xf32>
    %cst_57 = arith.constant 6.400000e+01 : f32
    %184 = vector.broadcast %cst_57 : f32 to vector<16x1xf32>
    %185 = arith.divf %183, %184 : vector<16x1xf32>
    %186 = vector.broadcast %178 : vector<16x1xf32> to vector<16x64xf32>
    %187 = arith.subf %174, %186 : vector<16x64xf32>
    %cst_58 = arith.constant 9.99999974E-6 : f32
    %188 = vector.broadcast %cst_58 : f32 to vector<16x1xf32>
    %189 = arith.addf %185, %188 : vector<16x1xf32>
    %190 = math.rsqrt %189 : vector<16x1xf32>
    %191 = vector.broadcast %190 : vector<16x1xf32> to vector<16x64xf32>
    %192 = arith.mulf %187, %191 : vector<16x64xf32>
    %193 = vector.broadcast %17 : vector<1x64xf32> to vector<16x64xf32>
    %194 = arith.mulf %192, %193 : vector<16x64xf32>
    %195 = vector.broadcast %18 : vector<1x64xf32> to vector<16x64xf32>
    %196 = arith.addf %194, %195 : vector<16x64xf32>
    %c0_59 = arith.constant 0 : index
    %c0_60 = arith.constant 0 : index
    %c0_61 = arith.constant 0 : index
    %197 = vector.load %arg6[%c0_59, %c0_60, %c0_61] : memref<2x64x256xbf16, #tpu.memory_space<vmem>>, vector<1x64x256xbf16>
    %198 = vector.shape_cast %197 : vector<1x64x256xbf16> to vector<64x256xbf16>
    %199 = arith.truncf %196 : vector<16x64xf32> to vector<16x64xbf16>
    %cst_62 = arith.constant dense<0.000000e+00> : vector<16x256xf32>
    %200 = tpu.matmul %199, %198, %cst_62 {dimension_numbers = #tpu.dot_dimension_numbers<[1], [0], [0], [1], [0, 0, 1, 1], [], []>} : vector<16x64xbf16>, vector<64x256xbf16>, vector<16x256xf32> -> vector<16x256xf32>
    %c0_63 = arith.constant 0 : index
    %c0_64 = arith.constant 0 : index
    %c0_65 = arith.constant 0 : index
    %201 = vector.load %arg7[%c0_63, %c0_64, %c0_65] : memref<2x1x256xf32, #tpu.memory_space<vmem>>, vector<1x1x256xf32>
    %202 = vector.shape_cast %201 : vector<1x1x256xf32> to vector<1x256xf32>
    %203 = vector.broadcast %202 : vector<1x256xf32> to vector<16x256xf32>
    %204 = arith.addf %200, %203 : vector<16x256xf32>
    %cst_66 = arith.constant -1.702000e+00 : f32
    %205 = vector.broadcast %cst_66 : f32 to vector<16x256xf32>
    %206 = arith.mulf %205, %204 : vector<16x256xf32>
    %207 = math.exp %206 : vector<16x256xf32>
    %cst_67 = arith.constant 1.000000e+00 : f32
    %208 = vector.broadcast %cst_67 : f32 to vector<16x256xf32>
    %209 = arith.addf %208, %207 : vector<16x256xf32>
    %210 = tpu.reciprocal %209 {approx = true} : vector<16x256xf32> -> vector<16x256xf32>
    %211 = arith.mulf %204, %210 : vector<16x256xf32>
    %c0_68 = arith.constant 0 : index
    %c0_69 = arith.constant 0 : index
    %c0_70 = arith.constant 0 : index
    %212 = vector.load %arg8[%c0_68, %c0_69, %c0_70] : memref<2x256x64xbf16, #tpu.memory_space<vmem>>, vector<1x256x64xbf16>
    %213 = vector.shape_cast %212 : vector<1x256x64xbf16> to vector<256x64xbf16>
    %214 = arith.truncf %211 : vector<16x256xf32> to vector<16x256xbf16>
    %cst_71 = arith.constant dense<0.000000e+00> : vector<16x64xf32>
    %215 = tpu.matmul %214, %213, %cst_71 {dimension_numbers = #tpu.dot_dimension_numbers<[1], [0], [0], [1], [0, 0, 1, 1], [], []>} : vector<16x256xbf16>, vector<256x64xbf16>, vector<16x64xf32> -> vector<16x64xf32>
    %216 = arith.addf %174, %215 : vector<16x64xf32>
    %217 = vector.broadcast %20 : vector<1x64xf32> to vector<16x64xf32>
    %218 = arith.addf %216, %217 : vector<16x64xf32>
    %c1_72 = arith.constant 1 : index
    %c0_73 = arith.constant 0 : index
    %c0_74 = arith.constant 0 : index
    %219 = vector.load %arg9[%c1_72, %c0_73, %c0_74] : memref<2x6x64xf32, #tpu.memory_space<vmem>>, vector<1x6x64xf32>
    %220 = vector.shape_cast %219 : vector<1x6x64xf32> to vector<6x64xf32>
    %221 = vector.extract_strided_slice %220 {offsets = [0, 0], sizes = [1, 64], strides = [1, 1]} : vector<6x64xf32> to vector<1x64xf32>
    %222 = vector.extract_strided_slice %220 {offsets = [1, 0], sizes = [1, 64], strides = [1, 1]} : vector<6x64xf32> to vector<1x64xf32>
    %223 = vector.extract_strided_slice %220 {offsets = [2, 0], sizes = [1, 64], strides = [1, 1]} : vector<6x64xf32> to vector<1x64xf32>
    %224 = vector.extract_strided_slice %220 {offsets = [3, 0], sizes = [1, 64], strides = [1, 1]} : vector<6x64xf32> to vector<1x64xf32>
    %225 = vector.extract_strided_slice %220 {offsets = [4, 0], sizes = [1, 64], strides = [1, 1]} : vector<6x64xf32> to vector<1x64xf32>
    %226 = vector.extract_strided_slice %220 {offsets = [5, 0], sizes = [1, 64], strides = [1, 1]} : vector<6x64xf32> to vector<1x64xf32>
    %cst_75 = arith.constant dense<0.000000e+00> : vector<16xf32>
    %227 = vector.multi_reduction <add>, %218, %cst_75 [1] : vector<16x64xf32> to vector<16xf32>
    %228 = vector.shape_cast %227 : vector<16xf32> to vector<16x1xf32>
    %cst_76 = arith.constant 6.400000e+01 : f32
    %229 = vector.broadcast %cst_76 : f32 to vector<16x1xf32>
    %230 = arith.divf %228, %229 : vector<16x1xf32>
    %231 = vector.broadcast %230 : vector<16x1xf32> to vector<16x64xf32>
    %232 = arith.subf %218, %231 : vector<16x64xf32>
    %233 = arith.mulf %232, %232 : vector<16x64xf32>
    %cst_77 = arith.constant dense<0.000000e+00> : vector<16xf32>
    %234 = vector.multi_reduction <add>, %233, %cst_77 [1] : vector<16x64xf32> to vector<16xf32>
    %235 = vector.shape_cast %234 : vector<16xf32> to vector<16x1xf32>
    %cst_78 = arith.constant 6.400000e+01 : f32
    %236 = vector.broadcast %cst_78 : f32 to vector<16x1xf32>
    %237 = arith.divf %235, %236 : vector<16x1xf32>
    %238 = vector.broadcast %230 : vector<16x1xf32> to vector<16x64xf32>
    %239 = arith.subf %218, %238 : vector<16x64xf32>
    %cst_79 = arith.constant 9.99999974E-6 : f32
    %240 = vector.broadcast %cst_79 : f32 to vector<16x1xf32>
    %241 = arith.addf %237, %240 : vector<16x1xf32>
    %242 = math.rsqrt %241 : vector<16x1xf32>
    %243 = vector.broadcast %242 : vector<16x1xf32> to vector<16x64xf32>
    %244 = arith.mulf %239, %243 : vector<16x64xf32>
    %245 = vector.broadcast %221 : vector<1x64xf32> to vector<16x64xf32>
    %246 = arith.mulf %244, %245 : vector<16x64xf32>
    %247 = vector.broadcast %222 : vector<1x64xf32> to vector<16x64xf32>
    %248 = arith.addf %246, %247 : vector<16x64xf32>
    %c1_80 = arith.constant 1 : index
    %c0_81 = arith.constant 0 : index
    %c0_82 = arith.constant 0 : index
    %249 = vector.load %arg3[%c1_80, %c0_81, %c0_82] : memref<2x64x192xbf16, #tpu.memory_space<vmem>>, vector<1x64x192xbf16>
    %250 = vector.shape_cast %249 : vector<1x64x192xbf16> to vector<64x192xbf16>
    %251 = arith.truncf %248 : vector<16x64xf32> to vector<16x64xbf16>
    %cst_83 = arith.constant dense<0.000000e+00> : vector<16x192xf32>
    %252 = tpu.matmul %251, %250, %cst_83 {dimension_numbers = #tpu.dot_dimension_numbers<[1], [0], [0], [1], [0, 0, 1, 1], [], []>} : vector<16x64xbf16>, vector<64x192xbf16>, vector<16x192xf32> -> vector<16x192xf32>
    %c1_84 = arith.constant 1 : index
    %c0_85 = arith.constant 0 : index
    %c0_86 = arith.constant 0 : index
    %253 = vector.load %arg4[%c1_84, %c0_85, %c0_86] : memref<2x1x192xf32, #tpu.memory_space<vmem>>, vector<1x1x192xf32>
    %254 = vector.shape_cast %253 : vector<1x1x192xf32> to vector<1x192xf32>
    %255 = vector.broadcast %254 : vector<1x192xf32> to vector<16x192xf32>
    %256 = arith.addf %252, %255 : vector<16x192xf32>
    %cst_87 = arith.constant 0.000000e+00 : f32
    %257 = vector.broadcast %cst_87 : f32 to vector<16x64xf32>
    %258 = vector.extract_strided_slice %256 {offsets = [0, 0], sizes = [16, 16], strides = [1, 1]} : vector<16x192xf32> to vector<16x16xf32>
    %259 = vector.shape_cast %258 : vector<16x16xf32> to vector<2x8x16xf32>
    %260 = arith.truncf %259 : vector<2x8x16xf32> to vector<2x8x16xbf16>
    %261 = vector.extract_strided_slice %256 {offsets = [0, 64], sizes = [16, 16], strides = [1, 1]} : vector<16x192xf32> to vector<16x16xf32>
    %262 = vector.shape_cast %261 : vector<16x16xf32> to vector<2x8x16xf32>
    %263 = arith.truncf %262 : vector<2x8x16xf32> to vector<2x8x16xbf16>
    %264 = vector.extract_strided_slice %256 {offsets = [0, 128], sizes = [16, 16], strides = [1, 1]} : vector<16x192xf32> to vector<16x16xf32>
    %265 = vector.shape_cast %264 : vector<16x16xf32> to vector<2x8x16xf32>
    %266 = arith.truncf %265 : vector<2x8x16xf32> to vector<2x8x16xbf16>
    "tpu.trace_start"() <{level = 10 : i32, message = "bqd,bkd->bqk"}> : () -> ()
    %cst_88 = arith.constant dense<0.000000e+00> : vector<2x8x8xf32>
    %267 = tpu.matmul %260, %263, %cst_88 {dimension_numbers = #tpu.dot_dimension_numbers<[2], [2], [1], [1], [0, 0, 0, 1, 1, 1], [0], [0]>} : vector<2x8x16xbf16>, vector<2x8x16xbf16>, vector<2x8x8xf32> -> vector<2x8x8xf32>
    "tpu.trace_stop"() : () -> ()
    %268 = vector.broadcast %12 : vector<1x8x8xf32> to vector<2x8x8xf32>
    %269 = arith.addf %267, %268 : vector<2x8x8xf32>
    %cst_89 = arith.constant dense<0xFF800000> : vector<2x8xf32>
    %270 = vector.multi_reduction <maximumf>, %269, %cst_89 [2] : vector<2x8x8xf32> to vector<2x8xf32>
    %271 = vector.shape_cast %270 : vector<2x8xf32> to vector<2x8x1xf32>
    %272 = vector.broadcast %271 : vector<2x8x1xf32> to vector<2x8x8xf32>
    %273 = arith.subf %269, %272 : vector<2x8x8xf32>
    %274 = math.exp %273 : vector<2x8x8xf32>
    %cst_90 = arith.constant dense<0.000000e+00> : vector<2x8xf32>
    %275 = vector.multi_reduction <add>, %274, %cst_90 [2] : vector<2x8x8xf32> to vector<2x8xf32>
    %276 = vector.shape_cast %275 : vector<2x8xf32> to vector<2x8x1xf32>
    %277 = tpu.reciprocal %276 {approx = true} : vector<2x8x1xf32> -> vector<2x8x1xf32>
    %278 = vector.broadcast %277 : vector<2x8x1xf32> to vector<2x8x8xf32>
    %279 = arith.mulf %274, %278 : vector<2x8x8xf32>
    %280 = arith.truncf %279 : vector<2x8x8xf32> to vector<2x8x8xbf16>
    "tpu.trace_start"() <{level = 10 : i32, message = "bqk,bkd->bqd"}> : () -> ()
    %cst_91 = arith.constant dense<0.000000e+00> : vector<2x8x16xf32>
    %281 = tpu.matmul %280, %266, %cst_91 {dimension_numbers = #tpu.dot_dimension_numbers<[2], [1], [1], [2], [0, 0, 0, 1, 1, 2], [0], [0]>} : vector<2x8x8xbf16>, vector<2x8x16xbf16>, vector<2x8x16xf32> -> vector<2x8x16xf32>
    "tpu.trace_stop"() : () -> ()
    %282 = vector.shape_cast %281 : vector<2x8x16xf32> to vector<16x16xf32>
    %c1_92 = arith.constant 1 : index
    %c0_93 = arith.constant 0 : index
    %c0_94 = arith.constant 0 : index
    %c0_95 = arith.constant 0 : index
    %283 = vector.load %arg5[%c1_92, %c0_93, %c0_94, %c0_95] : memref<2x4x16x64xbf16, #tpu.memory_space<vmem>>, vector<1x1x16x64xbf16>
    %284 = vector.shape_cast %283 : vector<1x1x16x64xbf16> to vector<16x64xbf16>
    %285 = arith.truncf %282 : vector<16x16xf32> to vector<16x16xbf16>
    %cst_96 = arith.constant dense<0.000000e+00> : vector<16x64xf32>
    %286 = tpu.matmul %285, %284, %cst_96 {dimension_numbers = #tpu.dot_dimension_numbers<[1], [0], [0], [1], [0, 0, 1, 1], [], []>} : vector<16x16xbf16>, vector<16x64xbf16>, vector<16x64xf32> -> vector<16x64xf32>
    %287 = arith.addf %257, %286 : vector<16x64xf32>
    %288 = vector.extract_strided_slice %256 {offsets = [0, 16], sizes = [16, 16], strides = [1, 1]} : vector<16x192xf32> to vector<16x16xf32>
    %289 = vector.shape_cast %288 : vector<16x16xf32> to vector<2x8x16xf32>
    %290 = arith.truncf %289 : vector<2x8x16xf32> to vector<2x8x16xbf16>
    %291 = vector.extract_strided_slice %256 {offsets = [0, 80], sizes = [16, 16], strides = [1, 1]} : vector<16x192xf32> to vector<16x16xf32>
    %292 = vector.shape_cast %291 : vector<16x16xf32> to vector<2x8x16xf32>
    %293 = arith.truncf %292 : vector<2x8x16xf32> to vector<2x8x16xbf16>
    %294 = vector.extract_strided_slice %256 {offsets = [0, 144], sizes = [16, 16], strides = [1, 1]} : vector<16x192xf32> to vector<16x16xf32>
    %295 = vector.shape_cast %294 : vector<16x16xf32> to vector<2x8x16xf32>
    %296 = arith.truncf %295 : vector<2x8x16xf32> to vector<2x8x16xbf16>
    "tpu.trace_start"() <{level = 10 : i32, message = "bqd,bkd->bqk"}> : () -> ()
    %cst_97 = arith.constant dense<0.000000e+00> : vector<2x8x8xf32>
    %297 = tpu.matmul %290, %293, %cst_97 {dimension_numbers = #tpu.dot_dimension_numbers<[2], [2], [1], [1], [0, 0, 0, 1, 1, 1], [0], [0]>} : vector<2x8x16xbf16>, vector<2x8x16xbf16>, vector<2x8x8xf32> -> vector<2x8x8xf32>
    "tpu.trace_stop"() : () -> ()
    %298 = vector.broadcast %12 : vector<1x8x8xf32> to vector<2x8x8xf32>
    %299 = arith.addf %297, %298 : vector<2x8x8xf32>
    %cst_98 = arith.constant dense<0xFF800000> : vector<2x8xf32>
    %300 = vector.multi_reduction <maximumf>, %299, %cst_98 [2] : vector<2x8x8xf32> to vector<2x8xf32>
    %301 = vector.shape_cast %300 : vector<2x8xf32> to vector<2x8x1xf32>
    %302 = vector.broadcast %301 : vector<2x8x1xf32> to vector<2x8x8xf32>
    %303 = arith.subf %299, %302 : vector<2x8x8xf32>
    %304 = math.exp %303 : vector<2x8x8xf32>
    %cst_99 = arith.constant dense<0.000000e+00> : vector<2x8xf32>
    %305 = vector.multi_reduction <add>, %304, %cst_99 [2] : vector<2x8x8xf32> to vector<2x8xf32>
    %306 = vector.shape_cast %305 : vector<2x8xf32> to vector<2x8x1xf32>
    %307 = tpu.reciprocal %306 {approx = true} : vector<2x8x1xf32> -> vector<2x8x1xf32>
    %308 = vector.broadcast %307 : vector<2x8x1xf32> to vector<2x8x8xf32>
    %309 = arith.mulf %304, %308 : vector<2x8x8xf32>
    %310 = arith.truncf %309 : vector<2x8x8xf32> to vector<2x8x8xbf16>
    "tpu.trace_start"() <{level = 10 : i32, message = "bqk,bkd->bqd"}> : () -> ()
    %cst_100 = arith.constant dense<0.000000e+00> : vector<2x8x16xf32>
    %311 = tpu.matmul %310, %296, %cst_100 {dimension_numbers = #tpu.dot_dimension_numbers<[2], [1], [1], [2], [0, 0, 0, 1, 1, 2], [0], [0]>} : vector<2x8x8xbf16>, vector<2x8x16xbf16>, vector<2x8x16xf32> -> vector<2x8x16xf32>
    "tpu.trace_stop"() : () -> ()
    %312 = vector.shape_cast %311 : vector<2x8x16xf32> to vector<16x16xf32>
    %c1_101 = arith.constant 1 : index
    %c1_102 = arith.constant 1 : index
    %c0_103 = arith.constant 0 : index
    %c0_104 = arith.constant 0 : index
    %313 = vector.load %arg5[%c1_101, %c1_102, %c0_103, %c0_104] : memref<2x4x16x64xbf16, #tpu.memory_space<vmem>>, vector<1x1x16x64xbf16>
    %314 = vector.shape_cast %313 : vector<1x1x16x64xbf16> to vector<16x64xbf16>
    %315 = arith.truncf %312 : vector<16x16xf32> to vector<16x16xbf16>
    %cst_105 = arith.constant dense<0.000000e+00> : vector<16x64xf32>
    %316 = tpu.matmul %315, %314, %cst_105 {dimension_numbers = #tpu.dot_dimension_numbers<[1], [0], [0], [1], [0, 0, 1, 1], [], []>} : vector<16x16xbf16>, vector<16x64xbf16>, vector<16x64xf32> -> vector<16x64xf32>
    %317 = arith.addf %287, %316 : vector<16x64xf32>
    %318 = vector.extract_strided_slice %256 {offsets = [0, 32], sizes = [16, 16], strides = [1, 1]} : vector<16x192xf32> to vector<16x16xf32>
    %319 = vector.shape_cast %318 : vector<16x16xf32> to vector<2x8x16xf32>
    %320 = arith.truncf %319 : vector<2x8x16xf32> to vector<2x8x16xbf16>
    %321 = vector.extract_strided_slice %256 {offsets = [0, 96], sizes = [16, 16], strides = [1, 1]} : vector<16x192xf32> to vector<16x16xf32>
    %322 = vector.shape_cast %321 : vector<16x16xf32> to vector<2x8x16xf32>
    %323 = arith.truncf %322 : vector<2x8x16xf32> to vector<2x8x16xbf16>
    %324 = vector.extract_strided_slice %256 {offsets = [0, 160], sizes = [16, 16], strides = [1, 1]} : vector<16x192xf32> to vector<16x16xf32>
    %325 = vector.shape_cast %324 : vector<16x16xf32> to vector<2x8x16xf32>
    %326 = arith.truncf %325 : vector<2x8x16xf32> to vector<2x8x16xbf16>
    "tpu.trace_start"() <{level = 10 : i32, message = "bqd,bkd->bqk"}> : () -> ()
    %cst_106 = arith.constant dense<0.000000e+00> : vector<2x8x8xf32>
    %327 = tpu.matmul %320, %323, %cst_106 {dimension_numbers = #tpu.dot_dimension_numbers<[2], [2], [1], [1], [0, 0, 0, 1, 1, 1], [0], [0]>} : vector<2x8x16xbf16>, vector<2x8x16xbf16>, vector<2x8x8xf32> -> vector<2x8x8xf32>
    "tpu.trace_stop"() : () -> ()
    %328 = vector.broadcast %12 : vector<1x8x8xf32> to vector<2x8x8xf32>
    %329 = arith.addf %327, %328 : vector<2x8x8xf32>
    %cst_107 = arith.constant dense<0xFF800000> : vector<2x8xf32>
    %330 = vector.multi_reduction <maximumf>, %329, %cst_107 [2] : vector<2x8x8xf32> to vector<2x8xf32>
    %331 = vector.shape_cast %330 : vector<2x8xf32> to vector<2x8x1xf32>
    %332 = vector.broadcast %331 : vector<2x8x1xf32> to vector<2x8x8xf32>
    %333 = arith.subf %329, %332 : vector<2x8x8xf32>
    %334 = math.exp %333 : vector<2x8x8xf32>
    %cst_108 = arith.constant dense<0.000000e+00> : vector<2x8xf32>
    %335 = vector.multi_reduction <add>, %334, %cst_108 [2] : vector<2x8x8xf32> to vector<2x8xf32>
    %336 = vector.shape_cast %335 : vector<2x8xf32> to vector<2x8x1xf32>
    %337 = tpu.reciprocal %336 {approx = true} : vector<2x8x1xf32> -> vector<2x8x1xf32>
    %338 = vector.broadcast %337 : vector<2x8x1xf32> to vector<2x8x8xf32>
    %339 = arith.mulf %334, %338 : vector<2x8x8xf32>
    %340 = arith.truncf %339 : vector<2x8x8xf32> to vector<2x8x8xbf16>
    "tpu.trace_start"() <{level = 10 : i32, message = "bqk,bkd->bqd"}> : () -> ()
    %cst_109 = arith.constant dense<0.000000e+00> : vector<2x8x16xf32>
    %341 = tpu.matmul %340, %326, %cst_109 {dimension_numbers = #tpu.dot_dimension_numbers<[2], [1], [1], [2], [0, 0, 0, 1, 1, 2], [0], [0]>} : vector<2x8x8xbf16>, vector<2x8x16xbf16>, vector<2x8x16xf32> -> vector<2x8x16xf32>
    "tpu.trace_stop"() : () -> ()
    %342 = vector.shape_cast %341 : vector<2x8x16xf32> to vector<16x16xf32>
    %c1_110 = arith.constant 1 : index
    %c2_111 = arith.constant 2 : index
    %c0_112 = arith.constant 0 : index
    %c0_113 = arith.constant 0 : index
    %343 = vector.load %arg5[%c1_110, %c2_111, %c0_112, %c0_113] : memref<2x4x16x64xbf16, #tpu.memory_space<vmem>>, vector<1x1x16x64xbf16>
    %344 = vector.shape_cast %343 : vector<1x1x16x64xbf16> to vector<16x64xbf16>
    %345 = arith.truncf %342 : vector<16x16xf32> to vector<16x16xbf16>
    %cst_114 = arith.constant dense<0.000000e+00> : vector<16x64xf32>
    %346 = tpu.matmul %345, %344, %cst_114 {dimension_numbers = #tpu.dot_dimension_numbers<[1], [0], [0], [1], [0, 0, 1, 1], [], []>} : vector<16x16xbf16>, vector<16x64xbf16>, vector<16x64xf32> -> vector<16x64xf32>
    %347 = arith.addf %317, %346 : vector<16x64xf32>
    %348 = vector.extract_strided_slice %256 {offsets = [0, 48], sizes = [16, 16], strides = [1, 1]} : vector<16x192xf32> to vector<16x16xf32>
    %349 = vector.shape_cast %348 : vector<16x16xf32> to vector<2x8x16xf32>
    %350 = arith.truncf %349 : vector<2x8x16xf32> to vector<2x8x16xbf16>
    %351 = vector.extract_strided_slice %256 {offsets = [0, 112], sizes = [16, 16], strides = [1, 1]} : vector<16x192xf32> to vector<16x16xf32>
    %352 = vector.shape_cast %351 : vector<16x16xf32> to vector<2x8x16xf32>
    %353 = arith.truncf %352 : vector<2x8x16xf32> to vector<2x8x16xbf16>
    %354 = vector.extract_strided_slice %256 {offsets = [0, 176], sizes = [16, 16], strides = [1, 1]} : vector<16x192xf32> to vector<16x16xf32>
    %355 = vector.shape_cast %354 : vector<16x16xf32> to vector<2x8x16xf32>
    %356 = arith.truncf %355 : vector<2x8x16xf32> to vector<2x8x16xbf16>
    "tpu.trace_start"() <{level = 10 : i32, message = "bqd,bkd->bqk"}> : () -> ()
    %cst_115 = arith.constant dense<0.000000e+00> : vector<2x8x8xf32>
    %357 = tpu.matmul %350, %353, %cst_115 {dimension_numbers = #tpu.dot_dimension_numbers<[2], [2], [1], [1], [0, 0, 0, 1, 1, 1], [0], [0]>} : vector<2x8x16xbf16>, vector<2x8x16xbf16>, vector<2x8x8xf32> -> vector<2x8x8xf32>
    "tpu.trace_stop"() : () -> ()
    %358 = vector.broadcast %12 : vector<1x8x8xf32> to vector<2x8x8xf32>
    %359 = arith.addf %357, %358 : vector<2x8x8xf32>
    %cst_116 = arith.constant dense<0xFF800000> : vector<2x8xf32>
    %360 = vector.multi_reduction <maximumf>, %359, %cst_116 [2] : vector<2x8x8xf32> to vector<2x8xf32>
    %361 = vector.shape_cast %360 : vector<2x8xf32> to vector<2x8x1xf32>
    %362 = vector.broadcast %361 : vector<2x8x1xf32> to vector<2x8x8xf32>
    %363 = arith.subf %359, %362 : vector<2x8x8xf32>
    %364 = math.exp %363 : vector<2x8x8xf32>
    %cst_117 = arith.constant dense<0.000000e+00> : vector<2x8xf32>
    %365 = vector.multi_reduction <add>, %364, %cst_117 [2] : vector<2x8x8xf32> to vector<2x8xf32>
    %366 = vector.shape_cast %365 : vector<2x8xf32> to vector<2x8x1xf32>
    %367 = tpu.reciprocal %366 {approx = true} : vector<2x8x1xf32> -> vector<2x8x1xf32>
    %368 = vector.broadcast %367 : vector<2x8x1xf32> to vector<2x8x8xf32>
    %369 = arith.mulf %364, %368 : vector<2x8x8xf32>
    %370 = arith.truncf %369 : vector<2x8x8xf32> to vector<2x8x8xbf16>
    "tpu.trace_start"() <{level = 10 : i32, message = "bqk,bkd->bqd"}> : () -> ()
    %cst_118 = arith.constant dense<0.000000e+00> : vector<2x8x16xf32>
    %371 = tpu.matmul %370, %356, %cst_118 {dimension_numbers = #tpu.dot_dimension_numbers<[2], [1], [1], [2], [0, 0, 0, 1, 1, 2], [0], [0]>} : vector<2x8x8xbf16>, vector<2x8x16xbf16>, vector<2x8x16xf32> -> vector<2x8x16xf32>
    "tpu.trace_stop"() : () -> ()
    %372 = vector.shape_cast %371 : vector<2x8x16xf32> to vector<16x16xf32>
    %c1_119 = arith.constant 1 : index
    %c3_120 = arith.constant 3 : index
    %c0_121 = arith.constant 0 : index
    %c0_122 = arith.constant 0 : index
    %373 = vector.load %arg5[%c1_119, %c3_120, %c0_121, %c0_122] : memref<2x4x16x64xbf16, #tpu.memory_space<vmem>>, vector<1x1x16x64xbf16>
    %374 = vector.shape_cast %373 : vector<1x1x16x64xbf16> to vector<16x64xbf16>
    %375 = arith.truncf %372 : vector<16x16xf32> to vector<16x16xbf16>
    %cst_123 = arith.constant dense<0.000000e+00> : vector<16x64xf32>
    %376 = tpu.matmul %375, %374, %cst_123 {dimension_numbers = #tpu.dot_dimension_numbers<[1], [0], [0], [1], [0, 0, 1, 1], [], []>} : vector<16x16xbf16>, vector<16x64xbf16>, vector<16x64xf32> -> vector<16x64xf32>
    %377 = arith.addf %347, %376 : vector<16x64xf32>
    %378 = arith.addf %218, %377 : vector<16x64xf32>
    %379 = vector.broadcast %225 : vector<1x64xf32> to vector<16x64xf32>
    %380 = arith.addf %378, %379 : vector<16x64xf32>
    %cst_124 = arith.constant dense<0.000000e+00> : vector<16xf32>
    %381 = vector.multi_reduction <add>, %380, %cst_124 [1] : vector<16x64xf32> to vector<16xf32>
    %382 = vector.shape_cast %381 : vector<16xf32> to vector<16x1xf32>
    %cst_125 = arith.constant 6.400000e+01 : f32
    %383 = vector.broadcast %cst_125 : f32 to vector<16x1xf32>
    %384 = arith.divf %382, %383 : vector<16x1xf32>
    %385 = vector.broadcast %384 : vector<16x1xf32> to vector<16x64xf32>
    %386 = arith.subf %380, %385 : vector<16x64xf32>
    %387 = arith.mulf %386, %386 : vector<16x64xf32>
    %cst_126 = arith.constant dense<0.000000e+00> : vector<16xf32>
    %388 = vector.multi_reduction <add>, %387, %cst_126 [1] : vector<16x64xf32> to vector<16xf32>
    %389 = vector.shape_cast %388 : vector<16xf32> to vector<16x1xf32>
    %cst_127 = arith.constant 6.400000e+01 : f32
    %390 = vector.broadcast %cst_127 : f32 to vector<16x1xf32>
    %391 = arith.divf %389, %390 : vector<16x1xf32>
    %392 = vector.broadcast %384 : vector<16x1xf32> to vector<16x64xf32>
    %393 = arith.subf %380, %392 : vector<16x64xf32>
    %cst_128 = arith.constant 9.99999974E-6 : f32
    %394 = vector.broadcast %cst_128 : f32 to vector<16x1xf32>
    %395 = arith.addf %391, %394 : vector<16x1xf32>
    %396 = math.rsqrt %395 : vector<16x1xf32>
    %397 = vector.broadcast %396 : vector<16x1xf32> to vector<16x64xf32>
    %398 = arith.mulf %393, %397 : vector<16x64xf32>
    %399 = vector.broadcast %223 : vector<1x64xf32> to vector<16x64xf32>
    %400 = arith.mulf %398, %399 : vector<16x64xf32>
    %401 = vector.broadcast %224 : vector<1x64xf32> to vector<16x64xf32>
    %402 = arith.addf %400, %401 : vector<16x64xf32>
    %c1_129 = arith.constant 1 : index
    %c0_130 = arith.constant 0 : index
    %c0_131 = arith.constant 0 : index
    %403 = vector.load %arg6[%c1_129, %c0_130, %c0_131] : memref<2x64x256xbf16, #tpu.memory_space<vmem>>, vector<1x64x256xbf16>
    %404 = vector.shape_cast %403 : vector<1x64x256xbf16> to vector<64x256xbf16>
    %405 = arith.truncf %402 : vector<16x64xf32> to vector<16x64xbf16>
    %cst_132 = arith.constant dense<0.000000e+00> : vector<16x256xf32>
    %406 = tpu.matmul %405, %404, %cst_132 {dimension_numbers = #tpu.dot_dimension_numbers<[1], [0], [0], [1], [0, 0, 1, 1], [], []>} : vector<16x64xbf16>, vector<64x256xbf16>, vector<16x256xf32> -> vector<16x256xf32>
    %c1_133 = arith.constant 1 : index
    %c0_134 = arith.constant 0 : index
    %c0_135 = arith.constant 0 : index
    %407 = vector.load %arg7[%c1_133, %c0_134, %c0_135] : memref<2x1x256xf32, #tpu.memory_space<vmem>>, vector<1x1x256xf32>
    %408 = vector.shape_cast %407 : vector<1x1x256xf32> to vector<1x256xf32>
    %409 = vector.broadcast %408 : vector<1x256xf32> to vector<16x256xf32>
    %410 = arith.addf %406, %409 : vector<16x256xf32>
    %cst_136 = arith.constant -1.702000e+00 : f32
    %411 = vector.broadcast %cst_136 : f32 to vector<16x256xf32>
    %412 = arith.mulf %411, %410 : vector<16x256xf32>
    %413 = math.exp %412 : vector<16x256xf32>
    %cst_137 = arith.constant 1.000000e+00 : f32
    %414 = vector.broadcast %cst_137 : f32 to vector<16x256xf32>
    %415 = arith.addf %414, %413 : vector<16x256xf32>
    %416 = tpu.reciprocal %415 {approx = true} : vector<16x256xf32> -> vector<16x256xf32>
    %417 = arith.mulf %410, %416 : vector<16x256xf32>
    %c1_138 = arith.constant 1 : index
    %c0_139 = arith.constant 0 : index
    %c0_140 = arith.constant 0 : index
    %418 = vector.load %arg8[%c1_138, %c0_139, %c0_140] : memref<2x256x64xbf16, #tpu.memory_space<vmem>>, vector<1x256x64xbf16>
    %419 = vector.shape_cast %418 : vector<1x256x64xbf16> to vector<256x64xbf16>
    %420 = arith.truncf %417 : vector<16x256xf32> to vector<16x256xbf16>
    %cst_141 = arith.constant dense<0.000000e+00> : vector<16x64xf32>
    %421 = tpu.matmul %420, %419, %cst_141 {dimension_numbers = #tpu.dot_dimension_numbers<[1], [0], [0], [1], [0, 0, 1, 1], [], []>} : vector<16x256xbf16>, vector<256x64xbf16>, vector<16x64xf32> -> vector<16x64xf32>
    %422 = arith.addf %380, %421 : vector<16x64xf32>
    %423 = vector.broadcast %226 : vector<1x64xf32> to vector<16x64xf32>
    %424 = arith.addf %422, %423 : vector<16x64xf32>
    %425 = tpu.iota {dimensions = array<i32: 1>} : vector<2x16xi32>
    %c0_142 = arith.constant 0 : index
    %c0_143 = arith.constant 0 : index
    %426 = vector.load %arg2[%c0_142, %c0_143] : memref<2x1xi32, #tpu.memory_space<vmem>>, vector<2x1xi32>
    %427 = tpu.iota {dimensions = array<i32: 0>} : vector<2x1xi32>
    %c8_i32 = arith.constant 8 : i32
    %428 = vector.broadcast %c8_i32 : i32 to vector<2x1xi32>
    %429 = arith.muli %428, %427 : vector<2x1xi32>
    %430 = arith.addi %426, %429 : vector<2x1xi32>
    %431 = vector.broadcast %430 : vector<2x1xi32> to vector<2x16xi32>
    %432 = arith.cmpi eq, %425, %431 : vector<2x16xi32>
    %433 = arith.extui %432 : vector<2x16xi1> to vector<2x16xi32>
    %434 = arith.sitofp %433 : vector<2x16xi32> to vector<2x16xf32>
    %cst_144 = arith.constant dense<0.000000e+00> : vector<2x64xf32>
    %435 = tpu.matmul %434, %424, %cst_144 {dimension_numbers = #tpu.dot_dimension_numbers<[1], [0], [0], [1], [0, 0, 1, 1], [], []>} : vector<2x16xf32>, vector<16x64xf32>, vector<2x64xf32> -> vector<2x64xf32>
    %c0_145 = arith.constant 0 : index
    %c0_146 = arith.constant 0 : index
    %436 = vector.load %arg10[%c0_145, %c0_146] : memref<2x64xf32, #tpu.memory_space<vmem>>, vector<1x64xf32>
    %c1_147 = arith.constant 1 : index
    %c0_148 = arith.constant 0 : index
    %437 = vector.load %arg10[%c1_147, %c0_148] : memref<2x64xf32, #tpu.memory_space<vmem>>, vector<1x64xf32>
    %cst_149 = arith.constant dense<0.000000e+00> : vector<2xf32>
    %438 = vector.multi_reduction <add>, %435, %cst_149 [1] : vector<2x64xf32> to vector<2xf32>
    %439 = vector.shape_cast %438 : vector<2xf32> to vector<2x1xf32>
    %cst_150 = arith.constant 6.400000e+01 : f32
    %440 = vector.broadcast %cst_150 : f32 to vector<2x1xf32>
    %441 = arith.divf %439, %440 : vector<2x1xf32>
    %442 = vector.broadcast %441 : vector<2x1xf32> to vector<2x64xf32>
    %443 = arith.subf %435, %442 : vector<2x64xf32>
    %444 = arith.mulf %443, %443 : vector<2x64xf32>
    %cst_151 = arith.constant dense<0.000000e+00> : vector<2xf32>
    %445 = vector.multi_reduction <add>, %444, %cst_151 [1] : vector<2x64xf32> to vector<2xf32>
    %446 = vector.shape_cast %445 : vector<2xf32> to vector<2x1xf32>
    %cst_152 = arith.constant 6.400000e+01 : f32
    %447 = vector.broadcast %cst_152 : f32 to vector<2x1xf32>
    %448 = arith.divf %446, %447 : vector<2x1xf32>
    %449 = vector.broadcast %441 : vector<2x1xf32> to vector<2x64xf32>
    %450 = arith.subf %435, %449 : vector<2x64xf32>
    %cst_153 = arith.constant 9.99999974E-6 : f32
    %451 = vector.broadcast %cst_153 : f32 to vector<2x1xf32>
    %452 = arith.addf %448, %451 : vector<2x1xf32>
    %453 = math.rsqrt %452 : vector<2x1xf32>
    %454 = vector.broadcast %453 : vector<2x1xf32> to vector<2x64xf32>
    %455 = arith.mulf %450, %454 : vector<2x64xf32>
    %456 = vector.broadcast %436 : vector<1x64xf32> to vector<2x64xf32>
    %457 = arith.mulf %455, %456 : vector<2x64xf32>
    %458 = vector.broadcast %437 : vector<1x64xf32> to vector<2x64xf32>
    %459 = arith.addf %457, %458 : vector<2x64xf32>
    %c0_154 = arith.constant 0 : index
    %c0_155 = arith.constant 0 : index
    %460 = vector.load %arg11[%c0_154, %c0_155] : memref<64x32xf32, #tpu.memory_space<vmem>>, vector<64x32xf32>
    %cst_156 = arith.constant dense<0.000000e+00> : vector<2x32xf32>
    %461 = tpu.matmul %459, %460, %cst_156 {dimension_numbers = #tpu.dot_dimension_numbers<[1], [0], [0], [1], [0, 0, 1, 1], [], []>} : vector<2x64xf32>, vector<64x32xf32>, vector<2x32xf32> -> vector<2x32xf32>
    %c0_157 = arith.constant 0 : index
    %c0_158 = arith.constant 0 : index
    %462 = vector.load %arg12[%c0_157, %c0_158] : memref<2x32xf32, #tpu.memory_space<vmem>>, vector<2x32xf32>
    tpu.vector_store %arg12[%c0_157, %c0_158], %461 {strides = array<i32>} : memref<2x32xf32, #tpu.memory_space<vmem>>, vector<2x32xf32>,
    return
  }
}

</mosaic_0001>

<llo_original>
// kernel: fwd.1
$region0: #{fwd.1}
  #allocation0 [shape = 'u32[]', space=smem, size = 0x4, offset = 0x4, fixed_abs, tag = 'smem constant byte address 0x4 - core index']
  #allocation1 [shape = 'u32[144,128]{1,0:T(1,128)}', space=vmem, size = 0x12000, scoped, tag = 'internal scratch']
  %s0 = inlined_call_operand.vmem [shape: f32[2,8,64], index: 0, kind: input, shape index: {}]
  %s1 = inlined_call_operand.vmem [shape: f32[8,64], index: 1, kind: input, shape index: {}]
  %s2 = inlined_call_operand.vmem [shape: s32[2,1], index: 2, kind: input, shape index: {}]
  %s3 = inlined_call_operand.vmem [shape: bf16[2,64,192], index: 3, kind: input, shape index: {}]
  %s4 = inlined_call_operand.vmem [shape: f32[2,1,192], index: 4, kind: input, shape index: {}]
  %s5 = inlined_call_operand.vmem [shape: bf16[2,4,16,64], index: 5, kind: input, shape index: {}]
  %s6 = inlined_call_operand.vmem [shape: bf16[2,64,256], index: 6, kind: input, shape index: {}]
  %s7 = inlined_call_operand.vmem [shape: f32[2,1,256], index: 7, kind: input, shape index: {}]
  %s8 = inlined_call_operand.vmem [shape: bf16[2,256,64], index: 8, kind: input, shape index: {}]
  %s9 = inlined_call_operand.vmem [shape: f32[2,6,64], index: 9, kind: input, shape index: {}]
  %s10 = inlined_call_operand.vmem [shape: f32[2,64], index: 10, kind: input, shape index: {}]
  %s11 = inlined_call_operand.vmem [shape: f32[64,32], index: 11, kind: input, shape index: {}]
  %s12 = inlined_call_operand.hbm [shape: f32[2,32], index: 12, kind: output, shape index: {}]
  %s13 = sld [smem:[#allocation0]]
  $region58: #{fwd.1} parent=0
    _
  %s15 = ssub.s32 1, %s13
  %s16 = scalar_select 0, %s15, %s13
  $region1: #{fwd.1} parent=0
    #allocation2 [shape = 'u8[1024]{0}', space=vmem, size = 0x400, scoped, tag = 'output window, operand 0, single buffered']
    #allocation3 [shape = 's32[1]{0}', space=sflag, size = 0x4, scoped, tag = 'scoped memory for fwd.1']
    %17 = vsyncpa [#allocation3], 0
    // Predicated region
    $region2: #{fwd.1} parent=1 // pred_check
      _
    $region3: #{fwd.1} parent=1 // pred_check_branch
      %19 = sbr.rel (0) target = $region5
    $region4: #{fwd.1} parent=1 // pred_region
      _
    $region5: #{fwd.1} parent=1 // pred_fallthru
      _
    // Predicated region
    $region6: #{fwd.1} parent=1 // pred_check
      _
    $region7: #{fwd.1} parent=1 // pred_check_branch
      %21 = sbr.rel (0) target = $region9
    $region8: #{fwd.1} parent=1 // pred_region
      _
    $region9: #{fwd.1} parent=1 // pred_fallthru
      _
    // Predicated region
    $region10: #{fwd.1} parent=1 // pred_check
      _
    $region11: #{fwd.1} parent=1 // pred_check_branch
      %23 = sbr.rel (0) target = $region13
    $region12: #{fwd.1} parent=1 // pred_region
      _
    $region13: #{fwd.1} parent=1 // pred_fallthru
      _
    // Predicated region
    $region14: #{fwd.1} parent=1 // pred_check
      _
    $region15: #{fwd.1} parent=1 // pred_check_branch
      %25 = sbr.rel (0) target = $region17
    $region16: #{fwd.1} parent=1 // pred_region
      _
    $region17: #{fwd.1} parent=1 // pred_fallthru
      _
    // Predicated region
    $region18: #{fwd.1} parent=1 // pred_check
      _
    $region19: #{fwd.1} parent=1 // pred_check_branch
      %27 = sbr.rel (0) target = $region21
    $region20: #{fwd.1} parent=1 // pred_region
      _
    $region21: #{fwd.1} parent=1 // pred_fallthru
      _
    // Predicated region
    $region22: #{fwd.1} parent=1 // pred_check
      _
    $region23: #{fwd.1} parent=1 // pred_check_branch
      %29 = sbr.rel (0) target = $region25
    $region24: #{fwd.1} parent=1 // pred_region
      _
    $region25: #{fwd.1} parent=1 // pred_fallthru
      _
    // Predicated region
    $region26: #{fwd.1} parent=1 // pred_check
      _
    $region27: #{fwd.1} parent=1 // pred_check_branch
      %31 = sbr.rel (0) target = $region29
    $region28: #{fwd.1} parent=1 // pred_region
      _
    $region29: #{fwd.1} parent=1 // pred_fallthru
      _
    // Predicated region
    $region30: #{fwd.1} parent=1 // pred_check
      _
    $region31: #{fwd.1} parent=1 // pred_check_branch
      %33 = sbr.rel (0) target = $region33
    $region32: #{fwd.1} parent=1 // pred_region
      _
    $region33: #{fwd.1} parent=1 // pred_fallthru
      _
    // Predicated region
    $region34: #{fwd.1} parent=1 // pred_check
      _
    $region35: #{fwd.1} parent=1 // pred_check_branch
      %35 = sbr.rel (0) target = $region37
    $region36: #{fwd.1} parent=1 // pred_region
      _
    $region37: #{fwd.1} parent=1 // pred_fallthru
      _
    // Predicated region
    $region38: #{fwd.1} parent=1 // pred_check
      _
    $region39: #{fwd.1} parent=1 // pred_check_branch
      %37 = sbr.rel (0) target = $region41
    $region40: #{fwd.1} parent=1 // pred_region
      _
    $region41: #{fwd.1} parent=1 // pred_fallthru
      _
    // Predicated region
    $region42: #{fwd.1} parent=1 // pred_check
      _
    $region43: #{fwd.1} parent=1 // pred_check_branch
      %39 = sbr.rel (0) target = $region45
    $region44: #{fwd.1} parent=1 // pred_region
      _
    $region45: #{fwd.1} parent=1 // pred_fallthru
      _
    // Predicated region
    $region46: #{fwd.1} parent=1 // pred_check
      _
    $region47: #{fwd.1} parent=1 // pred_check_branch
      %41 = sbr.rel (0) target = $region49
    $region48: #{fwd.1} parent=1 // pred_region
      _
    $region49: #{fwd.1} parent=1 // pred_fallthru
      _
    %v43 = vld [vmem:[%s0] sm:$0xff]
    %v44 = vld [vmem:[%s0 + $0x8] sm:$0xff]
    %v45 = vld [vmem:[%s1] sm:$0xff]
    %v46 = vadd.f32 %v43, %v45
    %v47 = vadd.f32 %v44, %v45
    %v48 = vlaneseq
    %v49 = vshrl.u32 %v48, 7
    %v50 = vlaneseq
    %v51 = vand.u32 %v50, 127
    %vm52 = vcmp.le.s32.totalorder %v51, %v49
    %v53 = vsel %vm52, 0.0, -1e+30
    %v54 = vld [vmem:[%s9] sm:$0x3f]
    %vm55 = vcmask 523264
    %v56 = vsel %vm55, %v46, 0.0
    %57 = vadd.xlane.f32.xlu0 %v56
    %v58 = vpop.xlane.xlu0 %57
    %v59 = vsel %vm55, %v47, 0.0
    %60 = vadd.xlane.f32.xlu0 %v59
    %v61 = vpop.xlane.xlu0 %60
    %v62 = vrcp.pop 64.0
    %v63 = vmul.f32 %v58, %v62
    %v64 = vmul.f32 %v61, %v62
    %v65 = vsub.f32 %v46, %v63
    %v66 = vsub.f32 %v47, %v64
    %v67 = vmul.f32 %v65, %v65
    %v68 = vmul.f32 %v66, %v66
    %v69 = vsel %vm55, %v67, 0.0
    %70 = vadd.xlane.f32.xlu0 %v69
    %v71 = vpop.xlane.xlu0 %70
    %v72 = vsel %vm55, %v68, 0.0
    %73 = vadd.xlane.f32.xlu0 %v72
    %v74 = vpop.xlane.xlu0 %73
    %v75 = vmul.f32 %v71, %v62
    %v76 = vmul.f32 %v74, %v62
    %v77 = vadd.f32 %v75, 1e-05
    %v78 = vadd.f32 %v76, 1e-05
    %v79 = vrsqrt.pop %v77
    %v80 = vrsqrt.pop %v78
    %v81 = vmul.f32 %v65, %v79
    %v82 = vmul.f32 %v66, %v80
    %v83 = vlaneseq
    %v84 = vshrl.u32 %v83, 7
    %v85 = vsub.s32 0, %v84
    %v86 = vrot.slane %v54, %v85
    %v87 = vmul.f32 %v81, %v86
    %v88 = vmul.f32 %v82, %v86
    %v89 = vlaneseq
    %v90 = vshrl.u32 %v89, 7
    %v91 = vsub.s32 1, %v90
    %v92 = vrot.slane %v54, %v91
    %v93 = vadd.f32 %v87, %v92
    %v94 = vadd.f32 %v88, %v92
    %v95 = vld [vmem:[%s3] sm:$0xff]
    %v96 = vld [vmem:[%s3 + $0x8] sm:$0xff]
    %v97 = vld [vmem:[%s3 + $0x10] sm:$0xff]
    %v98 = vld [vmem:[%s3 + $0x18] sm:$0xff]
    %v99 = vld [vmem:[%s3 + $0x20] sm:$0xff]
    %v100 = vld [vmem:[%s3 + $0x28] sm:$0xff]
    %v101 = vld [vmem:[%s3 + $0x30] sm:$0xff]
    %v102 = vld [vmem:[%s3 + $0x38] sm:$0xff]
    %v103 = vpack.c.bf16 %v94, %v93
    %v104 = vld [vmem:[%s4] sm:$0x3]
    %v106 = vlaneseq
    %v107 = vshrl.u32 %v106, 7
    %v108 = vsub.s32 0, %v107
    %v109 = vrot.slane %v104, %v108
    %v110 = vlaneseq
    %v111 = vshrl.u32 %v110, 7
    %v112 = vsub.s32 1, %v111
    %v113 = vrot.slane %v104, %v112
    %v124 = vunpack.c.l.b16 %v95
    %v125 = vunpack.c.h.b16 %v95
    %v126 = vunpack.c.l.b16 %v96
    %v127 = vunpack.c.h.b16 %v96
    %v128 = vunpack.c.l.b16 %v97
    %v129 = vunpack.c.h.b16 %v97
    %v130 = vunpack.c.l.b16 %v98
    %v131 = vunpack.c.h.b16 %v98
    %v132 = vunpack.c.l.b16 %v99
    %v133 = vunpack.c.h.b16 %v99
    %v134 = vunpack.c.l.b16 %v100
    %v135 = vunpack.c.h.b16 %v100
    %v136 = vunpack.c.l.b16 %v101
    %v137 = vunpack.c.h.b16 %v101
    %v138 = vunpack.c.l.b16 %v102
    %v139 = vunpack.c.h.b16 %v102
    %v140 = vpack.c.b16 %v126, %v124
    %v141 = vpack.c.b16 %v127, %v125
    %v142 = vpack.c.b16 %v130, %v128
    %v143 = vpack.c.b16 %v131, %v129
    %v144 = vpack.c.b16 %v134, %v132
    %v145 = vpack.c.b16 %v135, %v133
    %v146 = vpack.c.b16 %v138, %v136
    %v147 = vpack.c.b16 %v139, %v137
    %v157 = vsel %vm55, %v103, 0
    %159 = vmatprep.subr.bf16.mxu0 %v141
    %160 = vmatpush1.bf16.msra.mxu0 %v140
    %161 = vmatprep.subr.bf16.mxu0 %v143
    %162 = vmatpush1.bf16.msra.mxu0 %v142
    %163 = vmatprep.subr.bf16.mxu0 %v145
    %164 = vmatpush1.bf16.msra.mxu0 %v144
    %165 = vmatprep.subr.bf16.mxu0 %v147
    %166 = vmatpush1.bf16.msra.mxu0 %v146
    %167 = vmatprep.subr.bf16.mxu0 0
    %168 = vmatpush1.bf16.msra.mxu0 0
    %169 = vmatprep.subr.bf16.mxu0 0
    %170 = vmatpush1.bf16.msra.mxu0 0
    %171 = vmatprep.subr.bf16.mxu0 0
    %172 = vmatpush1.bf16.msra.mxu0 0
    %173 = vmatprep.subr.bf16.mxu0 0
    %174 = vmatpush1.bf16.msra.mxu0 0
    %175 = vmatprep.subr.bf16.mxu0 0
    %176 = vmatpush1.bf16.msra.mxu0 0
    %177 = vmatprep.subr.bf16.mxu0 0
    %178 = vmatpush1.bf16.msra.mxu0 0
    %179 = vmatprep.subr.bf16.mxu0 0
    %180 = vmatpush1.bf16.msra.mxu0 0
    %181 = vmatprep.subr.bf16.mxu0 0
    %182 = vmatpush1.bf16.msra.mxu0 0
    %183 = vmatprep.subr.bf16.mxu0 0
    %184 = vmatpush1.bf16.msra.mxu0 0
    %185 = vmatprep.subr.bf16.mxu0 0
    %186 = vmatpush1.bf16.msra.mxu0 0
    %187 = vmatprep.subr.bf16.mxu0 0
    %188 = vmatpush1.bf16.msra.mxu0 0
    %189 = vmatprep.subr.bf16.mxu0 0
    %190 = vmatpush1.bf16.msra.mxu0 0
    %191 = vmatprep.mubr.bf16.mxu0 0
    %192 = vmatmul.mubr.bf16.gmra.mrb[0].mxu0 %v157
    %v193 = vpop.f32.mrb[0].mxu0
    %v194 = vadd.f32 %v109, %v193
    %v195 = vpop.f32.mrb[0].mxu0
    %v196 = vadd.f32 %v113, %v195
    %v197 = vpop.f32.mrb[0].mxu0
    %v198 = vadd.f32 %v109, %v197
    %v199 = vpop.f32.mrb[0].mxu0
    %v200 = vadd.f32 %v113, %v199
    %201 = vdwg.mxu0
    %v202 = vpack.c.bf16 %v194, %v194
    %v203 = vpack.c.bf16 %v198, %v198
    %v204 = vpack.c.bf16 %v196, %v196
    %v205 = vpack.c.bf16 %v200, %v200
    %207 = vrot.lane.b32.xlu0 %v202, 64
    %v208 = vpop.permute.xlu0 %207
    %vm209 = vcmask 130048
    %v211 = vsel %vm209, %v202, 0
    %v214 = vsel %vm209, %v208, 0
    %216 = vmatprep.subr.bf16.mxu0 0
    %217 = vmatpush1.bf16.xpose.msra.mxu0 %v214
    %218 = vmatprep.subr.bf16.mxu0 0
    %219 = vmatpush1.bf16.xpose.msra.mxu0 0
    %220 = vmatprep.subr.bf16.mxu0 0
    %221 = vmatpush1.bf16.xpose.msra.mxu0 0
    %222 = vmatprep.subr.bf16.mxu0 0
    %223 = vmatpush1.bf16.xpose.msra.mxu0 0
    %224 = vmatprep.subr.bf16.mxu0 0
    %225 = vmatpush1.bf16.xpose.msra.mxu0 0
    %226 = vmatprep.subr.bf16.mxu0 0
    %227 = vmatpush1.bf16.xpose.msra.mxu0 0
    %228 = vmatprep.subr.bf16.mxu0 0
    %229 = vmatpush1.bf16.xpose.msra.mxu0 0
    %230 = vmatprep.subr.bf16.mxu0 0
    %231 = vmatpush1.bf16.xpose.msra.mxu0 0
    %232 = vmatprep.subr.bf16.mxu0 0
    %233 = vmatpush1.bf16.xpose.msra.mxu0 0
    %234 = vmatprep.subr.bf16.mxu0 0
    %235 = vmatpush1.bf16.xpose.msra.mxu0 0
    %236 = vmatprep.subr.bf16.mxu0 0
    %237 = vmatpush1.bf16.xpose.msra.mxu0 0
    %238 = vmatprep.subr.bf16.mxu0 0
    %239 = vmatpush1.bf16.xpose.msra.mxu0 0
    %240 = vmatprep.subr.bf16.mxu0 0
    %241 = vmatpush1.bf16.xpose.msra.mxu0 0
    %242 = vmatprep.subr.bf16.mxu0 0
    %243 = vmatpush1.bf16.xpose.msra.mxu0 0
    %244 = vmatprep.subr.bf16.mxu0 0
    %245 = vmatpush1.bf16.xpose.msra.mxu0 0
    %246 = vmatprep.subr.bf16.mxu0 0
    %247 = vmatpush1.bf16.xpose.msra.mxu0 0
    %248 = vmatprep.mubr.bf16.mxu0 0
    %249 = vmatmul.mubr.bf16.gmra.mrb[0].mxu0 %v211
    %v250 = vpop.f32.mrb[0].mxu0
    %v251 = vadd.f32 %v53, %v250
    %v252 = vpop.f32.mrb[0].mxu0
    %v253 = vpop.f32.mrb[0].mxu0
    %v254 = vpop.f32.mrb[0].mxu0
    %255 = vdwg.mxu0
    %257 = vrot.lane.b32.xlu0 %v203, 64
    %v258 = vpop.permute.xlu0 %257
    %v260 = vsel %vm209, %v203, 0
    %v263 = vsel %vm209, %v258, 0
    %265 = vmatprep.subr.bf16.mxu0 0
    %266 = vmatpush1.bf16.xpose.msra.mxu0 %v263
    %267 = vmatprep.subr.bf16.mxu0 0
    %268 = vmatpush1.bf16.xpose.msra.mxu0 0
    %269 = vmatprep.subr.bf16.mxu0 0
    %270 = vmatpush1.bf16.xpose.msra.mxu0 0
    %271 = vmatprep.subr.bf16.mxu0 0
    %272 = vmatpush1.bf16.xpose.msra.mxu0 0
    %273 = vmatprep.subr.bf16.mxu0 0
    %274 = vmatpush1.bf16.xpose.msra.mxu0 0
    %275 = vmatprep.subr.bf16.mxu0 0
    %276 = vmatpush1.bf16.xpose.msra.mxu0 0
    %277 = vmatprep.subr.bf16.mxu0 0
    %278 = vmatpush1.bf16.xpose.msra.mxu0 0
    %279 = vmatprep.subr.bf16.mxu0 0
    %280 = vmatpush1.bf16.xpose.msra.mxu0 0
    %281 = vmatprep.subr.bf16.mxu0 0
    %282 = vmatpush1.bf16.xpose.msra.mxu0 0
    %283 = vmatprep.subr.bf16.mxu0 0
    %284 = vmatpush1.bf16.xpose.msra.mxu0 0
    %285 = vmatprep.subr.bf16.mxu0 0
    %286 = vmatpush1.bf16.xpose.msra.mxu0 0
    %287 = vmatprep.subr.bf16.mxu0 0
    %288 = vmatpush1.bf16.xpose.msra.mxu0 0
    %289 = vmatprep.subr.bf16.mxu0 0
    %290 = vmatpush1.bf16.xpose.msra.mxu0 0
    %291 = vmatprep.subr.bf16.mxu0 0
    %292 = vmatpush1.bf16.xpose.msra.mxu0 0
    %293 = vmatprep.subr.bf16.mxu0 0
    %294 = vmatpush1.bf16.xpose.msra.mxu0 0
    %295 = vmatprep.subr.bf16.mxu0 0
    %296 = vmatpush1.bf16.xpose.msra.mxu0 0
    %297 = vmatprep.mubr.bf16.mxu0 0
    %298 = vmatmul.mubr.bf16.gmra.mrb[0].mxu0 %v260
    %v299 = vpop.f32.mrb[0].mxu0
    %v300 = vadd.f32 %v53, %v299
    %v301 = vpop.f32.mrb[0].mxu0
    %v302 = vpop.f32.mrb[0].mxu0
    %v303 = vpop.f32.mrb[0].mxu0
    %304 = vdwg.mxu0
    %vm305 = vcmask 64512
    %v306 = vsel %vm305, %v251, -inf
    %307 = vmax.xlane.f32.xlu0 %v306
    %v308 = vpop.xlane.xlu0 %307
    %v309 = vsel %vm305, %v300, -inf
    %310 = vmax.xlane.f32.xlu0 %v309
    %v311 = vpop.xlane.xlu0 %310
    %v312 = vsub.f32 %v251, %v308
    %v313 = vsub.f32 %v300, %v311
    %v314 = vmul.f32 %v312, 1.442695
    %v315 = vpow.pop %v314
    %v316 = vmul.f32 %v313, 1.442695
    %v317 = vpow.pop %v316
    %v318 = vsel %vm305, %v315, 0.0
    %319 = vadd.xlane.f32.xlu0 %v318
    %v320 = vpop.xlane.xlu0 %319
    %v321 = vsel %vm305, %v317, 0.0
    %322 = vadd.xlane.f32.xlu0 %v321
    %v323 = vpop.xlane.xlu0 %322
    %v324 = vrcp.pop %v320
    %v325 = vrcp.pop %v323
    %v326 = vmul.f32 %v315, %v324
    %v327 = vmul.f32 %v317, %v325
    %v328 = vpack.c.bf16 %v326, %v326
    %v329 = vpack.c.bf16 %v327, %v327
    %v331 = vsel %vm305, %v328, 0
    %vm333 = vcmask 1043456
    %v335 = vsel %vm333, %v204, 0
    %337 = vmatprep.subr.bf16.mxu0 0
    %338 = vmatpush1.bf16.msra.mxu0 %v335
    %339 = vmatprep.subr.bf16.mxu0 0
    %340 = vmatpush1.bf16.msra.mxu0 0
    %341 = vmatprep.subr.bf16.mxu0 0
    %342 = vmatpush1.bf16.msra.mxu0 0
    %343 = vmatprep.subr.bf16.mxu0 0
    %344 = vmatpush1.bf16.msra.mxu0 0
    %345 = vmatprep.subr.bf16.mxu0 0
    %346 = vmatpush1.bf16.msra.mxu0 0
    %347 = vmatprep.subr.bf16.mxu0 0
    %348 = vmatpush1.bf16.msra.mxu0 0
    %349 = vmatprep.subr.bf16.mxu0 0
    %350 = vmatpush1.bf16.msra.mxu0 0
    %351 = vmatprep.subr.bf16.mxu0 0
    %352 = vmatpush1.bf16.msra.mxu0 0
    %353 = vmatprep.subr.bf16.mxu0 0
    %354 = vmatpush1.bf16.msra.mxu0 0
    %355 = vmatprep.subr.bf16.mxu0 0
    %356 = vmatpush1.bf16.msra.mxu0 0
    %357 = vmatprep.subr.bf16.mxu0 0
    %358 = vmatpush1.bf16.msra.mxu0 0
    %359 = vmatprep.subr.bf16.mxu0 0
    %360 = vmatpush1.bf16.msra.mxu0 0
    %361 = vmatprep.subr.bf16.mxu0 0
    %362 = vmatpush1.bf16.msra.mxu0 0
    %363 = vmatprep.subr.bf16.mxu0 0
    %364 = vmatpush1.bf16.msra.mxu0 0
    %365 = vmatprep.subr.bf16.mxu0 0
    %366 = vmatpush1.bf16.msra.mxu0 0
    %367 = vmatprep.subr.bf16.mxu0 0
    %368 = vmatpush1.bf16.msra.mxu0 0
    %369 = vmatprep.mubr.bf16.mxu0 0
    %370 = vmatmul.mubr.bf16.gmra.mrb[0].mxu0 %v331
    %v371 = vpop.f32.mrb[0].mxu0
    %v372 = vadd.f32 0.0, %v371
    %v373 = vpop.f32.mrb[0].mxu0
    %v374 = vpop.f32.mrb[0].mxu0
    %v375 = vpop.f32.mrb[0].mxu0
    %376 = vdwg.mxu0
    %v378 = vsel %vm305, %v329, 0
    %v381 = vsel %vm333, %v205, 0
    %383 = vmatprep.subr.bf16.mxu0 0
    %384 = vmatpush1.bf16.msra.mxu0 %v381
    %385 = vmatprep.subr.bf16.mxu0 0
    %386 = vmatpush1.bf16.msra.mxu0 0
    %387 = vmatprep.subr.bf16.mxu0 0
    %388 = vmatpush1.bf16.msra.mxu0 0
    %389 = vmatprep.subr.bf16.mxu0 0
    %390 = vmatpush1.bf16.msra.mxu0 0
    %391 = vmatprep.subr.bf16.mxu0 0
    %392 = vmatpush1.bf16.msra.mxu0 0
    %393 = vmatprep.subr.bf16.mxu0 0
    %394 = vmatpush1.bf16.msra.mxu0 0
    %395 = vmatprep.subr.bf16.mxu0 0
    %396 = vmatpush1.bf16.msra.mxu0 0
    %397 = vmatprep.subr.bf16.mxu0 0
    %398 = vmatpush1.bf16.msra.mxu0 0
    %399 = vmatprep.subr.bf16.mxu0 0
    %400 = vmatpush1.bf16.msra.mxu0 0
    %401 = vmatprep.subr.bf16.mxu0 0
    %402 = vmatpush1.bf16.msra.mxu0 0
    %403 = vmatprep.subr.bf16.mxu0 0
    %404 = vmatpush1.bf16.msra.mxu0 0
    %405 = vmatprep.subr.bf16.mxu0 0
    %406 = vmatpush1.bf16.msra.mxu0 0
    %407 = vmatprep.subr.bf16.mxu0 0
    %408 = vmatpush1.bf16.msra.mxu0 0
    %409 = vmatprep.subr.bf16.mxu0 0
    %410 = vmatpush1.bf16.msra.mxu0 0
    %411 = vmatprep.subr.bf16.mxu0 0
    %412 = vmatpush1.bf16.msra.mxu0 0
    %413 = vmatprep.subr.bf16.mxu0 0
    %414 = vmatpush1.bf16.msra.mxu0 0
    %415 = vmatprep.mubr.bf16.mxu0 0
    %416 = vmatmul.mubr.bf16.gmra.mrb[0].mxu0 %v378
    %v417 = vpop.f32.mrb[0].mxu0
    %v418 = vadd.f32 0.0, %v417
    %v419 = vpop.f32.mrb[0].mxu0
    %v420 = vpop.f32.mrb[0].mxu0
    %v421 = vpop.f32.mrb[0].mxu0
    %422 = vdwg.mxu0
    %v423 = vld [vmem:[%s5] sm:$0xf]
    %v424 = vld [vmem:[%s5 + $0x4] sm:$0xf]
    %v425 = vpack.c.bf16 %v418, %v372
    %426 = vrot.lane.b32.xlu0 %v202, 112
    %v427 = vpop.permute.xlu0 %426
    %428 = vrot.lane.b32.xlu0 %v202, 48
    %v429 = vpop.permute.xlu0 %428
    %v431 = vsel %vm209, %v427, 0
    %v434 = vsel %vm209, %v429, 0
    %436 = vmatprep.subr.bf16.mxu0 0
    %437 = vmatpush1.bf16.xpose.msra.mxu0 %v434
    %438 = vmatprep.subr.bf16.mxu0 0
    %439 = vmatpush1.bf16.xpose.msra.mxu0 0
    %440 = vmatprep.subr.bf16.mxu0 0
    %441 = vmatpush1.bf16.xpose.msra.mxu0 0
    %442 = vmatprep.subr.bf16.mxu0 0
    %443 = vmatpush1.bf16.xpose.msra.mxu0 0
    %444 = vmatprep.subr.bf16.mxu0 0
    %445 = vmatpush1.bf16.xpose.msra.mxu0 0
    %446 = vmatprep.subr.bf16.mxu0 0
    %447 = vmatpush1.bf16.xpose.msra.mxu0 0
    %448 = vmatprep.subr.bf16.mxu0 0
    %449 = vmatpush1.bf16.xpose.msra.mxu0 0
    %450 = vmatprep.subr.bf16.mxu0 0
    %451 = vmatpush1.bf16.xpose.msra.mxu0 0
    %452 = vmatprep.subr.bf16.mxu0 0
    %453 = vmatpush1.bf16.xpose.msra.mxu0 0
    %454 = vmatprep.subr.bf16.mxu0 0
    %455 = vmatpush1.bf16.xpose.msra.mxu0 0
    %456 = vmatprep.subr.bf16.mxu0 0
    %457 = vmatpush1.bf16.xpose.msra.mxu0 0
    %458 = vmatprep.subr.bf16.mxu0 0
    %459 = vmatpush1.bf16.xpose.msra.mxu0 0
    %460 = vmatprep.subr.bf16.mxu0 0
    %461 = vmatpush1.bf16.xpose.msra.mxu0 0
    %462 = vmatprep.subr.bf16.mxu0 0
    %463 = vmatpush1.bf16.xpose.msra.mxu0 0
    %464 = vmatprep.subr.bf16.mxu0 0
    %465 = vmatpush1.bf16.xpose.msra.mxu0 0
    %466 = vmatprep.subr.bf16.mxu0 0
    %467 = vmatpush1.bf16.xpose.msra.mxu0 0
    %468 = vmatprep.mubr.bf16.mxu0 0
    %469 = vmatmul.mubr.bf16.gmra.mrb[0].mxu0 %v431
    %v470 = vpop.f32.mrb[0].mxu0
    %v471 = vadd.f32 %v53, %v470
    %v472 = vpop.f32.mrb[0].mxu0
    %v473 = vpop.f32.mrb[0].mxu0
    %v474 = vpop.f32.mrb[0].mxu0
    %475 = vdwg.mxu0
    %476 = vrot.lane.b32.xlu0 %v203, 112
    %v477 = vpop.permute.xlu0 %476
    %478 = vrot.lane.b32.xlu0 %v203, 48
    %v479 = vpop.permute.xlu0 %478
    %v481 = vsel %vm209, %v477, 0
    %v484 = vsel %vm209, %v479, 0
    %486 = vmatprep.subr.bf16.mxu0 0
    %487 = vmatpush1.bf16.xpose.msra.mxu0 %v484
    %488 = vmatprep.subr.bf16.mxu0 0
    %489 = vmatpush1.bf16.xpose.msra.mxu0 0
    %490 = vmatprep.subr.bf16.mxu0 0
    %491 = vmatpush1.bf16.xpose.msra.mxu0 0
    %492 = vmatprep.subr.bf16.mxu0 0
    %493 = vmatpush1.bf16.xpose.msra.mxu0 0
    %494 = vmatprep.subr.bf16.mxu0 0
    %495 = vmatpush1.bf16.xpose.msra.mxu0 0
    %496 = vmatprep.subr.bf16.mxu0 0
    %497 = vmatpush1.bf16.xpose.msra.mxu0 0
    %498 = vmatprep.subr.bf16.mxu0 0
    %499 = vmatpush1.bf16.xpose.msra.mxu0 0
    %500 = vmatprep.subr.bf16.mxu0 0
    %501 = vmatpush1.bf16.xpose.msra.mxu0 0
    %502 = vmatprep.subr.bf16.mxu0 0
    %503 = vmatpush1.bf16.xpose.msra.mxu0 0
    %504 = vmatprep.subr.bf16.mxu0 0
    %505 = vmatpush1.bf16.xpose.msra.mxu0 0
    %506 = vmatprep.subr.bf16.mxu0 0
    %507 = vmatpush1.bf16.xpose.msra.mxu0 0
    %508 = vmatprep.subr.bf16.mxu0 0
    %509 = vmatpush1.bf16.xpose.msra.mxu0 0
    %510 = vmatprep.subr.bf16.mxu0 0
    %511 = vmatpush1.bf16.xpose.msra.mxu0 0
    %512 = vmatprep.subr.bf16.mxu0 0
    %513 = vmatpush1.bf16.xpose.msra.mxu0 0
    %514 = vmatprep.subr.bf16.mxu0 0
    %515 = vmatpush1.bf16.xpose.msra.mxu0 0
    %516 = vmatprep.subr.bf16.mxu0 0
    %517 = vmatpush1.bf16.xpose.msra.mxu0 0
    %518 = vmatprep.mubr.bf16.mxu0 0
    %519 = vmatmul.mubr.bf16.gmra.mrb[0].mxu0 %v481
    %v520 = vpop.f32.mrb[0].mxu0
    %v521 = vadd.f32 %v53, %v520
    %v522 = vpop.f32.mrb[0].mxu0
    %v523 = vpop.f32.mrb[0].mxu0
    %v524 = vpop.f32.mrb[0].mxu0
    %525 = vdwg.mxu0
    %v526 = vsel %vm305, %v471, -inf
    %527 = vmax.xlane.f32.xlu0 %v526
    %v528 = vpop.xlane.xlu0 %527
    %v529 = vsel %vm305, %v521, -inf
    %530 = vmax.xlane.f32.xlu0 %v529
    %v531 = vpop.xlane.xlu0 %530
    %v532 = vsub.f32 %v471, %v528
    %v533 = vsub.f32 %v521, %v531
    %v534 = vmul.f32 %v532, 1.442695
    %v535 = vpow.pop %v534
    %v536 = vmul.f32 %v533, 1.442695
    %v537 = vpow.pop %v536
    %v538 = vsel %vm305, %v535, 0.0
    %539 = vadd.xlane.f32.xlu0 %v538
    %v540 = vpop.xlane.xlu0 %539
    %v541 = vsel %vm305, %v537, 0.0
    %542 = vadd.xlane.f32.xlu0 %v541
    %v543 = vpop.xlane.xlu0 %542
    %v544 = vrcp.pop %v540
    %v545 = vrcp.pop %v543
    %v546 = vmul.f32 %v535, %v544
    %v547 = vmul.f32 %v537, %v545
    %v548 = vpack.c.bf16 %v546, %v546
    %v549 = vpack.c.bf16 %v547, %v547
    %551 = vrot.lane.b32.xlu0 %v204, 112
    %v552 = vpop.permute.xlu0 %551
    %v554 = vsel %vm305, %v548, 0
    %v557 = vsel %vm333, %v552, 0
    %559 = vmatprep.subr.bf16.mxu0 0
    %560 = vmatpush1.bf16.msra.mxu0 %v557
    %561 = vmatprep.subr.bf16.mxu0 0
    %562 = vmatpush1.bf16.msra.mxu0 0
    %563 = vmatprep.subr.bf16.mxu0 0
    %564 = vmatpush1.bf16.msra.mxu0 0
    %565 = vmatprep.subr.bf16.mxu0 0
    %566 = vmatpush1.bf16.msra.mxu0 0
    %567 = vmatprep.subr.bf16.mxu0 0
    %568 = vmatpush1.bf16.msra.mxu0 0
    %569 = vmatprep.subr.bf16.mxu0 0
    %570 = vmatpush1.bf16.msra.mxu0 0
    %571 = vmatprep.subr.bf16.mxu0 0
    %572 = vmatpush1.bf16.msra.mxu0 0
    %573 = vmatprep.subr.bf16.mxu0 0
    %574 = vmatpush1.bf16.msra.mxu0 0
    %575 = vmatprep.subr.bf16.mxu0 0
    %576 = vmatpush1.bf16.msra.mxu0 0
    %577 = vmatprep.subr.bf16.mxu0 0
    %578 = vmatpush1.bf16.msra.mxu0 0
    %579 = vmatprep.subr.bf16.mxu0 0
    %580 = vmatpush1.bf16.msra.mxu0 0
    %581 = vmatprep.subr.bf16.mxu0 0
    %582 = vmatpush1.bf16.msra.mxu0 0
    %583 = vmatprep.subr.bf16.mxu0 0
    %584 = vmatpush1.bf16.msra.mxu0 0
    %585 = vmatprep.subr.bf16.mxu0 0
    %586 = vmatpush1.bf16.msra.mxu0 0
    %587 = vmatprep.subr.bf16.mxu0 0
    %588 = vmatpush1.bf16.msra.mxu0 0
    %589 = vmatprep.subr.bf16.mxu0 0
    %590 = vmatpush1.bf16.msra.mxu0 0
    %591 = vmatprep.mubr.bf16.mxu0 0
    %592 = vmatmul.mubr.bf16.gmra.mrb[0].mxu0 %v554
    %v593 = vpop.f32.mrb[0].mxu0
    %v594 = vadd.f32 0.0, %v593
    %v595 = vpop.f32.mrb[0].mxu0
    %v596 = vpop.f32.mrb[0].mxu0
    %v597 = vpop.f32.mrb[0].mxu0
    %598 = vdwg.mxu0
    %600 = vrot.lane.b32.xlu0 %v205, 112
    %v601 = vpop.permute.xlu0 %600
    %v603 = vsel %vm305, %v549, 0
    %v606 = vsel %vm333, %v601, 0
    %608 = vmatprep.subr.bf16.mxu0 0
    %609 = vmatpush1.bf16.msra.mxu0 %v606
    %610 = vmatprep.subr.bf16.mxu0 0
    %611 = vmatpush1.bf16.msra.mxu0 0
    %612 = vmatprep.subr.bf16.mxu0 0
    %613 = vmatpush1.bf16.msra.mxu0 0
    %614 = vmatprep.subr.bf16.mxu0 0
    %615 = vmatpush1.bf16.msra.mxu0 0
    %616 = vmatprep.subr.bf16.mxu0 0
    %617 = vmatpush1.bf16.msra.mxu0 0
    %618 = vmatprep.subr.bf16.mxu0 0
    %619 = vmatpush1.bf16.msra.mxu0 0
    %620 = vmatprep.subr.bf16.mxu0 0
    %621 = vmatpush1.bf16.msra.mxu0 0
    %622 = vmatprep.subr.bf16.mxu0 0
    %623 = vmatpush1.bf16.msra.mxu0 0
    %624 = vmatprep.subr.bf16.mxu0 0
    %625 = vmatpush1.bf16.msra.mxu0 0
    %626 = vmatprep.subr.bf16.mxu0 0
    %627 = vmatpush1.bf16.msra.mxu0 0
    %628 = vmatprep.subr.bf16.mxu0 0
    %629 = vmatpush1.bf16.msra.mxu0 0
    %630 = vmatprep.subr.bf16.mxu0 0
    %631 = vmatpush1.bf16.msra.mxu0 0
    %632 = vmatprep.subr.bf16.mxu0 0
    %633 = vmatpush1.bf16.msra.mxu0 0
    %634 = vmatprep.subr.bf16.mxu0 0
    %635 = vmatpush1.bf16.msra.mxu0 0
    %636 = vmatprep.subr.bf16.mxu0 0
    %637 = vmatpush1.bf16.msra.mxu0 0
    %638 = vmatprep.subr.bf16.mxu0 0
    %639 = vmatpush1.bf16.msra.mxu0 0
    %640 = vmatprep.mubr.bf16.mxu0 0
    %641 = vmatmul.mubr.bf16.gmra.mrb[0].mxu0 %v603
    %v642 = vpop.f32.mrb[0].mxu0
    %v643 = vadd.f32 0.0, %v642
    %v644 = vpop.f32.mrb[0].mxu0
    %v645 = vpop.f32.mrb[0].mxu0
    %v646 = vpop.f32.mrb[0].mxu0
    %647 = vdwg.mxu0
    %s648 = scalar_lea.vmem %s5, 8
    %v649 = vld [vmem:[%s648] sm:$0xf]
    %v650 = vld [vmem:[%s648 + $0x4] sm:$0xf]
    %v651 = vpack.c.bf16 %v643, %v594
    %v654 = vunpack.c.l.b16 %v649
    %v655 = vunpack.c.l.b16 %v650
    %v656 = vpack.c.b16 %v655, %v654
    %v659 = vsel %vm209, %v651, 0
    %661 = vmatprep.subr.bf16.mxu0 0
    %662 = vmatpush1.bf16.msra.mxu0 %v656
    %663 = vmatprep.subr.bf16.mxu0 0
    %664 = vmatpush1.bf16.msra.mxu0 0
    %665 = vmatprep.subr.bf16.mxu0 0
    %666 = vmatpush1.bf16.msra.mxu0 0
    %667 = vmatprep.subr.bf16.mxu0 0
    %668 = vmatpush1.bf16.msra.mxu0 0
    %669 = vmatprep.subr.bf16.mxu0 0
    %670 = vmatpush1.bf16.msra.mxu0 0
    %671 = vmatprep.subr.bf16.mxu0 0
    %672 = vmatpush1.bf16.msra.mxu0 0
    %673 = vmatprep.subr.bf16.mxu0 0
    %674 = vmatpush1.bf16.msra.mxu0 0
    %675 = vmatprep.subr.bf16.mxu0 0
    %676 = vmatpush1.bf16.msra.mxu0 0
    %677 = vmatprep.subr.bf16.mxu0 0
    %678 = vmatpush1.bf16.msra.mxu0 0
    %679 = vmatprep.subr.bf16.mxu0 0
    %680 = vmatpush1.bf16.msra.mxu0 0
    %681 = vmatprep.subr.bf16.mxu0 0
    %682 = vmatpush1.bf16.msra.mxu0 0
    %683 = vmatprep.subr.bf16.mxu0 0
    %684 = vmatpush1.bf16.msra.mxu0 0
    %685 = vmatprep.subr.bf16.mxu0 0
    %686 = vmatpush1.bf16.msra.mxu0 0
    %687 = vmatprep.subr.bf16.mxu0 0
    %688 = vmatpush1.bf16.msra.mxu0 0
    %689 = vmatprep.subr.bf16.mxu0 0
    %690 = vmatpush1.bf16.msra.mxu0 0
    %691 = vmatprep.subr.bf16.mxu0 0
    %692 = vmatpush1.bf16.msra.mxu0 0
    %693 = vmatprep.mubr.bf16.mxu0 0
    %694 = vmatmul.mubr.bf16.gmra.mrb[0].mxu0 %v659
    %v695 = vpop.f32.mrb[0].mxu0
    %v696 = vadd.f32 0.0, %v695
    %v697 = vpop.f32.mrb[0].mxu0
    %v698 = vpop.f32.mrb[0].mxu0
    %v699 = vadd.f32 0.0, %v698
    %v700 = vpop.f32.mrb[0].mxu0
    %701 = vdwg.mxu0
    %v704 = vunpack.c.l.b16 %v423
    %v705 = vunpack.c.l.b16 %v424
    %v706 = vpack.c.b16 %v705, %v704
    %v709 = vsel %vm209, %v425, 0
    %711 = vmatprep.subr.bf16.mxu0 0
    %712 = vmatpush1.bf16.msra.mxu0 %v706
    %713 = vmatprep.subr.bf16.mxu0 0
    %714 = vmatpush1.bf16.msra.mxu0 0
    %715 = vmatprep.subr.bf16.mxu0 0
    %716 = vmatpush1.bf16.msra.mxu0 0
    %717 = vmatprep.subr.bf16.mxu0 0
    %718 = vmatpush1.bf16.msra.mxu0 0
    %719 = vmatprep.subr.bf16.mxu0 0
    %720 = vmatpush1.bf16.msra.mxu0 0
    %721 = vmatprep.subr.bf16.mxu0 0
    %722 = vmatpush1.bf16.msra.mxu0 0
    %723 = vmatprep.subr.bf16.mxu0 0
    %724 = vmatpush1.bf16.msra.mxu0 0
    %725 = vmatprep.subr.bf16.mxu0 0
    %726 = vmatpush1.bf16.msra.mxu0 0
    %727 = vmatprep.subr.bf16.mxu0 0
    %728 = vmatpush1.bf16.msra.mxu0 0
    %729 = vmatprep.subr.bf16.mxu0 0
    %730 = vmatpush1.bf16.msra.mxu0 0
    %731 = vmatprep.subr.bf16.mxu0 0
    %732 = vmatpush1.bf16.msra.mxu0 0
    %733 = vmatprep.subr.bf16.mxu0 0
    %734 = vmatpush1.bf16.msra.mxu0 0
    %735 = vmatprep.subr.bf16.mxu0 0
    %736 = vmatpush1.bf16.msra.mxu0 0
    %737 = vmatprep.subr.bf16.mxu0 0
    %738 = vmatpush1.bf16.msra.mxu0 0
    %739 = vmatprep.subr.bf16.mxu0 0
    %740 = vmatpush1.bf16.msra.mxu0 0
    %741 = vmatprep.subr.bf16.mxu0 0
    %742 = vmatpush1.bf16.msra.mxu0 0
    %743 = vmatprep.mubr.bf16.mxu0 0
    %744 = vmatmul.mubr.bf16.gmra.mrb[0].mxu0 %v709
    %v745 = vpop.f32.mrb[0].mxu0
    %v746 = vadd.f32 %v696, %v745
    %v747 = vpop.f32.mrb[0].mxu0
    %v748 = vpop.f32.mrb[0].mxu0
    %v749 = vadd.f32 %v699, %v748
    %v750 = vpop.f32.mrb[0].mxu0
    %751 = vdwg.mxu0
    %752 = vrot.lane.b32.xlu0 %v202, 96
    %v753 = vpop.permute.xlu0 %752
    %754 = vrot.lane.b32.xlu0 %v202, 32
    %v755 = vpop.permute.xlu0 %754
    %v757 = vsel %vm209, %v753, 0
    %v760 = vsel %vm209, %v755, 0
    %762 = vmatprep.subr.bf16.mxu0 0
    %763 = vmatpush1.bf16.xpose.msra.mxu0 %v760
    %764 = vmatprep.subr.bf16.mxu0 0
    %765 = vmatpush1.bf16.xpose.msra.mxu0 0
    %766 = vmatprep.subr.bf16.mxu0 0
    %767 = vmatpush1.bf16.xpose.msra.mxu0 0
    %768 = vmatprep.subr.bf16.mxu0 0
    %769 = vmatpush1.bf16.xpose.msra.mxu0 0
    %770 = vmatprep.subr.bf16.mxu0 0
    %771 = vmatpush1.bf16.xpose.msra.mxu0 0
    %772 = vmatprep.subr.bf16.mxu0 0
    %773 = vmatpush1.bf16.xpose.msra.mxu0 0
    %774 = vmatprep.subr.bf16.mxu0 0
    %775 = vmatpush1.bf16.xpose.msra.mxu0 0
    %776 = vmatprep.subr.bf16.mxu0 0
    %777 = vmatpush1.bf16.xpose.msra.mxu0 0
    %778 = vmatprep.subr.bf16.mxu0 0
    %779 = vmatpush1.bf16.xpose.msra.mxu0 0
    %780 = vmatprep.subr.bf16.mxu0 0
    %781 = vmatpush1.bf16.xpose.msra.mxu0 0
    %782 = vmatprep.subr.bf16.mxu0 0
    %783 = vmatpush1.bf16.xpose.msra.mxu0 0
    %784 = vmatprep.subr.bf16.mxu0 0
    %785 = vmatpush1.bf16.xpose.msra.mxu0 0
    %786 = vmatprep.subr.bf16.mxu0 0
    %787 = vmatpush1.bf16.xpose.msra.mxu0 0
    %788 = vmatprep.subr.bf16.mxu0 0
    %789 = vmatpush1.bf16.xpose.msra.mxu0 0
    %790 = vmatprep.subr.bf16.mxu0 0
    %791 = vmatpush1.bf16.xpose.msra.mxu0 0
    %792 = vmatprep.subr.bf16.mxu0 0
    %793 = vmatpush1.bf16.xpose.msra.mxu0 0
    %794 = vmatprep.mubr.bf16.mxu0 0
    %795 = vmatmul.mubr.bf16.gmra.mrb[0].mxu0 %v757
    %v796 = vpop.f32.mrb[0].mxu0
    %v797 = vadd.f32 %v53, %v796
    %v798 = vpop.f32.mrb[0].mxu0
    %v799 = vpop.f32.mrb[0].mxu0
    %v800 = vpop.f32.mrb[0].mxu0
    %801 = vdwg.mxu0
    %802 = vrot.lane.b32.xlu0 %v203, 96
    %v803 = vpop.permute.xlu0 %802
    %804 = vrot.lane.b32.xlu0 %v203, 32
    %v805 = vpop.permute.xlu0 %804
    %v807 = vsel %vm209, %v803, 0
    %v810 = vsel %vm209, %v805, 0
    %812 = vmatprep.subr.bf16.mxu0 0
    %813 = vmatpush1.bf16.xpose.msra.mxu0 %v810
    %814 = vmatprep.subr.bf16.mxu0 0
    %815 = vmatpush1.bf16.xpose.msra.mxu0 0
    %816 = vmatprep.subr.bf16.mxu0 0
    %817 = vmatpush1.bf16.xpose.msra.mxu0 0
    %818 = vmatprep.subr.bf16.mxu0 0
    %819 = vmatpush1.bf16.xpose.msra.mxu0 0
    %820 = vmatprep.subr.bf16.mxu0 0
    %821 = vmatpush1.bf16.xpose.msra.mxu0 0
    %822 = vmatprep.subr.bf16.mxu0 0
    %823 = vmatpush1.bf16.xpose.msra.mxu0 0
    %824 = vmatprep.subr.bf16.mxu0 0
    %825 = vmatpush1.bf16.xpose.msra.mxu0 0
    %826 = vmatprep.subr.bf16.mxu0 0
    %827 = vmatpush1.bf16.xpose.msra.mxu0 0
    %828 = vmatprep.subr.bf16.mxu0 0
    %829 = vmatpush1.bf16.xpose.msra.mxu0 0
    %830 = vmatprep.subr.bf16.mxu0 0
    %831 = vmatpush1.bf16.xpose.msra.mxu0 0
    %832 = vmatprep.subr.bf16.mxu0 0
    %833 = vmatpush1.bf16.xpose.msra.mxu0 0
    %834 = vmatprep.subr.bf16.mxu0 0
    %835 = vmatpush1.bf16.xpose.msra.mxu0 0
    %836 = vmatprep.subr.bf16.mxu0 0
    %837 = vmatpush1.bf16.xpose.msra.mxu0 0
    %838 = vmatprep.subr.bf16.mxu0 0
    %839 = vmatpush1.bf16.xpose.msra.mxu0 0
    %840 = vmatprep.subr.bf16.mxu0 0
    %841 = vmatpush1.bf16.xpose.msra.mxu0 0
    %842 = vmatprep.subr.bf16.mxu0 0
    %843 = vmatpush1.bf16.xpose.msra.mxu0 0
    %844 = vmatprep.mubr.bf16.mxu0 0
    %845 = vmatmul.mubr.bf16.gmra.mrb[0].mxu0 %v807
    %v846 = vpop.f32.mrb[0].mxu0
    %v847 = vadd.f32 %v53, %v846
    %v848 = vpop.f32.mrb[0].mxu0
    %v849 = vpop.f32.mrb[0].mxu0
    %v850 = vpop.f32.mrb[0].mxu0
    %851 = vdwg.mxu0
    %v852 = vsel %vm305, %v797, -inf
    %853 = vmax.xlane.f32.xlu0 %v852
    %v854 = vpop.xlane.xlu0 %853
    %v855 = vsel %vm305, %v847, -inf
    %856 = vmax.xlane.f32.xlu0 %v855
    %v857 = vpop.xlane.xlu0 %856
    %v858 = vsub.f32 %v797, %v854
    %v859 = vsub.f32 %v847, %v857
    %v860 = vmul.f32 %v858, 1.442695
    %v861 = vpow.pop %v860
    %v862 = vmul.f32 %v859, 1.442695
    %v863 = vpow.pop %v862
    %v864 = vsel %vm305, %v861, 0.0
    %865 = vadd.xlane.f32.xlu0 %v864
    %v866 = vpop.xlane.xlu0 %865
    %v867 = vsel %vm305, %v863, 0.0
    %868 = vadd.xlane.f32.xlu0 %v867
    %v869 = vpop.xlane.xlu0 %868
    %v870 = vrcp.pop %v866
    %v871 = vrcp.pop %v869
    %v872 = vmul.f32 %v861, %v870
    %v873 = vmul.f32 %v863, %v871
    %v874 = vpack.c.bf16 %v872, %v872
    %v875 = vpack.c.bf16 %v873, %v873
    %876 = vrot.lane.b32.xlu0 %v204, 96
    %v877 = vpop.permute.xlu0 %876
    %v879 = vsel %vm305, %v874, 0
    %v882 = vsel %vm333, %v877, 0
    %884 = vmatprep.subr.bf16.mxu0 0
    %885 = vmatpush1.bf16.msra.mxu0 %v882
    %886 = vmatprep.subr.bf16.mxu0 0
    %887 = vmatpush1.bf16.msra.mxu0 0
    %888 = vmatprep.subr.bf16.mxu0 0
    %889 = vmatpush1.bf16.msra.mxu0 0
    %890 = vmatprep.subr.bf16.mxu0 0
    %891 = vmatpush1.bf16.msra.mxu0 0
    %892 = vmatprep.subr.bf16.mxu0 0
    %893 = vmatpush1.bf16.msra.mxu0 0
    %894 = vmatprep.subr.bf16.mxu0 0
    %895 = vmatpush1.bf16.msra.mxu0 0
    %896 = vmatprep.subr.bf16.mxu0 0
    %897 = vmatpush1.bf16.msra.mxu0 0
    %898 = vmatprep.subr.bf16.mxu0 0
    %899 = vmatpush1.bf16.msra.mxu0 0
    %900 = vmatprep.subr.bf16.mxu0 0
    %901 = vmatpush1.bf16.msra.mxu0 0
    %902 = vmatprep.subr.bf16.mxu0 0
    %903 = vmatpush1.bf16.msra.mxu0 0
    %904 = vmatprep.subr.bf16.mxu0 0
    %905 = vmatpush1.bf16.msra.mxu0 0
    %906 = vmatprep.subr.bf16.mxu0 0
    %907 = vmatpush1.bf16.msra.mxu0 0
    %908 = vmatprep.subr.bf16.mxu0 0
    %909 = vmatpush1.bf16.msra.mxu0 0
    %910 = vmatprep.subr.bf16.mxu0 0
    %911 = vmatpush1.bf16.msra.mxu0 0
    %912 = vmatprep.subr.bf16.mxu0 0
    %913 = vmatpush1.bf16.msra.mxu0 0
    %914 = vmatprep.subr.bf16.mxu0 0
    %915 = vmatpush1.bf16.msra.mxu0 0
    %916 = vmatprep.mubr.bf16.mxu0 0
    %917 = vmatmul.mubr.bf16.gmra.mrb[0].mxu0 %v879
    %v918 = vpop.f32.mrb[0].mxu0
    %v919 = vadd.f32 0.0, %v918
    %v920 = vpop.f32.mrb[0].mxu0
    %v921 = vpop.f32.mrb[0].mxu0
    %v922 = vpop.f32.mrb[0].mxu0
    %923 = vdwg.mxu0
    %924 = vrot.lane.b32.xlu0 %v205, 96
    %v925 = vpop.permute.xlu0 %924
    %v927 = vsel %vm305, %v875, 0
    %v930 = vsel %vm333, %v925, 0
    %932 = vmatprep.subr.bf16.mxu0 0
    %933 = vmatpush1.bf16.msra.mxu0 %v930
    %934 = vmatprep.subr.bf16.mxu0 0
    %935 = vmatpush1.bf16.msra.mxu0 0
    %936 = vmatprep.subr.bf16.mxu0 0
    %937 = vmatpush1.bf16.msra.mxu0 0
    %938 = vmatprep.subr.bf16.mxu0 0
    %939 = vmatpush1.bf16.msra.mxu0 0
    %940 = vmatprep.subr.bf16.mxu0 0
    %941 = vmatpush1.bf16.msra.mxu0 0
    %942 = vmatprep.subr.bf16.mxu0 0
    %943 = vmatpush1.bf16.msra.mxu0 0
    %944 = vmatprep.subr.bf16.mxu0 0
    %945 = vmatpush1.bf16.msra.mxu0 0
    %946 = vmatprep.subr.bf16.mxu0 0
    %947 = vmatpush1.bf16.msra.mxu0 0
    %948 = vmatprep.subr.bf16.mxu0 0
    %949 = vmatpush1.bf16.msra.mxu0 0
    %950 = vmatprep.subr.bf16.mxu0 0
    %951 = vmatpush1.bf16.msra.mxu0 0
    %952 = vmatprep.subr.bf16.mxu0 0
    %953 = vmatpush1.bf16.msra.mxu0 0
    %954 = vmatprep.subr.bf16.mxu0 0
    %955 = vmatpush1.bf16.msra.mxu0 0
    %956 = vmatprep.subr.bf16.mxu0 0
    %957 = vmatpush1.bf16.msra.mxu0 0
    %958 = vmatprep.subr.bf16.mxu0 0
    %959 = vmatpush1.bf16.msra.mxu0 0
    %960 = vmatprep.subr.bf16.mxu0 0
    %961 = vmatpush1.bf16.msra.mxu0 0
    %962 = vmatprep.subr.bf16.mxu0 0
    %963 = vmatpush1.bf16.msra.mxu0 0
    %964 = vmatprep.mubr.bf16.mxu0 0
    %965 = vmatmul.mubr.bf16.gmra.mrb[0].mxu0 %v927
    %v966 = vpop.f32.mrb[0].mxu0
    %v967 = vadd.f32 0.0, %v966
    %v968 = vpop.f32.mrb[0].mxu0
    %v969 = vpop.f32.mrb[0].mxu0
    %v970 = vpop.f32.mrb[0].mxu0
    %971 = vdwg.mxu0
    %s972 = scalar_lea.vmem %s5, 16
    %v973 = vld [vmem:[%s972] sm:$0xf]
    %v974 = vld [vmem:[%s972 + $0x4] sm:$0xf]
    %v975 = vpack.c.bf16 %v967, %v919
    %v978 = vunpack.c.l.b16 %v973
    %v979 = vunpack.c.l.b16 %v974
    %v980 = vpack.c.b16 %v979, %v978
    %v983 = vsel %vm209, %v975, 0
    %985 = vmatprep.subr.bf16.mxu0 0
    %986 = vmatpush1.bf16.msra.mxu0 %v980
    %987 = vmatprep.subr.bf16.mxu0 0
    %988 = vmatpush1.bf16.msra.mxu0 0
    %989 = vmatprep.subr.bf16.mxu0 0
    %990 = vmatpush1.bf16.msra.mxu0 0
    %991 = vmatprep.subr.bf16.mxu0 0
    %992 = vmatpush1.bf16.msra.mxu0 0
    %993 = vmatprep.subr.bf16.mxu0 0
    %994 = vmatpush1.bf16.msra.mxu0 0
    %995 = vmatprep.subr.bf16.mxu0 0
    %996 = vmatpush1.bf16.msra.mxu0 0
    %997 = vmatprep.subr.bf16.mxu0 0
    %998 = vmatpush1.bf16.msra.mxu0 0
    %999 = vmatprep.subr.bf16.mxu0 0
    %1000 = vmatpush1.bf16.msra.mxu0 0
    %1001 = vmatprep.subr.bf16.mxu0 0
    %1002 = vmatpush1.bf16.msra.mxu0 0
    %1003 = vmatprep.subr.bf16.mxu0 0
    %1004 = vmatpush1.bf16.msra.mxu0 0
    %1005 = vmatprep.subr.bf16.mxu0 0
    %1006 = vmatpush1.bf16.msra.mxu0 0
    %1007 = vmatprep.subr.bf16.mxu0 0
    %1008 = vmatpush1.bf16.msra.mxu0 0
    %1009 = vmatprep.subr.bf16.mxu0 0
    %1010 = vmatpush1.bf16.msra.mxu0 0
    %1011 = vmatprep.subr.bf16.mxu0 0
    %1012 = vmatpush1.bf16.msra.mxu0 0
    %1013 = vmatprep.subr.bf16.mxu0 0
    %1014 = vmatpush1.bf16.msra.mxu0 0
    %1015 = vmatprep.subr.bf16.mxu0 0
    %1016 = vmatpush1.bf16.msra.mxu0 0
    %1017 = vmatprep.mubr.bf16.mxu0 0
    %1018 = vmatmul.mubr.bf16.gmra.mrb[0].mxu0 %v983
    %v1019 = vpop.f32.mrb[0].mxu0
    %v1020 = vadd.f32 0.0, %v1019
    %v1021 = vpop.f32.mrb[0].mxu0
    %v1022 = vpop.f32.mrb[0].mxu0
    %v1023 = vadd.f32 0.0, %v1022
    %v1024 = vpop.f32.mrb[0].mxu0
    %1025 = vdwg.mxu0
    %v1026 = vadd.f32 %v746, %v1020
    %v1027 = vadd.f32 %v749, %v1023
    %1028 = vrot.lane.b32.xlu0 %v202, 80
    %v1029 = vpop.permute.xlu0 %1028
    %1030 = vrot.lane.b32.xlu0 %v202, 16
    %v1031 = vpop.permute.xlu0 %1030
    %v1033 = vsel %vm209, %v1029, 0
    %v1036 = vsel %vm209, %v1031, 0
    %1038 = vmatprep.subr.bf16.mxu0 0
    %1039 = vmatpush1.bf16.xpose.msra.mxu0 %v1036
    %1040 = vmatprep.subr.bf16.mxu0 0
    %1041 = vmatpush1.bf16.xpose.msra.mxu0 0
    %1042 = vmatprep.subr.bf16.mxu0 0
    %1043 = vmatpush1.bf16.xpose.msra.mxu0 0
    %1044 = vmatprep.subr.bf16.mxu0 0
    %1045 = vmatpush1.bf16.xpose.msra.mxu0 0
    %1046 = vmatprep.subr.bf16.mxu0 0
    %1047 = vmatpush1.bf16.xpose.msra.mxu0 0
    %1048 = vmatprep.subr.bf16.mxu0 0
    %1049 = vmatpush1.bf16.xpose.msra.mxu0 0
    %1050 = vmatprep.subr.bf16.mxu0 0
    %1051 = vmatpush1.bf16.xpose.msra.mxu0 0
    %1052 = vmatprep.subr.bf16.mxu0 0
    %1053 = vmatpush1.bf16.xpose.msra.mxu0 0
    %1054 = vmatprep.subr.bf16.mxu0 0
    %1055 = vmatpush1.bf16.xpose.msra.mxu0 0
    %1056 = vmatprep.subr.bf16.mxu0 0
    %1057 = vmatpush1.bf16.xpose.msra.mxu0 0
    %1058 = vmatprep.subr.bf16.mxu0 0
    %1059 = vmatpush1.bf16.xpose.msra.mxu0 0
    %1060 = vmatprep.subr.bf16.mxu0 0
    %1061 = vmatpush1.bf16.xpose.msra.mxu0 0
    %1062 = vmatprep.subr.bf16.mxu0 0
    %1063 = vmatpush1.bf16.xpose.msra.mxu0 0
    %1064 = vmatprep.subr.bf16.mxu0 0
    %1065 = vmatpush1.bf16.xpose.msra.mxu0 0
    %1066 = vmatprep.subr.bf16.mxu0 0
    %1067 = vmatpush1.bf16.xpose.msra.mxu0 0
    %1068 = vmatprep.subr.bf16.mxu0 0
    %1069 = vmatpush1.bf16.xpose.msra.mxu0 0
    %1070 = vmatprep.mubr.bf16.mxu0 0
    %1071 = vmatmul.mubr.bf16.gmra.mrb[0].mxu0 %v1033
    %v1072 = vpop.f32.mrb[0].mxu0
    %v1073 = vadd.f32 %v53, %v1072
    %v1074 = vpop.f32.mrb[0].mxu0
    %v1075 = vpop.f32.mrb[0].mxu0
    %v1076 = vpop.f32.mrb[0].mxu0
    %1077 = vdwg.mxu0
    %1078 = vrot.lane.b32.xlu0 %v203, 80
    %v1079 = vpop.permute.xlu0 %1078
    %1080 = vrot.lane.b32.xlu0 %v203, 16
    %v1081 = vpop.permute.xlu0 %1080
    %v1083 = vsel %vm209, %v1079, 0
    %v1086 = vsel %vm209, %v1081, 0
    %1088 = vmatprep.subr.bf16.mxu0 0
    %1089 = vmatpush1.bf16.xpose.msra.mxu0 %v1086
    %1090 = vmatprep.subr.bf16.mxu0 0
    %1091 = vmatpush1.bf16.xpose.msra.mxu0 0
    %1092 = vmatprep.subr.bf16.mxu0 0
    %1093 = vmatpush1.bf16.xpose.msra.mxu0 0
    %1094 = vmatprep.subr.bf16.mxu0 0
    %1095 = vmatpush1.bf16.xpose.msra.mxu0 0
    %1096 = vmatprep.subr.bf16.mxu0 0
    %1097 = vmatpush1.bf16.xpose.msra.mxu0 0
    %1098 = vmatprep.subr.bf16.mxu0 0
    %1099 = vmatpush1.bf16.xpose.msra.mxu0 0
    %1100 = vmatprep.subr.bf16.mxu0 0
    %1101 = vmatpush1.bf16.xpose.msra.mxu0 0
    %1102 = vmatprep.subr.bf16.mxu0 0
    %1103 = vmatpush1.bf16.xpose.msra.mxu0 0
    %1104 = vmatprep.subr.bf16.mxu0 0
    %1105 = vmatpush1.bf16.xpose.msra.mxu0 0
    %1106 = vmatprep.subr.bf16.mxu0 0
    %1107 = vmatpush1.bf16.xpose.msra.mxu0 0
    %1108 = vmatprep.subr.bf16.mxu0 0
    %1109 = vmatpush1.bf16.xpose.msra.mxu0 0
    %1110 = vmatprep.subr.bf16.mxu0 0
    %1111 = vmatpush1.bf16.xpose.msra.mxu0 0
    %1112 = vmatprep.subr.bf16.mxu0 0
    %1113 = vmatpush1.bf16.xpose.msra.mxu0 0
    %1114 = vmatprep.subr.bf16.mxu0 0
    %1115 = vmatpush1.bf16.xpose.msra.mxu0 0
    %1116 = vmatprep.subr.bf16.mxu0 0
    %1117 = vmatpush1.bf16.xpose.msra.mxu0 0
    %1118 = vmatprep.subr.bf16.mxu0 0
    %1119 = vmatpush1.bf16.xpose.msra.mxu0 0
    %1120 = vmatprep.mubr.bf16.mxu0 0
    %1121 = vmatmul.mubr.bf16.gmra.mrb[0].mxu0 %v1083
    %v1122 = vpop.f32.mrb[0].mxu0
    %v1123 = vadd.f32 %v53, %v1122
    %v1124 = vpop.f32.mrb[0].mxu0
    %v1125 = vpop.f32.mrb[0].mxu0
    %v1126 = vpop.f32.mrb[0].mxu0
    %1127 = vdwg.mxu0
    %v1128 = vsel %vm305, %v1073, -inf
    %1129 = vmax.xlane.f32.xlu0 %v1128
    %v1130 = vpop.xlane.xlu0 %1129
    %v1131 = vsel %vm305, %v1123, -inf
    %1132 = vmax.xlane.f32.xlu0 %v1131
    %v1133 = vpop.xlane.xlu0 %1132
    %v1134 = vsub.f32 %v1073, %v1130
    %v1135 = vsub.f32 %v1123, %v1133
    %v1136 = vmul.f32 %v1134, 1.442695
    %v1137 = vpow.pop %v1136
    %v1138 = vmul.f32 %v1135, 1.442695
    %v1139 = vpow.pop %v1138
    %v1140 = vsel %vm305, %v1137, 0.0
    %1141 = vadd.xlane.f32.xlu0 %v1140
    %v1142 = vpop.xlane.xlu0 %1141
    %v1143 = vsel %vm305, %v1139, 0.0
    %1144 = vadd.xlane.f32.xlu0 %v1143
    %v1145 = vpop.xlane.xlu0 %1144
    %v1146 = vrcp.pop %v1142
    %v1147 = vrcp.pop %v1145
    %v1148 = vmul.f32 %v1137, %v1146
    %v1149 = vmul.f32 %v1139, %v1147
    %v1150 = vpack.c.bf16 %v1148, %v1148
    %v1151 = vpack.c.bf16 %v1149, %v1149
    %1152 = vrot.lane.b32.xlu0 %v204, 80
    %v1153 = vpop.permute.xlu0 %1152
    %v1155 = vsel %vm305, %v1150, 0
    %v1158 = vsel %vm333, %v1153, 0
    %1160 = vmatprep.subr.bf16.mxu0 0
    %1161 = vmatpush1.bf16.msra.mxu0 %v1158
    %1162 = vmatprep.subr.bf16.mxu0 0
    %1163 = vmatpush1.bf16.msra.mxu0 0
    %1164 = vmatprep.subr.bf16.mxu0 0
    %1165 = vmatpush1.bf16.msra.mxu0 0
    %1166 = vmatprep.subr.bf16.mxu0 0
    %1167 = vmatpush1.bf16.msra.mxu0 0
    %1168 = vmatprep.subr.bf16.mxu0 0
    %1169 = vmatpush1.bf16.msra.mxu0 0
    %1170 = vmatprep.subr.bf16.mxu0 0
    %1171 = vmatpush1.bf16.msra.mxu0 0
    %1172 = vmatprep.subr.bf16.mxu0 0
    %1173 = vmatpush1.bf16.msra.mxu0 0
    %1174 = vmatprep.subr.bf16.mxu0 0
    %1175 = vmatpush1.bf16.msra.mxu0 0
    %1176 = vmatprep.subr.bf16.mxu0 0
    %1177 = vmatpush1.bf16.msra.mxu0 0
    %1178 = vmatprep.subr.bf16.mxu0 0
    %1179 = vmatpush1.bf16.msra.mxu0 0
    %1180 = vmatprep.subr.bf16.mxu0 0
    %1181 = vmatpush1.bf16.msra.mxu0 0
    %1182 = vmatprep.subr.bf16.mxu0 0
    %1183 = vmatpush1.bf16.msra.mxu0 0
    %1184 = vmatprep.subr.bf16.mxu0 0
    %1185 = vmatpush1.bf16.msra.mxu0 0
    %1186 = vmatprep.subr.bf16.mxu0 0
    %1187 = vmatpush1.bf16.msra.mxu0 0
    %1188 = vmatprep.subr.bf16.mxu0 0
    %1189 = vmatpush1.bf16.msra.mxu0 0
    %1190 = vmatprep.subr.bf16.mxu0 0
    %1191 = vmatpush1.bf16.msra.mxu0 0
    %1192 = vmatprep.mubr.bf16.mxu0 0
    %1193 = vmatmul.mubr.bf16.gmra.mrb[0].mxu0 %v1155
    %v1194 = vpop.f32.mrb[0].mxu0
    %v1195 = vadd.f32 0.0, %v1194
    %v1196 = vpop.f32.mrb[0].mxu0
    %v1197 = vpop.f32.mrb[0].mxu0
    %v1198 = vpop.f32.mrb[0].mxu0
    %1199 = vdwg.mxu0
    %1200 = vrot.lane.b32.xlu0 %v205, 80
    %v1201 = vpop.permute.xlu0 %1200
    %v1203 = vsel %vm305, %v1151, 0
    %v1206 = vsel %vm333, %v1201, 0
    %1208 = vmatprep.subr.bf16.mxu0 0
    %1209 = vmatpush1.bf16.msra.mxu0 %v1206
    %1210 = vmatprep.subr.bf16.mxu0 0
    %1211 = vmatpush1.bf16.msra.mxu0 0
    %1212 = vmatprep.subr.bf16.mxu0 0
    %1213 = vmatpush1.bf16.msra.mxu0 0
    %1214 = vmatprep.subr.bf16.mxu0 0
    %1215 = vmatpush1.bf16.msra.mxu0 0
    %1216 = vmatprep.subr.bf16.mxu0 0
    %1217 = vmatpush1.bf16.msra.mxu0 0
    %1218 = vmatprep.subr.bf16.mxu0 0
    %1219 = vmatpush1.bf16.msra.mxu0 0
    %1220 = vmatprep.subr.bf16.mxu0 0
    %1221 = vmatpush1.bf16.msra.mxu0 0
    %1222 = vmatprep.subr.bf16.mxu0 0
    %1223 = vmatpush1.bf16.msra.mxu0 0
    %1224 = vmatprep.subr.bf16.mxu0 0
    %1225 = vmatpush1.bf16.msra.mxu0 0
    %1226 = vmatprep.subr.bf16.mxu0 0
    %1227 = vmatpush1.bf16.msra.mxu0 0
    %1228 = vmatprep.subr.bf16.mxu0 0
    %1229 = vmatpush1.bf16.msra.mxu0 0
    %1230 = vmatprep.subr.bf16.mxu0 0
    %1231 = vmatpush1.bf16.msra.mxu0 0
    %1232 = vmatprep.subr.bf16.mxu0 0
    %1233 = vmatpush1.bf16.msra.mxu0 0
    %1234 = vmatprep.subr.bf16.mxu0 0
    %1235 = vmatpush1.bf16.msra.mxu0 0
    %1236 = vmatprep.subr.bf16.mxu0 0
    %1237 = vmatpush1.bf16.msra.mxu0 0
    %1238 = vmatprep.subr.bf16.mxu0 0
    %1239 = vmatpush1.bf16.msra.mxu0 0
    %1240 = vmatprep.mubr.bf16.mxu0 0
    %1241 = vmatmul.mubr.bf16.gmra.mrb[0].mxu0 %v1203
    %v1242 = vpop.f32.mrb[0].mxu0
    %v1243 = vadd.f32 0.0, %v1242
    %v1244 = vpop.f32.mrb[0].mxu0
    %v1245 = vpop.f32.mrb[0].mxu0
    %v1246 = vpop.f32.mrb[0].mxu0
    %1247 = vdwg.mxu0
    %s1248 = scalar_lea.vmem %s5, 24
    %v1249 = vld [vmem:[%s1248] sm:$0xf]
    %v1250 = vld [vmem:[%s1248 + $0x4] sm:$0xf]
    %v1251 = vpack.c.bf16 %v1243, %v1195
    %v1254 = vunpack.c.l.b16 %v1249
    %v1255 = vunpack.c.l.b16 %v1250
    %v1256 = vpack.c.b16 %v1255, %v1254
    %v1259 = vsel %vm209, %v1251, 0
    %1261 = vmatprep.subr.bf16.mxu0 0
    %1262 = vmatpush1.bf16.msra.mxu0 %v1256
    %1263 = vmatprep.subr.bf16.mxu0 0
    %1264 = vmatpush1.bf16.msra.mxu0 0
    %1265 = vmatprep.subr.bf16.mxu0 0
    %1266 = vmatpush1.bf16.msra.mxu0 0
    %1267 = vmatprep.subr.bf16.mxu0 0
    %1268 = vmatpush1.bf16.msra.mxu0 0
    %1269 = vmatprep.subr.bf16.mxu0 0
    %1270 = vmatpush1.bf16.msra.mxu0 0
    %1271 = vmatprep.subr.bf16.mxu0 0
    %1272 = vmatpush1.bf16.msra.mxu0 0
    %1273 = vmatprep.subr.bf16.mxu0 0
    %1274 = vmatpush1.bf16.msra.mxu0 0
    %1275 = vmatprep.subr.bf16.mxu0 0
    %1276 = vmatpush1.bf16.msra.mxu0 0
    %1277 = vmatprep.subr.bf16.mxu0 0
    %1278 = vmatpush1.bf16.msra.mxu0 0
    %1279 = vmatprep.subr.bf16.mxu0 0
    %1280 = vmatpush1.bf16.msra.mxu0 0
    %1281 = vmatprep.subr.bf16.mxu0 0
    %1282 = vmatpush1.bf16.msra.mxu0 0
    %1283 = vmatprep.subr.bf16.mxu0 0
    %1284 = vmatpush1.bf16.msra.mxu0 0
    %1285 = vmatprep.subr.bf16.mxu0 0
    %1286 = vmatpush1.bf16.msra.mxu0 0
    %1287 = vmatprep.subr.bf16.mxu0 0
    %1288 = vmatpush1.bf16.msra.mxu0 0
    %1289 = vmatprep.subr.bf16.mxu0 0
    %1290 = vmatpush1.bf16.msra.mxu0 0
    %1291 = vmatprep.subr.bf16.mxu0 0
    %1292 = vmatpush1.bf16.msra.mxu0 0
    %1293 = vmatprep.mubr.bf16.mxu0 0
    %1294 = vmatmul.mubr.bf16.gmra.mrb[0].mxu0 %v1259
    %v1295 = vpop.f32.mrb[0].mxu0
    %v1296 = vadd.f32 0.0, %v1295
    %v1297 = vpop.f32.mrb[0].mxu0
    %v1298 = vpop.f32.mrb[0].mxu0
    %v1299 = vadd.f32 0.0, %v1298
    %v1300 = vpop.f32.mrb[0].mxu0
    %1301 = vdwg.mxu0
    %v1302 = vadd.f32 %v1026, %v1296
    %v1303 = vadd.f32 %v1027, %v1299
    %v1304 = vadd.f32 %v46, %v1302
    %v1305 = vadd.f32 %v47, %v1303
    %v1306 = vlaneseq
    %v1307 = vshrl.u32 %v1306, 7
    %v1308 = vsub.s32 4, %v1307
    %v1309 = vrot.slane %v54, %v1308
    %v1310 = vadd.f32 %v1304, %v1309
    %v1311 = vadd.f32 %v1305, %v1309
    %v1312 = vsel %vm55, %v1310, 0.0
    %1313 = vadd.xlane.f32.xlu0 %v1312
    %v1314 = vpop.xlane.xlu0 %1313
    %v1315 = vsel %vm55, %v1311, 0.0
    %1316 = vadd.xlane.f32.xlu0 %v1315
    %v1317 = vpop.xlane.xlu0 %1316
    %v1318 = vmul.f32 %v1314, %v62
    %v1319 = vmul.f32 %v1317, %v62
    %v1320 = vsub.f32 %v1310, %v1318
    %v1321 = vsub.f32 %v1311, %v1319
    %v1322 = vmul.f32 %v1320, %v1320
    %v1323 = vmul.f32 %v1321, %v1321
    %v1324 = vsel %vm55, %v1322, 0.0
    %1325 = vadd.xlane.f32.xlu0 %v1324
    %v1326 = vpop.xlane.xlu0 %1325
    %v1327 = vsel %vm55, %v1323, 0.0
    %1328 = vadd.xlane.f32.xlu0 %v1327
    %v1329 = vpop.xlane.xlu0 %1328
    %v1330 = vmul.f32 %v1326, %v62
    %v1331 = vmul.f32 %v1329, %v62
    %v1332 = vadd.f32 %v1330, 1e-05
    %v1333 = vadd.f32 %v1331, 1e-05
    %v1334 = vrsqrt.pop %v1332
    %v1335 = vrsqrt.pop %v1333
    %v1336 = vmul.f32 %v1320, %v1334
    %v1337 = vmul.f32 %v1321, %v1335
    %v1338 = vlaneseq
    %v1339 = vshrl.u32 %v1338, 7
    %v1340 = vsub.s32 2, %v1339
    %v1341 = vrot.slane %v54, %v1340
    %v1342 = vmul.f32 %v1336, %v1341
    %v1343 = vmul.f32 %v1337, %v1341
    %v1344 = vlaneseq
    %v1345 = vshrl.u32 %v1344, 7
    %v1346 = vsub.s32 3, %v1345
    %v1347 = vrot.slane %v54, %v1346
    %v1348 = vadd.f32 %v1342, %v1347
    %v1349 = vadd.f32 %v1343, %v1347
    %v1350 = vld [vmem:[%s6] sm:$0xff]
    %v1351 = vld [vmem:[%s6 + $0x8] sm:$0xff]
    %v1352 = vld [vmem:[%s6 + $0x10] sm:$0xff]
    %v1353 = vld [vmem:[%s6 + $0x18] sm:$0xff]
    %v1354 = vld [vmem:[%s6 + $0x20] sm:$0xff]
    %v1355 = vld [vmem:[%s6 + $0x28] sm:$0xff]
    %v1356 = vld [vmem:[%s6 + $0x30] sm:$0xff]
    %v1357 = vld [vmem:[%s6 + $0x38] sm:$0xff]
    %v1358 = vpack.c.bf16 %v1349, %v1348
    %v1359 = vld [vmem:[%s7] sm:$0x3]
    %v1361 = vlaneseq
    %v1362 = vshrl.u32 %v1361, 7
    %v1363 = vsub.s32 0, %v1362
    %v1364 = vrot.slane %v1359, %v1363
    %v1365 = vlaneseq
    %v1366 = vshrl.u32 %v1365, 7
    %v1367 = vsub.s32 1, %v1366
    %v1368 = vrot.slane %v1359, %v1367
    %v1379 = vunpack.c.l.b16 %v1350
    %v1380 = vunpack.c.h.b16 %v1350
    %v1381 = vunpack.c.l.b16 %v1351
    %v1382 = vunpack.c.h.b16 %v1351
    %v1383 = vunpack.c.l.b16 %v1352
    %v1384 = vunpack.c.h.b16 %v1352
    %v1385 = vunpack.c.l.b16 %v1353
    %v1386 = vunpack.c.h.b16 %v1353
    %v1387 = vunpack.c.l.b16 %v1354
    %v1388 = vunpack.c.h.b16 %v1354
    %v1389 = vunpack.c.l.b16 %v1355
    %v1390 = vunpack.c.h.b16 %v1355
    %v1391 = vunpack.c.l.b16 %v1356
    %v1392 = vunpack.c.h.b16 %v1356
    %v1393 = vunpack.c.l.b16 %v1357
    %v1394 = vunpack.c.h.b16 %v1357
    %v1395 = vpack.c.b16 %v1381, %v1379
    %v1396 = vpack.c.b16 %v1382, %v1380
    %v1397 = vpack.c.b16 %v1385, %v1383
    %v1398 = vpack.c.b16 %v1386, %v1384
    %v1399 = vpack.c.b16 %v1389, %v1387
    %v1400 = vpack.c.b16 %v1390, %v1388
    %v1401 = vpack.c.b16 %v1393, %v1391
    %v1402 = vpack.c.b16 %v1394, %v1392
    %v1412 = vsel %vm55, %v1358, 0
    %1414 = vmatprep.subr.bf16.mxu0 %v1396
    %1415 = vmatpush1.bf16.msra.mxu0 %v1395
    %1416 = vmatprep.subr.bf16.mxu0 %v1398
    %1417 = vmatpush1.bf16.msra.mxu0 %v1397
    %1418 = vmatprep.subr.bf16.mxu0 %v1400
    %1419 = vmatpush1.bf16.msra.mxu0 %v1399
    %1420 = vmatprep.subr.bf16.mxu0 %v1402
    %1421 = vmatpush1.bf16.msra.mxu0 %v1401
    %1422 = vmatprep.subr.bf16.mxu0 0
    %1423 = vmatpush1.bf16.msra.mxu0 0
    %1424 = vmatprep.subr.bf16.mxu0 0
    %1425 = vmatpush1.bf16.msra.mxu0 0
    %1426 = vmatprep.subr.bf16.mxu0 0
    %1427 = vmatpush1.bf16.msra.mxu0 0
    %1428 = vmatprep.subr.bf16.mxu0 0
    %1429 = vmatpush1.bf16.msra.mxu0 0
    %1430 = vmatprep.subr.bf16.mxu0 0
    %1431 = vmatpush1.bf16.msra.mxu0 0
    %1432 = vmatprep.subr.bf16.mxu0 0
    %1433 = vmatpush1.bf16.msra.mxu0 0
    %1434 = vmatprep.subr.bf16.mxu0 0
    %1435 = vmatpush1.bf16.msra.mxu0 0
    %1436 = vmatprep.subr.bf16.mxu0 0
    %1437 = vmatpush1.bf16.msra.mxu0 0
    %1438 = vmatprep.subr.bf16.mxu0 0
    %1439 = vmatpush1.bf16.msra.mxu0 0
    %1440 = vmatprep.subr.bf16.mxu0 0
    %1441 = vmatpush1.bf16.msra.mxu0 0
    %1442 = vmatprep.subr.bf16.mxu0 0
    %1443 = vmatpush1.bf16.msra.mxu0 0
    %1444 = vmatprep.subr.bf16.mxu0 0
    %1445 = vmatpush1.bf16.msra.mxu0 0
    %1446 = vmatprep.mubr.bf16.mxu0 0
    %1447 = vmatmul.mubr.bf16.gmra.mrb[0].mxu0 %v1412
    %v1448 = vpop.f32.mrb[0].mxu0
    %v1449 = vadd.f32 %v1364, %v1448
    %v1450 = vpop.f32.mrb[0].mxu0
    %v1451 = vadd.f32 %v1368, %v1450
    %v1452 = vpop.f32.mrb[0].mxu0
    %v1453 = vadd.f32 %v1364, %v1452
    %v1454 = vpop.f32.mrb[0].mxu0
    %v1455 = vadd.f32 %v1368, %v1454
    %1456 = vdwg.mxu0
    %v1457 = vmul.f32 %v1449, -1.702
    %v1458 = vmul.f32 %v1451, -1.702
    %v1459 = vmul.f32 %v1453, -1.702
    %v1460 = vmul.f32 %v1455, -1.702
    %v1461 = vmul.f32 %v1457, 1.442695
    %v1462 = vpow.pop %v1461
    %v1463 = vmul.f32 %v1458, 1.442695
    %v1464 = vpow.pop %v1463
    %v1465 = vmul.f32 %v1459, 1.442695
    %v1466 = vpow.pop %v1465
    %v1467 = vmul.f32 %v1460, 1.442695
    %v1468 = vpow.pop %v1467
    %v1469 = vadd.f32 %v1462, 1.0
    %v1470 = vadd.f32 %v1464, 1.0
    %v1471 = vadd.f32 %v1466, 1.0
    %v1472 = vadd.f32 %v1468, 1.0
    %v1473 = vrcp.pop %v1469
    %v1474 = vrcp.pop %v1470
    %v1475 = vrcp.pop %v1471
    %v1476 = vrcp.pop %v1472
    %v1477 = vmul.f32 %v1449, %v1473
    %v1478 = vmul.f32 %v1451, %v1474
    %v1479 = vmul.f32 %v1453, %v1475
    %v1480 = vmul.f32 %v1455, %v1476
    %v1481 = vld [vmem:[%s8] sm:$0xf]
    %v1482 = vld [vmem:[%s8 + $0x4] sm:$0xf]
    %v1483 = vld [vmem:[%s8 + $0x8] sm:$0xf]
    %v1484 = vld [vmem:[%s8 + $0xc] sm:$0xf]
    %v1485 = vld [vmem:[%s8 + $0x10] sm:$0xf]
    %v1486 = vld [vmem:[%s8 + $0x14] sm:$0xf]
    %v1487 = vld [vmem:[%s8 + $0x18] sm:$0xf]
    %v1488 = vld [vmem:[%s8 + $0x1c] sm:$0xf]
    %v1489 = vld [vmem:[%s8 + $0x20] sm:$0xf]
    %v1490 = vld [vmem:[%s8 + $0x24] sm:$0xf]
    %v1491 = vld [vmem:[%s8 + $0x28] sm:$0xf]
    %v1492 = vld [vmem:[%s8 + $0x2c] sm:$0xf]
    %v1493 = vld [vmem:[%s8 + $0x30] sm:$0xf]
    %v1494 = vld [vmem:[%s8 + $0x34] sm:$0xf]
    %v1495 = vld [vmem:[%s8 + $0x38] sm:$0xf]
    %v1496 = vld [vmem:[%s8 + $0x3c] sm:$0xf]
    %v1497 = vld [vmem:[%s8 + $0x40] sm:$0xf]
    %v1498 = vld [vmem:[%s8 + $0x44] sm:$0xf]
    %v1499 = vld [vmem:[%s8 + $0x48] sm:$0xf]
    %v1500 = vld [vmem:[%s8 + $0x4c] sm:$0xf]
    %v1501 = vld [vmem:[%s8 + $0x50] sm:$0xf]
    %v1502 = vld [vmem:[%s8 + $0x54] sm:$0xf]
    %v1503 = vld [vmem:[%s8 + $0x58] sm:$0xf]
    %v1504 = vld [vmem:[%s8 + $0x5c] sm:$0xf]
    %v1505 = vld [vmem:[%s8 + $0x60] sm:$0xf]
    %v1506 = vld [vmem:[%s8 + $0x64] sm:$0xf]
    %v1507 = vld [vmem:[%s8 + $0x68] sm:$0xf]
    %v1508 = vld [vmem:[%s8 + $0x6c] sm:$0xf]
    %v1509 = vld [vmem:[%s8 + $0x70] sm:$0xf]
    %v1510 = vld [vmem:[%s8 + $0x74] sm:$0xf]
    %v1511 = vld [vmem:[%s8 + $0x78] sm:$0xf]
    %v1512 = vld [vmem:[%s8 + $0x7c] sm:$0xf]
    %v1513 = vpack.c.bf16 %v1479, %v1477
    %v1514 = vpack.c.bf16 %v1480, %v1478
    %v1547 = vunpack.c.l.b16 %v1481
    %v1548 = vunpack.c.l.b16 %v1482
    %v1549 = vunpack.c.l.b16 %v1483
    %v1550 = vunpack.c.l.b16 %v1484
    %v1551 = vunpack.c.l.b16 %v1485
    %v1552 = vunpack.c.l.b16 %v1486
    %v1553 = vunpack.c.l.b16 %v1487
    %v1554 = vunpack.c.l.b16 %v1488
    %v1555 = vunpack.c.l.b16 %v1489
    %v1556 = vunpack.c.l.b16 %v1490
    %v1557 = vunpack.c.l.b16 %v1491
    %v1558 = vunpack.c.l.b16 %v1492
    %v1559 = vunpack.c.l.b16 %v1493
    %v1560 = vunpack.c.l.b16 %v1494
    %v1561 = vunpack.c.l.b16 %v1495
    %v1562 = vunpack.c.l.b16 %v1496
    %v1563 = vunpack.c.l.b16 %v1497
    %v1564 = vunpack.c.l.b16 %v1498
    %v1565 = vunpack.c.l.b16 %v1499
    %v1566 = vunpack.c.l.b16 %v1500
    %v1567 = vunpack.c.l.b16 %v1501
    %v1568 = vunpack.c.l.b16 %v1502
    %v1569 = vunpack.c.l.b16 %v1503
    %v1570 = vunpack.c.l.b16 %v1504
    %v1571 = vunpack.c.l.b16 %v1505
    %v1572 = vunpack.c.l.b16 %v1506
    %v1573 = vunpack.c.l.b16 %v1507
    %v1574 = vunpack.c.l.b16 %v1508
    %v1575 = vunpack.c.l.b16 %v1509
    %v1576 = vunpack.c.l.b16 %v1510
    %v1577 = vunpack.c.l.b16 %v1511
    %v1578 = vunpack.c.l.b16 %v1512
    %v1579 = vpack.c.b16 %v1548, %v1547
    %v1580 = vpack.c.b16 %v1550, %v1549
    %v1581 = vpack.c.b16 %v1552, %v1551
    %v1582 = vpack.c.b16 %v1554, %v1553
    %v1583 = vpack.c.b16 %v1556, %v1555
    %v1584 = vpack.c.b16 %v1558, %v1557
    %v1585 = vpack.c.b16 %v1560, %v1559
    %v1586 = vpack.c.b16 %v1562, %v1561
    %v1587 = vpack.c.b16 %v1564, %v1563
    %v1588 = vpack.c.b16 %v1566, %v1565
    %v1589 = vpack.c.b16 %v1568, %v1567
    %v1590 = vpack.c.b16 %v1570, %v1569
    %v1591 = vpack.c.b16 %v1572, %v1571
    %v1592 = vpack.c.b16 %v1574, %v1573
    %v1593 = vpack.c.b16 %v1576, %v1575
    %v1594 = vpack.c.b16 %v1578, %v1577
    %1611 = vmatprep.subr.bf16.mxu0 0
    %1612 = vmatpush1.bf16.msra.mxu0 %v1579
    %1613 = vmatprep.subr.bf16.mxu0 0
    %1614 = vmatpush1.bf16.msra.mxu0 %v1580
    %1615 = vmatprep.subr.bf16.mxu0 0
    %1616 = vmatpush1.bf16.msra.mxu0 %v1581
    %1617 = vmatprep.subr.bf16.mxu0 0
    %1618 = vmatpush1.bf16.msra.mxu0 %v1582
    %1619 = vmatprep.subr.bf16.mxu0 0
    %1620 = vmatpush1.bf16.msra.mxu0 %v1583
    %1621 = vmatprep.subr.bf16.mxu0 0
    %1622 = vmatpush1.bf16.msra.mxu0 %v1584
    %1623 = vmatprep.subr.bf16.mxu0 0
    %1624 = vmatpush1.bf16.msra.mxu0 %v1585
    %1625 = vmatprep.subr.bf16.mxu0 0
    %1626 = vmatpush1.bf16.msra.mxu0 %v1586
    %1627 = vmatprep.subr.bf16.mxu0 0
    %1628 = vmatpush1.bf16.msra.mxu0 %v1587
    %1629 = vmatprep.subr.bf16.mxu0 0
    %1630 = vmatpush1.bf16.msra.mxu0 %v1588
    %1631 = vmatprep.subr.bf16.mxu0 0
    %1632 = vmatpush1.bf16.msra.mxu0 %v1589
    %1633 = vmatprep.subr.bf16.mxu0 0
    %1634 = vmatpush1.bf16.msra.mxu0 %v1590
    %1635 = vmatprep.subr.bf16.mxu0 0
    %1636 = vmatpush1.bf16.msra.mxu0 %v1591
    %1637 = vmatprep.subr.bf16.mxu0 0
    %1638 = vmatpush1.bf16.msra.mxu0 %v1592
    %1639 = vmatprep.subr.bf16.mxu0 0
    %1640 = vmatpush1.bf16.msra.mxu0 %v1593
    %1641 = vmatprep.subr.bf16.mxu0 0
    %1642 = vmatpush1.bf16.msra.mxu0 %v1594
    %1643 = vmatprep.mubr.bf16.mxu0 %v1514
    %1644 = vmatmul.mubr.bf16.gmra.mrb[0].mxu0 %v1513
    %v1645 = vpop.f32.mrb[0].mxu0
    %v1646 = vadd.f32 0.0, %v1645
    %v1647 = vpop.f32.mrb[0].mxu0
    %v1648 = vpop.f32.mrb[0].mxu0
    %v1649 = vadd.f32 0.0, %v1648
    %v1650 = vpop.f32.mrb[0].mxu0
    %1651 = vdwg.mxu0
    %v1652 = vadd.f32 %v1310, %v1646
    %v1653 = vadd.f32 %v1311, %v1649
    %v1654 = vlaneseq
    %v1655 = vshrl.u32 %v1654, 7
    %v1656 = vsub.s32 5, %v1655
    %v1657 = vrot.slane %v54, %v1656
    %v1658 = vadd.f32 %v1652, %v1657
    %v1659 = vadd.f32 %v1653, %v1657
    %s1660 = scalar_lea.vmem %s9, 8
    %v1661 = vld [vmem:[%s1660] sm:$0x3f]
    %v1662 = vsel %vm55, %v1658, 0.0
    %1663 = vadd.xlane.f32.xlu0 %v1662
    %v1664 = vpop.xlane.xlu0 %1663
    %v1665 = vsel %vm55, %v1659, 0.0
    %1666 = vadd.xlane.f32.xlu0 %v1665
    %v1667 = vpop.xlane.xlu0 %1666
    %v1668 = vmul.f32 %v1664, %v62
    %v1669 = vmul.f32 %v1667, %v62
    %v1670 = vsub.f32 %v1658, %v1668
    %v1671 = vsub.f32 %v1659, %v1669
    %v1672 = vmul.f32 %v1670, %v1670
    %v1673 = vmul.f32 %v1671, %v1671
    %v1674 = vsel %vm55, %v1672, 0.0
    %1675 = vadd.xlane.f32.xlu0 %v1674
    %v1676 = vpop.xlane.xlu0 %1675
    %v1677 = vsel %vm55, %v1673, 0.0
    %1678 = vadd.xlane.f32.xlu0 %v1677
    %v1679 = vpop.xlane.xlu0 %1678
    %v1680 = vmul.f32 %v1676, %v62
    %v1681 = vmul.f32 %v1679, %v62
    %v1682 = vadd.f32 %v1680, 1e-05
    %v1683 = vadd.f32 %v1681, 1e-05
    %v1684 = vrsqrt.pop %v1682
    %v1685 = vrsqrt.pop %v1683
    %v1686 = vmul.f32 %v1670, %v1684
    %v1687 = vmul.f32 %v1671, %v1685
    %v1688 = vlaneseq
    %v1689 = vshrl.u32 %v1688, 7
    %v1690 = vsub.s32 0, %v1689
    %v1691 = vrot.slane %v1661, %v1690
    %v1692 = vmul.f32 %v1686, %v1691
    %v1693 = vmul.f32 %v1687, %v1691
    %v1694 = vlaneseq
    %v1695 = vshrl.u32 %v1694, 7
    %v1696 = vsub.s32 1, %v1695
    %v1697 = vrot.slane %v1661, %v1696
    %v1698 = vadd.f32 %v1692, %v1697
    %v1699 = vadd.f32 %v1693, %v1697
    %s1700 = scalar_lea.vmem %s3, 64
    %v1701 = vld [vmem:[%s1700] sm:$0xff]
    %v1702 = vld [vmem:[%s1700 + $0x8] sm:$0xff]
    %v1703 = vld [vmem:[%s1700 + $0x10] sm:$0xff]
    %v1704 = vld [vmem:[%s1700 + $0x18] sm:$0xff]
    %v1705 = vld [vmem:[%s1700 + $0x20] sm:$0xff]
    %v1706 = vld [vmem:[%s1700 + $0x28] sm:$0xff]
    %v1707 = vld [vmem:[%s1700 + $0x30] sm:$0xff]
    %v1708 = vld [vmem:[%s1700 + $0x38] sm:$0xff]
    %v1709 = vpack.c.bf16 %v1699, %v1698
    %s1710 = scalar_lea.vmem %s4, 2
    %v1711 = vld [vmem:[%s1710] sm:$0x3]
    %v1713 = vlaneseq
    %v1714 = vshrl.u32 %v1713, 7
    %v1715 = vsub.s32 0, %v1714
    %v1716 = vrot.slane %v1711, %v1715
    %v1717 = vlaneseq
    %v1718 = vshrl.u32 %v1717, 7
    %v1719 = vsub.s32 1, %v1718
    %v1720 = vrot.slane %v1711, %v1719
    %v1731 = vunpack.c.l.b16 %v1701
    %v1732 = vunpack.c.h.b16 %v1701
    %v1733 = vunpack.c.l.b16 %v1702
    %v1734 = vunpack.c.h.b16 %v1702
    %v1735 = vunpack.c.l.b16 %v1703
    %v1736 = vunpack.c.h.b16 %v1703
    %v1737 = vunpack.c.l.b16 %v1704
    %v1738 = vunpack.c.h.b16 %v1704
    %v1739 = vunpack.c.l.b16 %v1705
    %v1740 = vunpack.c.h.b16 %v1705
    %v1741 = vunpack.c.l.b16 %v1706
    %v1742 = vunpack.c.h.b16 %v1706
    %v1743 = vunpack.c.l.b16 %v1707
    %v1744 = vunpack.c.h.b16 %v1707
    %v1745 = vunpack.c.l.b16 %v1708
    %v1746 = vunpack.c.h.b16 %v1708
    %v1747 = vpack.c.b16 %v1733, %v1731
    %v1748 = vpack.c.b16 %v1734, %v1732
    %v1749 = vpack.c.b16 %v1737, %v1735
    %v1750 = vpack.c.b16 %v1738, %v1736
    %v1751 = vpack.c.b16 %v1741, %v1739
    %v1752 = vpack.c.b16 %v1742, %v1740
    %v1753 = vpack.c.b16 %v1745, %v1743
    %v1754 = vpack.c.b16 %v1746, %v1744
    %v1764 = vsel %vm55, %v1709, 0
    %1766 = vmatprep.subr.bf16.mxu0 %v1748
    %1767 = vmatpush1.bf16.msra.mxu0 %v1747
    %1768 = vmatprep.subr.bf16.mxu0 %v1750
    %1769 = vmatpush1.bf16.msra.mxu0 %v1749
    %1770 = vmatprep.subr.bf16.mxu0 %v1752
    %1771 = vmatpush1.bf16.msra.mxu0 %v1751
    %1772 = vmatprep.subr.bf16.mxu0 %v1754
    %1773 = vmatpush1.bf16.msra.mxu0 %v1753
    %1774 = vmatprep.subr.bf16.mxu0 0
    %1775 = vmatpush1.bf16.msra.mxu0 0
    %1776 = vmatprep.subr.bf16.mxu0 0
    %1777 = vmatpush1.bf16.msra.mxu0 0
    %1778 = vmatprep.subr.bf16.mxu0 0
    %1779 = vmatpush1.bf16.msra.mxu0 0
    %1780 = vmatprep.subr.bf16.mxu0 0
    %1781 = vmatpush1.bf16.msra.mxu0 0
    %1782 = vmatprep.subr.bf16.mxu0 0
    %1783 = vmatpush1.bf16.msra.mxu0 0
    %1784 = vmatprep.subr.bf16.mxu0 0
    %1785 = vmatpush1.bf16.msra.mxu0 0
    %1786 = vmatprep.subr.bf16.mxu0 0
    %1787 = vmatpush1.bf16.msra.mxu0 0
    %1788 = vmatprep.subr.bf16.mxu0 0
    %1789 = vmatpush1.bf16.msra.mxu0 0
    %1790 = vmatprep.subr.bf16.mxu0 0
    %1791 = vmatpush1.bf16.msra.mxu0 0
    %1792 = vmatprep.subr.bf16.mxu0 0
    %1793 = vmatpush1.bf16.msra.mxu0 0
    %1794 = vmatprep.subr.bf16.mxu0 0
    %1795 = vmatpush1.bf16.msra.mxu0 0
    %1796 = vmatprep.subr.bf16.mxu0 0
    %1797 = vmatpush1.bf16.msra.mxu0 0
    %1798 = vmatprep.mubr.bf16.mxu0 0
    %1799 = vmatmul.mubr.bf16.gmra.mrb[0].mxu0 %v1764
    %v1800 = vpop.f32.mrb[0].mxu0
    %v1801 = vadd.f32 %v1716, %v1800
    %v1802 = vpop.f32.mrb[0].mxu0
    %v1803 = vadd.f32 %v1720, %v1802
    %v1804 = vpop.f32.mrb[0].mxu0
    %v1805 = vadd.f32 %v1716, %v1804
    %v1806 = vpop.f32.mrb[0].mxu0
    %v1807 = vadd.f32 %v1720, %v1806
    %1808 = vdwg.mxu0
    %v1809 = vpack.c.bf16 %v1801, %v1801
    %v1810 = vpack.c.bf16 %v1805, %v1805
    %v1811 = vpack.c.bf16 %v1803, %v1803
    %v1812 = vpack.c.bf16 %v1807, %v1807
    %1814 = vrot.lane.b32.xlu0 %v1809, 64
    %v1815 = vpop.permute.xlu0 %1814
    %v1817 = vsel %vm209, %v1809, 0
    %v1820 = vsel %vm209, %v1815, 0
    %1822 = vmatprep.subr.bf16.mxu0 0
    %1823 = vmatpush1.bf16.xpose.msra.mxu0 %v1820
    %1824 = vmatprep.subr.bf16.mxu0 0
    %1825 = vmatpush1.bf16.xpose.msra.mxu0 0
    %1826 = vmatprep.subr.bf16.mxu0 0
    %1827 = vmatpush1.bf16.xpose.msra.mxu0 0
    %1828 = vmatprep.subr.bf16.mxu0 0
    %1829 = vmatpush1.bf16.xpose.msra.mxu0 0
    %1830 = vmatprep.subr.bf16.mxu0 0
    %1831 = vmatpush1.bf16.xpose.msra.mxu0 0
    %1832 = vmatprep.subr.bf16.mxu0 0
    %1833 = vmatpush1.bf16.xpose.msra.mxu0 0
    %1834 = vmatprep.subr.bf16.mxu0 0
    %1835 = vmatpush1.bf16.xpose.msra.mxu0 0
    %1836 = vmatprep.subr.bf16.mxu0 0
    %1837 = vmatpush1.bf16.xpose.msra.mxu0 0
    %1838 = vmatprep.subr.bf16.mxu0 0
    %1839 = vmatpush1.bf16.xpose.msra.mxu0 0
    %1840 = vmatprep.subr.bf16.mxu0 0
    %1841 = vmatpush1.bf16.xpose.msra.mxu0 0
    %1842 = vmatprep.subr.bf16.mxu0 0
    %1843 = vmatpush1.bf16.xpose.msra.mxu0 0
    %1844 = vmatprep.subr.bf16.mxu0 0
    %1845 = vmatpush1.bf16.xpose.msra.mxu0 0
    %1846 = vmatprep.subr.bf16.mxu0 0
    %1847 = vmatpush1.bf16.xpose.msra.mxu0 0
    %1848 = vmatprep.subr.bf16.mxu0 0
    %1849 = vmatpush1.bf16.xpose.msra.mxu0 0
    %1850 = vmatprep.subr.bf16.mxu0 0
    %1851 = vmatpush1.bf16.xpose.msra.mxu0 0
    %1852 = vmatprep.subr.bf16.mxu0 0
    %1853 = vmatpush1.bf16.xpose.msra.mxu0 0
    %1854 = vmatprep.mubr.bf16.mxu0 0
    %1855 = vmatmul.mubr.bf16.gmra.mrb[0].mxu0 %v1817
    %v1856 = vpop.f32.mrb[0].mxu0
    %v1857 = vadd.f32 %v53, %v1856
    %v1858 = vpop.f32.mrb[0].mxu0
    %v1859 = vpop.f32.mrb[0].mxu0
    %v1860 = vpop.f32.mrb[0].mxu0
    %1861 = vdwg.mxu0
    %1863 = vrot.lane.b32.xlu0 %v1810, 64
    %v1864 = vpop.permute.xlu0 %1863
    %v1866 = vsel %vm209, %v1810, 0
    %v1869 = vsel %vm209, %v1864, 0
    %1871 = vmatprep.subr.bf16.mxu0 0
    %1872 = vmatpush1.bf16.xpose.msra.mxu0 %v1869
    %1873 = vmatprep.subr.bf16.mxu0 0
    %1874 = vmatpush1.bf16.xpose.msra.mxu0 0
    %1875 = vmatprep.subr.bf16.mxu0 0
    %1876 = vmatpush1.bf16.xpose.msra.mxu0 0
    %1877 = vmatprep.subr.bf16.mxu0 0
    %1878 = vmatpush1.bf16.xpose.msra.mxu0 0
    %1879 = vmatprep.subr.bf16.mxu0 0
    %1880 = vmatpush1.bf16.xpose.msra.mxu0 0
    %1881 = vmatprep.subr.bf16.mxu0 0
    %1882 = vmatpush1.bf16.xpose.msra.mxu0 0
    %1883 = vmatprep.subr.bf16.mxu0 0
    %1884 = vmatpush1.bf16.xpose.msra.mxu0 0
    %1885 = vmatprep.subr.bf16.mxu0 0
    %1886 = vmatpush1.bf16.xpose.msra.mxu0 0
    %1887 = vmatprep.subr.bf16.mxu0 0
    %1888 = vmatpush1.bf16.xpose.msra.mxu0 0
    %1889 = vmatprep.subr.bf16.mxu0 0
    %1890 = vmatpush1.bf16.xpose.msra.mxu0 0
    %1891 = vmatprep.subr.bf16.mxu0 0
    %1892 = vmatpush1.bf16.xpose.msra.mxu0 0
    %1893 = vmatprep.subr.bf16.mxu0 0
    %1894 = vmatpush1.bf16.xpose.msra.mxu0 0
    %1895 = vmatprep.subr.bf16.mxu0 0
    %1896 = vmatpush1.bf16.xpose.msra.mxu0 0
    %1897 = vmatprep.subr.bf16.mxu0 0
    %1898 = vmatpush1.bf16.xpose.msra.mxu0 0
    %1899 = vmatprep.subr.bf16.mxu0 0
    %1900 = vmatpush1.bf16.xpose.msra.mxu0 0
    %1901 = vmatprep.subr.bf16.mxu0 0
    %1902 = vmatpush1.bf16.xpose.msra.mxu0 0
    %1903 = vmatprep.mubr.bf16.mxu0 0
    %1904 = vmatmul.mubr.bf16.gmra.mrb[0].mxu0 %v1866
    %v1905 = vpop.f32.mrb[0].mxu0
    %v1906 = vadd.f32 %v53, %v1905
    %v1907 = vpop.f32.mrb[0].mxu0
    %v1908 = vpop.f32.mrb[0].mxu0
    %v1909 = vpop.f32.mrb[0].mxu0
    %1910 = vdwg.mxu0
    %v1911 = vsel %vm305, %v1857, -inf
    %1912 = vmax.xlane.f32.xlu0 %v1911
    %v1913 = vpop.xlane.xlu0 %1912
    %v1914 = vsel %vm305, %v1906, -inf
    %1915 = vmax.xlane.f32.xlu0 %v1914
    %v1916 = vpop.xlane.xlu0 %1915
    %v1917 = vsub.f32 %v1857, %v1913
    %v1918 = vsub.f32 %v1906, %v1916
    %v1919 = vmul.f32 %v1917, 1.442695
    %v1920 = vpow.pop %v1919
    %v1921 = vmul.f32 %v1918, 1.442695
    %v1922 = vpow.pop %v1921
    %v1923 = vsel %vm305, %v1920, 0.0
    %1924 = vadd.xlane.f32.xlu0 %v1923
    %v1925 = vpop.xlane.xlu0 %1924
    %v1926 = vsel %vm305, %v1922, 0.0
    %1927 = vadd.xlane.f32.xlu0 %v1926
    %v1928 = vpop.xlane.xlu0 %1927
    %v1929 = vrcp.pop %v1925
    %v1930 = vrcp.pop %v1928
    %v1931 = vmul.f32 %v1920, %v1929
    %v1932 = vmul.f32 %v1922, %v1930
    %v1933 = vpack.c.bf16 %v1931, %v1931
    %v1934 = vpack.c.bf16 %v1932, %v1932
    %v1936 = vsel %vm305, %v1933, 0
    %v1939 = vsel %vm333, %v1811, 0
    %1941 = vmatprep.subr.bf16.mxu0 0
    %1942 = vmatpush1.bf16.msra.mxu0 %v1939
    %1943 = vmatprep.subr.bf16.mxu0 0
    %1944 = vmatpush1.bf16.msra.mxu0 0
    %1945 = vmatprep.subr.bf16.mxu0 0
    %1946 = vmatpush1.bf16.msra.mxu0 0
    %1947 = vmatprep.subr.bf16.mxu0 0
    %1948 = vmatpush1.bf16.msra.mxu0 0
    %1949 = vmatprep.subr.bf16.mxu0 0
    %1950 = vmatpush1.bf16.msra.mxu0 0
    %1951 = vmatprep.subr.bf16.mxu0 0
    %1952 = vmatpush1.bf16.msra.mxu0 0
    %1953 = vmatprep.subr.bf16.mxu0 0
    %1954 = vmatpush1.bf16.msra.mxu0 0
    %1955 = vmatprep.subr.bf16.mxu0 0
    %1956 = vmatpush1.bf16.msra.mxu0 0
    %1957 = vmatprep.subr.bf16.mxu0 0
    %1958 = vmatpush1.bf16.msra.mxu0 0
    %1959 = vmatprep.subr.bf16.mxu0 0
    %1960 = vmatpush1.bf16.msra.mxu0 0
    %1961 = vmatprep.subr.bf16.mxu0 0
    %1962 = vmatpush1.bf16.msra.mxu0 0
    %1963 = vmatprep.subr.bf16.mxu0 0
    %1964 = vmatpush1.bf16.msra.mxu0 0
    %1965 = vmatprep.subr.bf16.mxu0 0
    %1966 = vmatpush1.bf16.msra.mxu0 0
    %1967 = vmatprep.subr.bf16.mxu0 0
    %1968 = vmatpush1.bf16.msra.mxu0 0
    %1969 = vmatprep.subr.bf16.mxu0 0
    %1970 = vmatpush1.bf16.msra.mxu0 0
    %1971 = vmatprep.subr.bf16.mxu0 0
    %1972 = vmatpush1.bf16.msra.mxu0 0
    %1973 = vmatprep.mubr.bf16.mxu0 0
    %1974 = vmatmul.mubr.bf16.gmra.mrb[0].mxu0 %v1936
    %v1975 = vpop.f32.mrb[0].mxu0
    %v1976 = vadd.f32 0.0, %v1975
    %v1977 = vpop.f32.mrb[0].mxu0
    %v1978 = vpop.f32.mrb[0].mxu0
    %v1979 = vpop.f32.mrb[0].mxu0
    %1980 = vdwg.mxu0
    %v1982 = vsel %vm305, %v1934, 0
    %v1985 = vsel %vm333, %v1812, 0
    %1987 = vmatprep.subr.bf16.mxu0 0
    %1988 = vmatpush1.bf16.msra.mxu0 %v1985
    %1989 = vmatprep.subr.bf16.mxu0 0
    %1990 = vmatpush1.bf16.msra.mxu0 0
    %1991 = vmatprep.subr.bf16.mxu0 0
    %1992 = vmatpush1.bf16.msra.mxu0 0
    %1993 = vmatprep.subr.bf16.mxu0 0
    %1994 = vmatpush1.bf16.msra.mxu0 0
    %1995 = vmatprep.subr.bf16.mxu0 0
    %1996 = vmatpush1.bf16.msra.mxu0 0
    %1997 = vmatprep.subr.bf16.mxu0 0
    %1998 = vmatpush1.bf16.msra.mxu0 0
    %1999 = vmatprep.subr.bf16.mxu0 0
    %2000 = vmatpush1.bf16.msra.mxu0 0
    %2001 = vmatprep.subr.bf16.mxu0 0
    %2002 = vmatpush1.bf16.msra.mxu0 0
    %2003 = vmatprep.subr.bf16.mxu0 0
    %2004 = vmatpush1.bf16.msra.mxu0 0
    %2005 = vmatprep.subr.bf16.mxu0 0
    %2006 = vmatpush1.bf16.msra.mxu0 0
    %2007 = vmatprep.subr.bf16.mxu0 0
    %2008 = vmatpush1.bf16.msra.mxu0 0
    %2009 = vmatprep.subr.bf16.mxu0 0
    %2010 = vmatpush1.bf16.msra.mxu0 0
    %2011 = vmatprep.subr.bf16.mxu0 0
    %2012 = vmatpush1.bf16.msra.mxu0 0
    %2013 = vmatprep.subr.bf16.mxu0 0
    %2014 = vmatpush1.bf16.msra.mxu0 0
    %2015 = vmatprep.subr.bf16.mxu0 0
    %2016 = vmatpush1.bf16.msra.mxu0 0
    %2017 = vmatprep.subr.bf16.mxu0 0
    %2018 = vmatpush1.bf16.msra.mxu0 0
    %2019 = vmatprep.mubr.bf16.mxu0 0
    %2020 = vmatmul.mubr.bf16.gmra.mrb[0].mxu0 %v1982
    %v2021 = vpop.f32.mrb[0].mxu0
    %v2022 = vadd.f32 0.0, %v2021
    %v2023 = vpop.f32.mrb[0].mxu0
    %v2024 = vpop.f32.mrb[0].mxu0
    %v2025 = vpop.f32.mrb[0].mxu0
    %2026 = vdwg.mxu0
    %s2027 = scalar_lea.vmem %s5, 32
    %v2028 = vld [vmem:[%s2027] sm:$0xf]
    %v2029 = vld [vmem:[%s2027 + $0x4] sm:$0xf]
    %v2030 = vpack.c.bf16 %v2022, %v1976
    %2031 = vrot.lane.b32.xlu0 %v1809, 112
    %v2032 = vpop.permute.xlu0 %2031
    %2033 = vrot.lane.b32.xlu0 %v1809, 48
    %v2034 = vpop.permute.xlu0 %2033
    %v2036 = vsel %vm209, %v2032, 0
    %v2039 = vsel %vm209, %v2034, 0
    %2041 = vmatprep.subr.bf16.mxu0 0
    %2042 = vmatpush1.bf16.xpose.msra.mxu0 %v2039
    %2043 = vmatprep.subr.bf16.mxu0 0
    %2044 = vmatpush1.bf16.xpose.msra.mxu0 0
    %2045 = vmatprep.subr.bf16.mxu0 0
    %2046 = vmatpush1.bf16.xpose.msra.mxu0 0
    %2047 = vmatprep.subr.bf16.mxu0 0
    %2048 = vmatpush1.bf16.xpose.msra.mxu0 0
    %2049 = vmatprep.subr.bf16.mxu0 0
    %2050 = vmatpush1.bf16.xpose.msra.mxu0 0
    %2051 = vmatprep.subr.bf16.mxu0 0
    %2052 = vmatpush1.bf16.xpose.msra.mxu0 0
    %2053 = vmatprep.subr.bf16.mxu0 0
    %2054 = vmatpush1.bf16.xpose.msra.mxu0 0
    %2055 = vmatprep.subr.bf16.mxu0 0
    %2056 = vmatpush1.bf16.xpose.msra.mxu0 0
    %2057 = vmatprep.subr.bf16.mxu0 0
    %2058 = vmatpush1.bf16.xpose.msra.mxu0 0
    %2059 = vmatprep.subr.bf16.mxu0 0
    %2060 = vmatpush1.bf16.xpose.msra.mxu0 0
    %2061 = vmatprep.subr.bf16.mxu0 0
    %2062 = vmatpush1.bf16.xpose.msra.mxu0 0
    %2063 = vmatprep.subr.bf16.mxu0 0
    %2064 = vmatpush1.bf16.xpose.msra.mxu0 0
    %2065 = vmatprep.subr.bf16.mxu0 0
    %2066 = vmatpush1.bf16.xpose.msra.mxu0 0
    %2067 = vmatprep.subr.bf16.mxu0 0
    %2068 = vmatpush1.bf16.xpose.msra.mxu0 0
    %2069 = vmatprep.subr.bf16.mxu0 0
    %2070 = vmatpush1.bf16.xpose.msra.mxu0 0
    %2071 = vmatprep.subr.bf16.mxu0 0
    %2072 = vmatpush1.bf16.xpose.msra.mxu0 0
    %2073 = vmatprep.mubr.bf16.mxu0 0
    %2074 = vmatmul.mubr.bf16.gmra.mrb[0].mxu0 %v2036
    %v2075 = vpop.f32.mrb[0].mxu0
    %v2076 = vadd.f32 %v53, %v2075
    %v2077 = vpop.f32.mrb[0].mxu0
    %v2078 = vpop.f32.mrb[0].mxu0
    %v2079 = vpop.f32.mrb[0].mxu0
    %2080 = vdwg.mxu0
    %2081 = vrot.lane.b32.xlu0 %v1810, 112
    %v2082 = vpop.permute.xlu0 %2081
    %2083 = vrot.lane.b32.xlu0 %v1810, 48
    %v2084 = vpop.permute.xlu0 %2083
    %v2086 = vsel %vm209, %v2082, 0
    %v2089 = vsel %vm209, %v2084, 0
    %2091 = vmatprep.subr.bf16.mxu0 0
    %2092 = vmatpush1.bf16.xpose.msra.mxu0 %v2089
    %2093 = vmatprep.subr.bf16.mxu0 0
    %2094 = vmatpush1.bf16.xpose.msra.mxu0 0
    %2095 = vmatprep.subr.bf16.mxu0 0
    %2096 = vmatpush1.bf16.xpose.msra.mxu0 0
    %2097 = vmatprep.subr.bf16.mxu0 0
    %2098 = vmatpush1.bf16.xpose.msra.mxu0 0
    %2099 = vmatprep.subr.bf16.mxu0 0
    %2100 = vmatpush1.bf16.xpose.msra.mxu0 0
    %2101 = vmatprep.subr.bf16.mxu0 0
    %2102 = vmatpush1.bf16.xpose.msra.mxu0 0
    %2103 = vmatprep.subr.bf16.mxu0 0
    %2104 = vmatpush1.bf16.xpose.msra.mxu0 0
    %2105 = vmatprep.subr.bf16.mxu0 0
    %2106 = vmatpush1.bf16.xpose.msra.mxu0 0
    %2107 = vmatprep.subr.bf16.mxu0 0
    %2108 = vmatpush1.bf16.xpose.msra.mxu0 0
    %2109 = vmatprep.subr.bf16.mxu0 0
    %2110 = vmatpush1.bf16.xpose.msra.mxu0 0
    %2111 = vmatprep.subr.bf16.mxu0 0
    %2112 = vmatpush1.bf16.xpose.msra.mxu0 0
    %2113 = vmatprep.subr.bf16.mxu0 0
    %2114 = vmatpush1.bf16.xpose.msra.mxu0 0
    %2115 = vmatprep.subr.bf16.mxu0 0
    %2116 = vmatpush1.bf16.xpose.msra.mxu0 0
    %2117 = vmatprep.subr.bf16.mxu0 0
    %2118 = vmatpush1.bf16.xpose.msra.mxu0 0
    %2119 = vmatprep.subr.bf16.mxu0 0
    %2120 = vmatpush1.bf16.xpose.msra.mxu0 0
    %2121 = vmatprep.subr.bf16.mxu0 0
    %2122 = vmatpush1.bf16.xpose.msra.mxu0 0
    %2123 = vmatprep.mubr.bf16.mxu0 0
    %2124 = vmatmul.mubr.bf16.gmra.mrb[0].mxu0 %v2086
    %v2125 = vpop.f32.mrb[0].mxu0
    %v2126 = vadd.f32 %v53, %v2125
    %v2127 = vpop.f32.mrb[0].mxu0
    %v2128 = vpop.f32.mrb[0].mxu0
    %v2129 = vpop.f32.mrb[0].mxu0
    %2130 = vdwg.mxu0
    %v2131 = vsel %vm305, %v2076, -inf
    %2132 = vmax.xlane.f32.xlu0 %v2131
    %v2133 = vpop.xlane.xlu0 %2132
    %v2134 = vsel %vm305, %v2126, -inf
    %2135 = vmax.xlane.f32.xlu0 %v2134
    %v2136 = vpop.xlane.xlu0 %2135
    %v2137 = vsub.f32 %v2076, %v2133
    %v2138 = vsub.f32 %v2126, %v2136
    %v2139 = vmul.f32 %v2137, 1.442695
    %v2140 = vpow.pop %v2139
    %v2141 = vmul.f32 %v2138, 1.442695
    %v2142 = vpow.pop %v2141
    %v2143 = vsel %vm305, %v2140, 0.0
    %2144 = vadd.xlane.f32.xlu0 %v2143
    %v2145 = vpop.xlane.xlu0 %2144
    %v2146 = vsel %vm305, %v2142, 0.0
    %2147 = vadd.xlane.f32.xlu0 %v2146
    %v2148 = vpop.xlane.xlu0 %2147
    %v2149 = vrcp.pop %v2145
    %v2150 = vrcp.pop %v2148
    %v2151 = vmul.f32 %v2140, %v2149
    %v2152 = vmul.f32 %v2142, %v2150
    %v2153 = vpack.c.bf16 %v2151, %v2151
    %v2154 = vpack.c.bf16 %v2152, %v2152
    %2156 = vrot.lane.b32.xlu0 %v1811, 112
    %v2157 = vpop.permute.xlu0 %2156
    %v2159 = vsel %vm305, %v2153, 0
    %v2162 = vsel %vm333, %v2157, 0
    %2164 = vmatprep.subr.bf16.mxu0 0
    %2165 = vmatpush1.bf16.msra.mxu0 %v2162
    %2166 = vmatprep.subr.bf16.mxu0 0
    %2167 = vmatpush1.bf16.msra.mxu0 0
    %2168 = vmatprep.subr.bf16.mxu0 0
    %2169 = vmatpush1.bf16.msra.mxu0 0
    %2170 = vmatprep.subr.bf16.mxu0 0
    %2171 = vmatpush1.bf16.msra.mxu0 0
    %2172 = vmatprep.subr.bf16.mxu0 0
    %2173 = vmatpush1.bf16.msra.mxu0 0
    %2174 = vmatprep.subr.bf16.mxu0 0
    %2175 = vmatpush1.bf16.msra.mxu0 0
    %2176 = vmatprep.subr.bf16.mxu0 0
    %2177 = vmatpush1.bf16.msra.mxu0 0
    %2178 = vmatprep.subr.bf16.mxu0 0
    %2179 = vmatpush1.bf16.msra.mxu0 0
    %2180 = vmatprep.subr.bf16.mxu0 0
    %2181 = vmatpush1.bf16.msra.mxu0 0
    %2182 = vmatprep.subr.bf16.mxu0 0
    %2183 = vmatpush1.bf16.msra.mxu0 0
    %2184 = vmatprep.subr.bf16.mxu0 0
    %2185 = vmatpush1.bf16.msra.mxu0 0
    %2186 = vmatprep.subr.bf16.mxu0 0
    %2187 = vmatpush1.bf16.msra.mxu0 0
    %2188 = vmatprep.subr.bf16.mxu0 0
    %2189 = vmatpush1.bf16.msra.mxu0 0
    %2190 = vmatprep.subr.bf16.mxu0 0
    %2191 = vmatpush1.bf16.msra.mxu0 0
    %2192 = vmatprep.subr.bf16.mxu0 0
    %2193 = vmatpush1.bf16.msra.mxu0 0
    %2194 = vmatprep.subr.bf16.mxu0 0
    %2195 = vmatpush1.bf16.msra.mxu0 0
    %2196 = vmatprep.mubr.bf16.mxu0 0
    %2197 = vmatmul.mubr.bf16.gmra.mrb[0].mxu0 %v2159
    %v2198 = vpop.f32.mrb[0].mxu0
    %v2199 = vadd.f32 0.0, %v2198
    %v2200 = vpop.f32.mrb[0].mxu0
    %v2201 = vpop.f32.mrb[0].mxu0
    %v2202 = vpop.f32.mrb[0].mxu0
    %2203 = vdwg.mxu0
    %2205 = vrot.lane.b32.xlu0 %v1812, 112
    %v2206 = vpop.permute.xlu0 %2205
    %v2208 = vsel %vm305, %v2154, 0
    %v2211 = vsel %vm333, %v2206, 0
    %2213 = vmatprep.subr.bf16.mxu0 0
    %2214 = vmatpush1.bf16.msra.mxu0 %v2211
    %2215 = vmatprep.subr.bf16.mxu0 0
    %2216 = vmatpush1.bf16.msra.mxu0 0
    %2217 = vmatprep.subr.bf16.mxu0 0
    %2218 = vmatpush1.bf16.msra.mxu0 0
    %2219 = vmatprep.subr.bf16.mxu0 0
    %2220 = vmatpush1.bf16.msra.mxu0 0
    %2221 = vmatprep.subr.bf16.mxu0 0
    %2222 = vmatpush1.bf16.msra.mxu0 0
    %2223 = vmatprep.subr.bf16.mxu0 0
    %2224 = vmatpush1.bf16.msra.mxu0 0
    %2225 = vmatprep.subr.bf16.mxu0 0
    %2226 = vmatpush1.bf16.msra.mxu0 0
    %2227 = vmatprep.subr.bf16.mxu0 0
    %2228 = vmatpush1.bf16.msra.mxu0 0
    %2229 = vmatprep.subr.bf16.mxu0 0
    %2230 = vmatpush1.bf16.msra.mxu0 0
    %2231 = vmatprep.subr.bf16.mxu0 0
    %2232 = vmatpush1.bf16.msra.mxu0 0
    %2233 = vmatprep.subr.bf16.mxu0 0
    %2234 = vmatpush1.bf16.msra.mxu0 0
    %2235 = vmatprep.subr.bf16.mxu0 0
    %2236 = vmatpush1.bf16.msra.mxu0 0
    %2237 = vmatprep.subr.bf16.mxu0 0
    %2238 = vmatpush1.bf16.msra.mxu0 0
    %2239 = vmatprep.subr.bf16.mxu0 0
    %2240 = vmatpush1.bf16.msra.mxu0 0
    %2241 = vmatprep.subr.bf16.mxu0 0
    %2242 = vmatpush1.bf16.msra.mxu0 0
    %2243 = vmatprep.subr.bf16.mxu0 0
    %2244 = vmatpush1.bf16.msra.mxu0 0
    %2245 = vmatprep.mubr.bf16.mxu0 0
    %2246 = vmatmul.mubr.bf16.gmra.mrb[0].mxu0 %v2208
    %v2247 = vpop.f32.mrb[0].mxu0
    %v2248 = vadd.f32 0.0, %v2247
    %v2249 = vpop.f32.mrb[0].mxu0
    %v2250 = vpop.f32.mrb[0].mxu0
    %v2251 = vpop.f32.mrb[0].mxu0
    %2252 = vdwg.mxu0
    %s2253 = scalar_lea.vmem %s5, 40
    %v2254 = vld [vmem:[%s2253] sm:$0xf]
    %v2255 = vld [vmem:[%s2253 + $0x4] sm:$0xf]
    %v2256 = vpack.c.bf16 %v2248, %v2199
    %v2259 = vunpack.c.l.b16 %v2254
    %v2260 = vunpack.c.l.b16 %v2255
    %v2261 = vpack.c.b16 %v2260, %v2259
    %v2264 = vsel %vm209, %v2256, 0
    %2266 = vmatprep.subr.bf16.mxu0 0
    %2267 = vmatpush1.bf16.msra.mxu0 %v2261
    %2268 = vmatprep.subr.bf16.mxu0 0
    %2269 = vmatpush1.bf16.msra.mxu0 0
    %2270 = vmatprep.subr.bf16.mxu0 0
    %2271 = vmatpush1.bf16.msra.mxu0 0
    %2272 = vmatprep.subr.bf16.mxu0 0
    %2273 = vmatpush1.bf16.msra.mxu0 0
    %2274 = vmatprep.subr.bf16.mxu0 0
    %2275 = vmatpush1.bf16.msra.mxu0 0
    %2276 = vmatprep.subr.bf16.mxu0 0
    %2277 = vmatpush1.bf16.msra.mxu0 0
    %2278 = vmatprep.subr.bf16.mxu0 0
    %2279 = vmatpush1.bf16.msra.mxu0 0
    %2280 = vmatprep.subr.bf16.mxu0 0
    %2281 = vmatpush1.bf16.msra.mxu0 0
    %2282 = vmatprep.subr.bf16.mxu0 0
    %2283 = vmatpush1.bf16.msra.mxu0 0
    %2284 = vmatprep.subr.bf16.mxu0 0
    %2285 = vmatpush1.bf16.msra.mxu0 0
    %2286 = vmatprep.subr.bf16.mxu0 0
    %2287 = vmatpush1.bf16.msra.mxu0 0
    %2288 = vmatprep.subr.bf16.mxu0 0
    %2289 = vmatpush1.bf16.msra.mxu0 0
    %2290 = vmatprep.subr.bf16.mxu0 0
    %2291 = vmatpush1.bf16.msra.mxu0 0
    %2292 = vmatprep.subr.bf16.mxu0 0
    %2293 = vmatpush1.bf16.msra.mxu0 0
    %2294 = vmatprep.subr.bf16.mxu0 0
    %2295 = vmatpush1.bf16.msra.mxu0 0
    %2296 = vmatprep.subr.bf16.mxu0 0
    %2297 = vmatpush1.bf16.msra.mxu0 0
    %2298 = vmatprep.mubr.bf16.mxu0 0
    %2299 = vmatmul.mubr.bf16.gmra.mrb[0].mxu0 %v2264
    %v2300 = vpop.f32.mrb[0].mxu0
    %v2301 = vadd.f32 0.0, %v2300
    %v2302 = vpop.f32.mrb[0].mxu0
    %v2303 = vpop.f32.mrb[0].mxu0
    %v2304 = vadd.f32 0.0, %v2303
    %v2305 = vpop.f32.mrb[0].mxu0
    %2306 = vdwg.mxu0
    %v2309 = vunpack.c.l.b16 %v2028
    %v2310 = vunpack.c.l.b16 %v2029
    %v2311 = vpack.c.b16 %v2310, %v2309
    %v2314 = vsel %vm209, %v2030, 0
    %2316 = vmatprep.subr.bf16.mxu0 0
    %2317 = vmatpush1.bf16.msra.mxu0 %v2311
    %2318 = vmatprep.subr.bf16.mxu0 0
    %2319 = vmatpush1.bf16.msra.mxu0 0
    %2320 = vmatprep.subr.bf16.mxu0 0
    %2321 = vmatpush1.bf16.msra.mxu0 0
    %2322 = vmatprep.subr.bf16.mxu0 0
    %2323 = vmatpush1.bf16.msra.mxu0 0
    %2324 = vmatprep.subr.bf16.mxu0 0
    %2325 = vmatpush1.bf16.msra.mxu0 0
    %2326 = vmatprep.subr.bf16.mxu0 0
    %2327 = vmatpush1.bf16.msra.mxu0 0
    %2328 = vmatprep.subr.bf16.mxu0 0
    %2329 = vmatpush1.bf16.msra.mxu0 0
    %2330 = vmatprep.subr.bf16.mxu0 0
    %2331 = vmatpush1.bf16.msra.mxu0 0
    %2332 = vmatprep.subr.bf16.mxu0 0
    %2333 = vmatpush1.bf16.msra.mxu0 0
    %2334 = vmatprep.subr.bf16.mxu0 0
    %2335 = vmatpush1.bf16.msra.mxu0 0
    %2336 = vmatprep.subr.bf16.mxu0 0
    %2337 = vmatpush1.bf16.msra.mxu0 0
    %2338 = vmatprep.subr.bf16.mxu0 0
    %2339 = vmatpush1.bf16.msra.mxu0 0
    %2340 = vmatprep.subr.bf16.mxu0 0
    %2341 = vmatpush1.bf16.msra.mxu0 0
    %2342 = vmatprep.subr.bf16.mxu0 0
    %2343 = vmatpush1.bf16.msra.mxu0 0
    %2344 = vmatprep.subr.bf16.mxu0 0
    %2345 = vmatpush1.bf16.msra.mxu0 0
    %2346 = vmatprep.subr.bf16.mxu0 0
    %2347 = vmatpush1.bf16.msra.mxu0 0
    %2348 = vmatprep.mubr.bf16.mxu0 0
    %2349 = vmatmul.mubr.bf16.gmra.mrb[0].mxu0 %v2314
    %v2350 = vpop.f32.mrb[0].mxu0
    %v2351 = vadd.f32 %v2301, %v2350
    %v2352 = vpop.f32.mrb[0].mxu0
    %v2353 = vpop.f32.mrb[0].mxu0
    %v2354 = vadd.f32 %v2304, %v2353
    %v2355 = vpop.f32.mrb[0].mxu0
    %2356 = vdwg.mxu0
    %2357 = vrot.lane.b32.xlu0 %v1809, 96
    %v2358 = vpop.permute.xlu0 %2357
    %2359 = vrot.lane.b32.xlu0 %v1809, 32
    %v2360 = vpop.permute.xlu0 %2359
    %v2362 = vsel %vm209, %v2358, 0
    %v2365 = vsel %vm209, %v2360, 0
    %2367 = vmatprep.subr.bf16.mxu0 0
    %2368 = vmatpush1.bf16.xpose.msra.mxu0 %v2365
    %2369 = vmatprep.subr.bf16.mxu0 0
    %2370 = vmatpush1.bf16.xpose.msra.mxu0 0
    %2371 = vmatprep.subr.bf16.mxu0 0
    %2372 = vmatpush1.bf16.xpose.msra.mxu0 0
    %2373 = vmatprep.subr.bf16.mxu0 0
    %2374 = vmatpush1.bf16.xpose.msra.mxu0 0
    %2375 = vmatprep.subr.bf16.mxu0 0
    %2376 = vmatpush1.bf16.xpose.msra.mxu0 0
    %2377 = vmatprep.subr.bf16.mxu0 0
    %2378 = vmatpush1.bf16.xpose.msra.mxu0 0
    %2379 = vmatprep.subr.bf16.mxu0 0
    %2380 = vmatpush1.bf16.xpose.msra.mxu0 0
    %2381 = vmatprep.subr.bf16.mxu0 0
    %2382 = vmatpush1.bf16.xpose.msra.mxu0 0
    %2383 = vmatprep.subr.bf16.mxu0 0
    %2384 = vmatpush1.bf16.xpose.msra.mxu0 0
    %2385 = vmatprep.subr.bf16.mxu0 0
    %2386 = vmatpush1.bf16.xpose.msra.mxu0 0
    %2387 = vmatprep.subr.bf16.mxu0 0
    %2388 = vmatpush1.bf16.xpose.msra.mxu0 0
    %2389 = vmatprep.subr.bf16.mxu0 0
    %2390 = vmatpush1.bf16.xpose.msra.mxu0 0
    %2391 = vmatprep.subr.bf16.mxu0 0
    %2392 = vmatpush1.bf16.xpose.msra.mxu0 0
    %2393 = vmatprep.subr.bf16.mxu0 0
    %2394 = vmatpush1.bf16.xpose.msra.mxu0 0
    %2395 = vmatprep.subr.bf16.mxu0 0
    %2396 = vmatpush1.bf16.xpose.msra.mxu0 0
    %2397 = vmatprep.subr.bf16.mxu0 0
    %2398 = vmatpush1.bf16.xpose.msra.mxu0 0
    %2399 = vmatprep.mubr.bf16.mxu0 0
    %2400 = vmatmul.mubr.bf16.gmra.mrb[0].mxu0 %v2362
    %v2401 = vpop.f32.mrb[0].mxu0
    %v2402 = vadd.f32 %v53, %v2401
    %v2403 = vpop.f32.mrb[0].mxu0
    %v2404 = vpop.f32.mrb[0].mxu0
    %v2405 = vpop.f32.mrb[0].mxu0
    %2406 = vdwg.mxu0
    %2407 = vrot.lane.b32.xlu0 %v1810, 96
    %v2408 = vpop.permute.xlu0 %2407
    %2409 = vrot.lane.b32.xlu0 %v1810, 32
    %v2410 = vpop.permute.xlu0 %2409
    %v2412 = vsel %vm209, %v2408, 0
    %v2415 = vsel %vm209, %v2410, 0
    %2417 = vmatprep.subr.bf16.mxu0 0
    %2418 = vmatpush1.bf16.xpose.msra.mxu0 %v2415
    %2419 = vmatprep.subr.bf16.mxu0 0
    %2420 = vmatpush1.bf16.xpose.msra.mxu0 0
    %2421 = vmatprep.subr.bf16.mxu0 0
    %2422 = vmatpush1.bf16.xpose.msra.mxu0 0
    %2423 = vmatprep.subr.bf16.mxu0 0
    %2424 = vmatpush1.bf16.xpose.msra.mxu0 0
    %2425 = vmatprep.subr.bf16.mxu0 0
    %2426 = vmatpush1.bf16.xpose.msra.mxu0 0
    %2427 = vmatprep.subr.bf16.mxu0 0
    %2428 = vmatpush1.bf16.xpose.msra.mxu0 0
    %2429 = vmatprep.subr.bf16.mxu0 0
    %2430 = vmatpush1.bf16.xpose.msra.mxu0 0
    %2431 = vmatprep.subr.bf16.mxu0 0
    %2432 = vmatpush1.bf16.xpose.msra.mxu0 0
    %2433 = vmatprep.subr.bf16.mxu0 0
    %2434 = vmatpush1.bf16.xpose.msra.mxu0 0
    %2435 = vmatprep.subr.bf16.mxu0 0
    %2436 = vmatpush1.bf16.xpose.msra.mxu0 0
    %2437 = vmatprep.subr.bf16.mxu0 0
    %2438 = vmatpush1.bf16.xpose.msra.mxu0 0
    %2439 = vmatprep.subr.bf16.mxu0 0
    %2440 = vmatpush1.bf16.xpose.msra.mxu0 0
    %2441 = vmatprep.subr.bf16.mxu0 0
    %2442 = vmatpush1.bf16.xpose.msra.mxu0 0
    %2443 = vmatprep.subr.bf16.mxu0 0
    %2444 = vmatpush1.bf16.xpose.msra.mxu0 0
    %2445 = vmatprep.subr.bf16.mxu0 0
    %2446 = vmatpush1.bf16.xpose.msra.mxu0 0
    %2447 = vmatprep.subr.bf16.mxu0 0
    %2448 = vmatpush1.bf16.xpose.msra.mxu0 0
    %2449 = vmatprep.mubr.bf16.mxu0 0
    %2450 = vmatmul.mubr.bf16.gmra.mrb[0].mxu0 %v2412
    %v2451 = vpop.f32.mrb[0].mxu0
    %v2452 = vadd.f32 %v53, %v2451
    %v2453 = vpop.f32.mrb[0].mxu0
    %v2454 = vpop.f32.mrb[0].mxu0
    %v2455 = vpop.f32.mrb[0].mxu0
    %2456 = vdwg.mxu0
    %v2457 = vsel %vm305, %v2402, -inf
    %2458 = vmax.xlane.f32.xlu0 %v2457
    %v2459 = vpop.xlane.xlu0 %2458
    %v2460 = vsel %vm305, %v2452, -inf
    %2461 = vmax.xlane.f32.xlu0 %v2460
    %v2462 = vpop.xlane.xlu0 %2461
    %v2463 = vsub.f32 %v2402, %v2459
    %v2464 = vsub.f32 %v2452, %v2462
    %v2465 = vmul.f32 %v2463, 1.442695
    %v2466 = vpow.pop %v2465
    %v2467 = vmul.f32 %v2464, 1.442695
    %v2468 = vpow.pop %v2467
    %v2469 = vsel %vm305, %v2466, 0.0
    %2470 = vadd.xlane.f32.xlu0 %v2469
    %v2471 = vpop.xlane.xlu0 %2470
    %v2472 = vsel %vm305, %v2468, 0.0
    %2473 = vadd.xlane.f32.xlu0 %v2472
    %v2474 = vpop.xlane.xlu0 %2473
    %v2475 = vrcp.pop %v2471
    %v2476 = vrcp.pop %v2474
    %v2477 = vmul.f32 %v2466, %v2475
    %v2478 = vmul.f32 %v2468, %v2476
    %v2479 = vpack.c.bf16 %v2477, %v2477
    %v2480 = vpack.c.bf16 %v2478, %v2478
    %2481 = vrot.lane.b32.xlu0 %v1811, 96
    %v2482 = vpop.permute.xlu0 %2481
    %v2484 = vsel %vm305, %v2479, 0
    %v2487 = vsel %vm333, %v2482, 0
    %2489 = vmatprep.subr.bf16.mxu0 0
    %2490 = vmatpush1.bf16.msra.mxu0 %v2487
    %2491 = vmatprep.subr.bf16.mxu0 0
    %2492 = vmatpush1.bf16.msra.mxu0 0
    %2493 = vmatprep.subr.bf16.mxu0 0
    %2494 = vmatpush1.bf16.msra.mxu0 0
    %2495 = vmatprep.subr.bf16.mxu0 0
    %2496 = vmatpush1.bf16.msra.mxu0 0
    %2497 = vmatprep.subr.bf16.mxu0 0
    %2498 = vmatpush1.bf16.msra.mxu0 0
    %2499 = vmatprep.subr.bf16.mxu0 0
    %2500 = vmatpush1.bf16.msra.mxu0 0
    %2501 = vmatprep.subr.bf16.mxu0 0
    %2502 = vmatpush1.bf16.msra.mxu0 0
    %2503 = vmatprep.subr.bf16.mxu0 0
    %2504 = vmatpush1.bf16.msra.mxu0 0
    %2505 = vmatprep.subr.bf16.mxu0 0
    %2506 = vmatpush1.bf16.msra.mxu0 0
    %2507 = vmatprep.subr.bf16.mxu0 0
    %2508 = vmatpush1.bf16.msra.mxu0 0
    %2509 = vmatprep.subr.bf16.mxu0 0
    %2510 = vmatpush1.bf16.msra.mxu0 0
    %2511 = vmatprep.subr.bf16.mxu0 0
    %2512 = vmatpush1.bf16.msra.mxu0 0
    %2513 = vmatprep.subr.bf16.mxu0 0
    %2514 = vmatpush1.bf16.msra.mxu0 0
    %2515 = vmatprep.subr.bf16.mxu0 0
    %2516 = vmatpush1.bf16.msra.mxu0 0
    %2517 = vmatprep.subr.bf16.mxu0 0
    %2518 = vmatpush1.bf16.msra.mxu0 0
    %2519 = vmatprep.subr.bf16.mxu0 0
    %2520 = vmatpush1.bf16.msra.mxu0 0
    %2521 = vmatprep.mubr.bf16.mxu0 0
    %2522 = vmatmul.mubr.bf16.gmra.mrb[0].mxu0 %v2484
    %v2523 = vpop.f32.mrb[0].mxu0
    %v2524 = vadd.f32 0.0, %v2523
    %v2525 = vpop.f32.mrb[0].mxu0
    %v2526 = vpop.f32.mrb[0].mxu0
    %v2527 = vpop.f32.mrb[0].mxu0
    %2528 = vdwg.mxu0
    %2529 = vrot.lane.b32.xlu0 %v1812, 96
    %v2530 = vpop.permute.xlu0 %2529
    %v2532 = vsel %vm305, %v2480, 0
    %v2535 = vsel %vm333, %v2530, 0
    %2537 = vmatprep.subr.bf16.mxu0 0
    %2538 = vmatpush1.bf16.msra.mxu0 %v2535
    %2539 = vmatprep.subr.bf16.mxu0 0
    %2540 = vmatpush1.bf16.msra.mxu0 0
    %2541 = vmatprep.subr.bf16.mxu0 0
    %2542 = vmatpush1.bf16.msra.mxu0 0
    %2543 = vmatprep.subr.bf16.mxu0 0
    %2544 = vmatpush1.bf16.msra.mxu0 0
    %2545 = vmatprep.subr.bf16.mxu0 0
    %2546 = vmatpush1.bf16.msra.mxu0 0
    %2547 = vmatprep.subr.bf16.mxu0 0
    %2548 = vmatpush1.bf16.msra.mxu0 0
    %2549 = vmatprep.subr.bf16.mxu0 0
    %2550 = vmatpush1.bf16.msra.mxu0 0
    %2551 = vmatprep.subr.bf16.mxu0 0
    %2552 = vmatpush1.bf16.msra.mxu0 0
    %2553 = vmatprep.subr.bf16.mxu0 0
    %2554 = vmatpush1.bf16.msra.mxu0 0
    %2555 = vmatprep.subr.bf16.mxu0 0
    %2556 = vmatpush1.bf16.msra.mxu0 0
    %2557 = vmatprep.subr.bf16.mxu0 0
    %2558 = vmatpush1.bf16.msra.mxu0 0
    %2559 = vmatprep.subr.bf16.mxu0 0
    %2560 = vmatpush1.bf16.msra.mxu0 0
    %2561 = vmatprep.subr.bf16.mxu0 0
    %2562 = vmatpush1.bf16.msra.mxu0 0
    %2563 = vmatprep.subr.bf16.mxu0 0
    %2564 = vmatpush1.bf16.msra.mxu0 0
    %2565 = vmatprep.subr.bf16.mxu0 0
    %2566 = vmatpush1.bf16.msra.mxu0 0
    %2567 = vmatprep.subr.bf16.mxu0 0
    %2568 = vmatpush1.bf16.msra.mxu0 0
    %2569 = vmatprep.mubr.bf16.mxu0 0
    %2570 = vmatmul.mubr.bf16.gmra.mrb[0].mxu0 %v2532
    %v2571 = vpop.f32.mrb[0].mxu0
    %v2572 = vadd.f32 0.0, %v2571
    %v2573 = vpop.f32.mrb[0].mxu0
    %v2574 = vpop.f32.mrb[0].mxu0
    %v2575 = vpop.f32.mrb[0].mxu0
    %2576 = vdwg.mxu0
    %s2577 = scalar_lea.vmem %s5, 48
    %v2578 = vld [vmem:[%s2577] sm:$0xf]
    %v2579 = vld [vmem:[%s2577 + $0x4] sm:$0xf]
    %v2580 = vpack.c.bf16 %v2572, %v2524
    %v2583 = vunpack.c.l.b16 %v2578
    %v2584 = vunpack.c.l.b16 %v2579
    %v2585 = vpack.c.b16 %v2584, %v2583
    %v2588 = vsel %vm209, %v2580, 0
    %2590 = vmatprep.subr.bf16.mxu0 0
    %2591 = vmatpush1.bf16.msra.mxu0 %v2585
    %2592 = vmatprep.subr.bf16.mxu0 0
    %2593 = vmatpush1.bf16.msra.mxu0 0
    %2594 = vmatprep.subr.bf16.mxu0 0
    %2595 = vmatpush1.bf16.msra.mxu0 0
    %2596 = vmatprep.subr.bf16.mxu0 0
    %2597 = vmatpush1.bf16.msra.mxu0 0
    %2598 = vmatprep.subr.bf16.mxu0 0
    %2599 = vmatpush1.bf16.msra.mxu0 0
    %2600 = vmatprep.subr.bf16.mxu0 0
    %2601 = vmatpush1.bf16.msra.mxu0 0
    %2602 = vmatprep.subr.bf16.mxu0 0
    %2603 = vmatpush1.bf16.msra.mxu0 0
    %2604 = vmatprep.subr.bf16.mxu0 0
    %2605 = vmatpush1.bf16.msra.mxu0 0
    %2606 = vmatprep.subr.bf16.mxu0 0
    %2607 = vmatpush1.bf16.msra.mxu0 0
    %2608 = vmatprep.subr.bf16.mxu0 0
    %2609 = vmatpush1.bf16.msra.mxu0 0
    %2610 = vmatprep.subr.bf16.mxu0 0
    %2611 = vmatpush1.bf16.msra.mxu0 0
    %2612 = vmatprep.subr.bf16.mxu0 0
    %2613 = vmatpush1.bf16.msra.mxu0 0
    %2614 = vmatprep.subr.bf16.mxu0 0
    %2615 = vmatpush1.bf16.msra.mxu0 0
    %2616 = vmatprep.subr.bf16.mxu0 0
    %2617 = vmatpush1.bf16.msra.mxu0 0
    %2618 = vmatprep.subr.bf16.mxu0 0
    %2619 = vmatpush1.bf16.msra.mxu0 0
    %2620 = vmatprep.subr.bf16.mxu0 0
    %2621 = vmatpush1.bf16.msra.mxu0 0
    %2622 = vmatprep.mubr.bf16.mxu0 0
    %2623 = vmatmul.mubr.bf16.gmra.mrb[0].mxu0 %v2588
    %v2624 = vpop.f32.mrb[0].mxu0
    %v2625 = vadd.f32 0.0, %v2624
    %v2626 = vpop.f32.mrb[0].mxu0
    %v2627 = vpop.f32.mrb[0].mxu0
    %v2628 = vadd.f32 0.0, %v2627
    %v2629 = vpop.f32.mrb[0].mxu0
    %2630 = vdwg.mxu0
    %v2631 = vadd.f32 %v2351, %v2625
    %v2632 = vadd.f32 %v2354, %v2628
    %2633 = vrot.lane.b32.xlu0 %v1809, 80
    %v2634 = vpop.permute.xlu0 %2633
    %2635 = vrot.lane.b32.xlu0 %v1809, 16
    %v2636 = vpop.permute.xlu0 %2635
    %v2638 = vsel %vm209, %v2634, 0
    %v2641 = vsel %vm209, %v2636, 0
    %2643 = vmatprep.subr.bf16.mxu0 0
    %2644 = vmatpush1.bf16.xpose.msra.mxu0 %v2641
    %2645 = vmatprep.subr.bf16.mxu0 0
    %2646 = vmatpush1.bf16.xpose.msra.mxu0 0
    %2647 = vmatprep.subr.bf16.mxu0 0
    %2648 = vmatpush1.bf16.xpose.msra.mxu0 0
    %2649 = vmatprep.subr.bf16.mxu0 0
    %2650 = vmatpush1.bf16.xpose.msra.mxu0 0
    %2651 = vmatprep.subr.bf16.mxu0 0
    %2652 = vmatpush1.bf16.xpose.msra.mxu0 0
    %2653 = vmatprep.subr.bf16.mxu0 0
    %2654 = vmatpush1.bf16.xpose.msra.mxu0 0
    %2655 = vmatprep.subr.bf16.mxu0 0
    %2656 = vmatpush1.bf16.xpose.msra.mxu0 0
    %2657 = vmatprep.subr.bf16.mxu0 0
    %2658 = vmatpush1.bf16.xpose.msra.mxu0 0
    %2659 = vmatprep.subr.bf16.mxu0 0
    %2660 = vmatpush1.bf16.xpose.msra.mxu0 0
    %2661 = vmatprep.subr.bf16.mxu0 0
    %2662 = vmatpush1.bf16.xpose.msra.mxu0 0
    %2663 = vmatprep.subr.bf16.mxu0 0
    %2664 = vmatpush1.bf16.xpose.msra.mxu0 0
    %2665 = vmatprep.subr.bf16.mxu0 0
    %2666 = vmatpush1.bf16.xpose.msra.mxu0 0
    %2667 = vmatprep.subr.bf16.mxu0 0
    %2668 = vmatpush1.bf16.xpose.msra.mxu0 0
    %2669 = vmatprep.subr.bf16.mxu0 0
    %2670 = vmatpush1.bf16.xpose.msra.mxu0 0
    %2671 = vmatprep.subr.bf16.mxu0 0
    %2672 = vmatpush1.bf16.xpose.msra.mxu0 0
    %2673 = vmatprep.subr.bf16.mxu0 0
    %2674 = vmatpush1.bf16.xpose.msra.mxu0 0
    %2675 = vmatprep.mubr.bf16.mxu0 0
    %2676 = vmatmul.mubr.bf16.gmra.mrb[0].mxu0 %v2638
    %v2677 = vpop.f32.mrb[0].mxu0
    %v2678 = vadd.f32 %v53, %v2677
    %v2679 = vpop.f32.mrb[0].mxu0
    %v2680 = vpop.f32.mrb[0].mxu0
    %v2681 = vpop.f32.mrb[0].mxu0
    %2682 = vdwg.mxu0
    %2683 = vrot.lane.b32.xlu0 %v1810, 80
    %v2684 = vpop.permute.xlu0 %2683
    %2685 = vrot.lane.b32.xlu0 %v1810, 16
    %v2686 = vpop.permute.xlu0 %2685
    %v2688 = vsel %vm209, %v2684, 0
    %v2691 = vsel %vm209, %v2686, 0
    %2693 = vmatprep.subr.bf16.mxu0 0
    %2694 = vmatpush1.bf16.xpose.msra.mxu0 %v2691
    %2695 = vmatprep.subr.bf16.mxu0 0
    %2696 = vmatpush1.bf16.xpose.msra.mxu0 0
    %2697 = vmatprep.subr.bf16.mxu0 0
    %2698 = vmatpush1.bf16.xpose.msra.mxu0 0
    %2699 = vmatprep.subr.bf16.mxu0 0
    %2700 = vmatpush1.bf16.xpose.msra.mxu0 0
    %2701 = vmatprep.subr.bf16.mxu0 0
    %2702 = vmatpush1.bf16.xpose.msra.mxu0 0
    %2703 = vmatprep.subr.bf16.mxu0 0
    %2704 = vmatpush1.bf16.xpose.msra.mxu0 0
    %2705 = vmatprep.subr.bf16.mxu0 0
    %2706 = vmatpush1.bf16.xpose.msra.mxu0 0
    %2707 = vmatprep.subr.bf16.mxu0 0
    %2708 = vmatpush1.bf16.xpose.msra.mxu0 0
    %2709 = vmatprep.subr.bf16.mxu0 0
    %2710 = vmatpush1.bf16.xpose.msra.mxu0 0
    %2711 = vmatprep.subr.bf16.mxu0 0
    %2712 = vmatpush1.bf16.xpose.msra.mxu0 0
    %2713 = vmatprep.subr.bf16.mxu0 0
    %2714 = vmatpush1.bf16.xpose.msra.mxu0 0
    %2715 = vmatprep.subr.bf16.mxu0 0
    %2716 = vmatpush1.bf16.xpose.msra.mxu0 0
    %2717 = vmatprep.subr.bf16.mxu0 0
    %2718 = vmatpush1.bf16.xpose.msra.mxu0 0
    %2719 = vmatprep.subr.bf16.mxu0 0
    %2720 = vmatpush1.bf16.xpose.msra.mxu0 0
    %2721 = vmatprep.subr.bf16.mxu0 0
    %2722 = vmatpush1.bf16.xpose.msra.mxu0 0
    %2723 = vmatprep.subr.bf16.mxu0 0
    %2724 = vmatpush1.bf16.xpose.msra.mxu0 0
    %2725 = vmatprep.mubr.bf16.mxu0 0
    %2726 = vmatmul.mubr.bf16.gmra.mrb[0].mxu0 %v2688
    %v2727 = vpop.f32.mrb[0].mxu0
    %v2728 = vadd.f32 %v53, %v2727
    %v2729 = vpop.f32.mrb[0].mxu0
    %v2730 = vpop.f32.mrb[0].mxu0
    %v2731 = vpop.f32.mrb[0].mxu0
    %2732 = vdwg.mxu0
    %v2733 = vsel %vm305, %v2678, -inf
    %2734 = vmax.xlane.f32.xlu0 %v2733
    %v2735 = vpop.xlane.xlu0 %2734
    %v2736 = vsel %vm305, %v2728, -inf
    %2737 = vmax.xlane.f32.xlu0 %v2736
    %v2738 = vpop.xlane.xlu0 %2737
    %v2739 = vsub.f32 %v2678, %v2735
    %v2740 = vsub.f32 %v2728, %v2738
    %v2741 = vmul.f32 %v2739, 1.442695
    %v2742 = vpow.pop %v2741
    %v2743 = vmul.f32 %v2740, 1.442695
    %v2744 = vpow.pop %v2743
    %v2745 = vsel %vm305, %v2742, 0.0
    %2746 = vadd.xlane.f32.xlu0 %v2745
    %v2747 = vpop.xlane.xlu0 %2746
    %v2748 = vsel %vm305, %v2744, 0.0
    %2749 = vadd.xlane.f32.xlu0 %v2748
    %v2750 = vpop.xlane.xlu0 %2749
    %v2751 = vrcp.pop %v2747
    %v2752 = vrcp.pop %v2750
    %v2753 = vmul.f32 %v2742, %v2751
    %v2754 = vmul.f32 %v2744, %v2752
    %v2755 = vpack.c.bf16 %v2753, %v2753
    %v2756 = vpack.c.bf16 %v2754, %v2754
    %2757 = vrot.lane.b32.xlu0 %v1811, 80
    %v2758 = vpop.permute.xlu0 %2757
    %v2760 = vsel %vm305, %v2755, 0
    %v2763 = vsel %vm333, %v2758, 0
    %2765 = vmatprep.subr.bf16.mxu0 0
    %2766 = vmatpush1.bf16.msra.mxu0 %v2763
    %2767 = vmatprep.subr.bf16.mxu0 0
    %2768 = vmatpush1.bf16.msra.mxu0 0
    %2769 = vmatprep.subr.bf16.mxu0 0
    %2770 = vmatpush1.bf16.msra.mxu0 0
    %2771 = vmatprep.subr.bf16.mxu0 0
    %2772 = vmatpush1.bf16.msra.mxu0 0
    %2773 = vmatprep.subr.bf16.mxu0 0
    %2774 = vmatpush1.bf16.msra.mxu0 0
    %2775 = vmatprep.subr.bf16.mxu0 0
    %2776 = vmatpush1.bf16.msra.mxu0 0
    %2777 = vmatprep.subr.bf16.mxu0 0
    %2778 = vmatpush1.bf16.msra.mxu0 0
    %2779 = vmatprep.subr.bf16.mxu0 0
    %2780 = vmatpush1.bf16.msra.mxu0 0
    %2781 = vmatprep.subr.bf16.mxu0 0
    %2782 = vmatpush1.bf16.msra.mxu0 0
    %2783 = vmatprep.subr.bf16.mxu0 0
    %2784 = vmatpush1.bf16.msra.mxu0 0
    %2785 = vmatprep.subr.bf16.mxu0 0
    %2786 = vmatpush1.bf16.msra.mxu0 0
    %2787 = vmatprep.subr.bf16.mxu0 0
    %2788 = vmatpush1.bf16.msra.mxu0 0
    %2789 = vmatprep.subr.bf16.mxu0 0
    %2790 = vmatpush1.bf16.msra.mxu0 0
    %2791 = vmatprep.subr.bf16.mxu0 0
    %2792 = vmatpush1.bf16.msra.mxu0 0
    %2793 = vmatprep.subr.bf16.mxu0 0
    %2794 = vmatpush1.bf16.msra.mxu0 0
    %2795 = vmatprep.subr.bf16.mxu0 0
    %2796 = vmatpush1.bf16.msra.mxu0 0
    %2797 = vmatprep.mubr.bf16.mxu0 0
    %2798 = vmatmul.mubr.bf16.gmra.mrb[0].mxu0 %v2760
    %v2799 = vpop.f32.mrb[0].mxu0
    %v2800 = vadd.f32 0.0, %v2799
    %v2801 = vpop.f32.mrb[0].mxu0
    %v2802 = vpop.f32.mrb[0].mxu0
    %v2803 = vpop.f32.mrb[0].mxu0
    %2804 = vdwg.mxu0
    %2805 = vrot.lane.b32.xlu0 %v1812, 80
    %v2806 = vpop.permute.xlu0 %2805
    %v2808 = vsel %vm305, %v2756, 0
    %v2811 = vsel %vm333, %v2806, 0
    %2813 = vmatprep.subr.bf16.mxu0 0
    %2814 = vmatpush1.bf16.msra.mxu0 %v2811
    %2815 = vmatprep.subr.bf16.mxu0 0
    %2816 = vmatpush1.bf16.msra.mxu0 0
    %2817 = vmatprep.subr.bf16.mxu0 0
    %2818 = vmatpush1.bf16.msra.mxu0 0
    %2819 = vmatprep.subr.bf16.mxu0 0
    %2820 = vmatpush1.bf16.msra.mxu0 0
    %2821 = vmatprep.subr.bf16.mxu0 0
    %2822 = vmatpush1.bf16.msra.mxu0 0
    %2823 = vmatprep.subr.bf16.mxu0 0
    %2824 = vmatpush1.bf16.msra.mxu0 0
    %2825 = vmatprep.subr.bf16.mxu0 0
    %2826 = vmatpush1.bf16.msra.mxu0 0
    %2827 = vmatprep.subr.bf16.mxu0 0
    %2828 = vmatpush1.bf16.msra.mxu0 0
    %2829 = vmatprep.subr.bf16.mxu0 0
    %2830 = vmatpush1.bf16.msra.mxu0 0
    %2831 = vmatprep.subr.bf16.mxu0 0
    %2832 = vmatpush1.bf16.msra.mxu0 0
    %2833 = vmatprep.subr.bf16.mxu0 0
    %2834 = vmatpush1.bf16.msra.mxu0 0
    %2835 = vmatprep.subr.bf16.mxu0 0
    %2836 = vmatpush1.bf16.msra.mxu0 0
    %2837 = vmatprep.subr.bf16.mxu0 0
    %2838 = vmatpush1.bf16.msra.mxu0 0
    %2839 = vmatprep.subr.bf16.mxu0 0
    %2840 = vmatpush1.bf16.msra.mxu0 0
    %2841 = vmatprep.subr.bf16.mxu0 0
    %2842 = vmatpush1.bf16.msra.mxu0 0
    %2843 = vmatprep.subr.bf16.mxu0 0
    %2844 = vmatpush1.bf16.msra.mxu0 0
    %2845 = vmatprep.mubr.bf16.mxu0 0
    %2846 = vmatmul.mubr.bf16.gmra.mrb[0].mxu0 %v2808
    %v2847 = vpop.f32.mrb[0].mxu0
    %v2848 = vadd.f32 0.0, %v2847
    %v2849 = vpop.f32.mrb[0].mxu0
    %v2850 = vpop.f32.mrb[0].mxu0
    %v2851 = vpop.f32.mrb[0].mxu0
    %2852 = vdwg.mxu0
    %s2853 = scalar_lea.vmem %s5, 56
    %v2854 = vld [vmem:[%s2853] sm:$0xf]
    %v2855 = vld [vmem:[%s2853 + $0x4] sm:$0xf]
    %v2856 = vpack.c.bf16 %v2848, %v2800
    %v2859 = vunpack.c.l.b16 %v2854
    %v2860 = vunpack.c.l.b16 %v2855
    %v2861 = vpack.c.b16 %v2860, %v2859
    %v2864 = vsel %vm209, %v2856, 0
    %2866 = vmatprep.subr.bf16.mxu0 0
    %2867 = vmatpush1.bf16.msra.mxu0 %v2861
    %2868 = vmatprep.subr.bf16.mxu0 0
    %2869 = vmatpush1.bf16.msra.mxu0 0
    %2870 = vmatprep.subr.bf16.mxu0 0
    %2871 = vmatpush1.bf16.msra.mxu0 0
    %2872 = vmatprep.subr.bf16.mxu0 0
    %2873 = vmatpush1.bf16.msra.mxu0 0
    %2874 = vmatprep.subr.bf16.mxu0 0
    %2875 = vmatpush1.bf16.msra.mxu0 0
    %2876 = vmatprep.subr.bf16.mxu0 0
    %2877 = vmatpush1.bf16.msra.mxu0 0
    %2878 = vmatprep.subr.bf16.mxu0 0
    %2879 = vmatpush1.bf16.msra.mxu0 0
    %2880 = vmatprep.subr.bf16.mxu0 0
    %2881 = vmatpush1.bf16.msra.mxu0 0
    %2882 = vmatprep.subr.bf16.mxu0 0
    %2883 = vmatpush1.bf16.msra.mxu0 0
    %2884 = vmatprep.subr.bf16.mxu0 0
    %2885 = vmatpush1.bf16.msra.mxu0 0
    %2886 = vmatprep.subr.bf16.mxu0 0
    %2887 = vmatpush1.bf16.msra.mxu0 0
    %2888 = vmatprep.subr.bf16.mxu0 0
    %2889 = vmatpush1.bf16.msra.mxu0 0
    %2890 = vmatprep.subr.bf16.mxu0 0
    %2891 = vmatpush1.bf16.msra.mxu0 0
    %2892 = vmatprep.subr.bf16.mxu0 0
    %2893 = vmatpush1.bf16.msra.mxu0 0
    %2894 = vmatprep.subr.bf16.mxu0 0
    %2895 = vmatpush1.bf16.msra.mxu0 0
    %2896 = vmatprep.subr.bf16.mxu0 0
    %2897 = vmatpush1.bf16.msra.mxu0 0
    %2898 = vmatprep.mubr.bf16.mxu0 0
    %2899 = vmatmul.mubr.bf16.gmra.mrb[0].mxu0 %v2864
    %v2900 = vpop.f32.mrb[0].mxu0
    %v2901 = vadd.f32 0.0, %v2900
    %v2902 = vpop.f32.mrb[0].mxu0
    %v2903 = vpop.f32.mrb[0].mxu0
    %v2904 = vadd.f32 0.0, %v2903
    %v2905 = vpop.f32.mrb[0].mxu0
    %2906 = vdwg.mxu0
    %v2907 = vadd.f32 %v2631, %v2901
    %v2908 = vadd.f32 %v2632, %v2904
    %v2909 = vadd.f32 %v1658, %v2907
    %v2910 = vadd.f32 %v1659, %v2908
    %v2911 = vlaneseq
    %v2912 = vshrl.u32 %v2911, 7
    %v2913 = vsub.s32 4, %v2912
    %v2914 = vrot.slane %v1661, %v2913
    %v2915 = vadd.f32 %v2909, %v2914
    %v2916 = vadd.f32 %v2910, %v2914
    %v2917 = vsel %vm55, %v2915, 0.0
    %2918 = vadd.xlane.f32.xlu0 %v2917
    %v2919 = vpop.xlane.xlu0 %2918
    %v2920 = vsel %vm55, %v2916, 0.0
    %2921 = vadd.xlane.f32.xlu0 %v2920
    %v2922 = vpop.xlane.xlu0 %2921
    %v2923 = vmul.f32 %v2919, %v62
    %v2924 = vmul.f32 %v2922, %v62
    %v2925 = vsub.f32 %v2915, %v2923
    %v2926 = vsub.f32 %v2916, %v2924
    %v2927 = vmul.f32 %v2925, %v2925
    %v2928 = vmul.f32 %v2926, %v2926
    %v2929 = vsel %vm55, %v2927, 0.0
    %2930 = vadd.xlane.f32.xlu0 %v2929
    %v2931 = vpop.xlane.xlu0 %2930
    %v2932 = vsel %vm55, %v2928, 0.0
    %2933 = vadd.xlane.f32.xlu0 %v2932
    %v2934 = vpop.xlane.xlu0 %2933
    %v2935 = vmul.f32 %v2931, %v62
    %v2936 = vmul.f32 %v2934, %v62
    %v2937 = vadd.f32 %v2935, 1e-05
    %v2938 = vadd.f32 %v2936, 1e-05
    %v2939 = vrsqrt.pop %v2937
    %v2940 = vrsqrt.pop %v2938
    %v2941 = vmul.f32 %v2925, %v2939
    %v2942 = vmul.f32 %v2926, %v2940
    %v2943 = vlaneseq
    %v2944 = vshrl.u32 %v2943, 7
    %v2945 = vsub.s32 2, %v2944
    %v2946 = vrot.slane %v1661, %v2945
    %v2947 = vmul.f32 %v2941, %v2946
    %v2948 = vmul.f32 %v2942, %v2946
    %v2949 = vlaneseq
    %v2950 = vshrl.u32 %v2949, 7
    %v2951 = vsub.s32 3, %v2950
    %v2952 = vrot.slane %v1661, %v2951
    %v2953 = vadd.f32 %v2947, %v2952
    %v2954 = vadd.f32 %v2948, %v2952
    %s2955 = scalar_lea.vmem %s6, 64
    %v2956 = vld [vmem:[%s2955] sm:$0xff]
    %v2957 = vld [vmem:[%s2955 + $0x8] sm:$0xff]
    %v2958 = vld [vmem:[%s2955 + $0x10] sm:$0xff]
    %v2959 = vld [vmem:[%s2955 + $0x18] sm:$0xff]
    %v2960 = vld [vmem:[%s2955 + $0x20] sm:$0xff]
    %v2961 = vld [vmem:[%s2955 + $0x28] sm:$0xff]
    %v2962 = vld [vmem:[%s2955 + $0x30] sm:$0xff]
    %v2963 = vld [vmem:[%s2955 + $0x38] sm:$0xff]
    %v2964 = vpack.c.bf16 %v2954, %v2953
    %s2965 = scalar_lea.vmem %s7, 2
    %v2966 = vld [vmem:[%s2965] sm:$0x3]
    %v2968 = vlaneseq
    %v2969 = vshrl.u32 %v2968, 7
    %v2970 = vsub.s32 0, %v2969
    %v2971 = vrot.slane %v2966, %v2970
    %v2972 = vlaneseq
    %v2973 = vshrl.u32 %v2972, 7
    %v2974 = vsub.s32 1, %v2973
    %v2975 = vrot.slane %v2966, %v2974
    %v2986 = vunpack.c.l.b16 %v2956
    %v2987 = vunpack.c.h.b16 %v2956
    %v2988 = vunpack.c.l.b16 %v2957
    %v2989 = vunpack.c.h.b16 %v2957
    %v2990 = vunpack.c.l.b16 %v2958
    %v2991 = vunpack.c.h.b16 %v2958
    %v2992 = vunpack.c.l.b16 %v2959
    %v2993 = vunpack.c.h.b16 %v2959
    %v2994 = vunpack.c.l.b16 %v2960
    %v2995 = vunpack.c.h.b16 %v2960
    %v2996 = vunpack.c.l.b16 %v2961
    %v2997 = vunpack.c.h.b16 %v2961
    %v2998 = vunpack.c.l.b16 %v2962
    %v2999 = vunpack.c.h.b16 %v2962
    %v3000 = vunpack.c.l.b16 %v2963
    %v3001 = vunpack.c.h.b16 %v2963
    %v3002 = vpack.c.b16 %v2988, %v2986
    %v3003 = vpack.c.b16 %v2989, %v2987
    %v3004 = vpack.c.b16 %v2992, %v2990
    %v3005 = vpack.c.b16 %v2993, %v2991
    %v3006 = vpack.c.b16 %v2996, %v2994
    %v3007 = vpack.c.b16 %v2997, %v2995
    %v3008 = vpack.c.b16 %v3000, %v2998
    %v3009 = vpack.c.b16 %v3001, %v2999
    %v3019 = vsel %vm55, %v2964, 0
    %3021 = vmatprep.subr.bf16.mxu0 %v3003
    %3022 = vmatpush1.bf16.msra.mxu0 %v3002
    %3023 = vmatprep.subr.bf16.mxu0 %v3005
    %3024 = vmatpush1.bf16.msra.mxu0 %v3004
    %3025 = vmatprep.subr.bf16.mxu0 %v3007
    %3026 = vmatpush1.bf16.msra.mxu0 %v3006
    %3027 = vmatprep.subr.bf16.mxu0 %v3009
    %3028 = vmatpush1.bf16.msra.mxu0 %v3008
    %3029 = vmatprep.subr.bf16.mxu0 0
    %3030 = vmatpush1.bf16.msra.mxu0 0
    %3031 = vmatprep.subr.bf16.mxu0 0
    %3032 = vmatpush1.bf16.msra.mxu0 0
    %3033 = vmatprep.subr.bf16.mxu0 0
    %3034 = vmatpush1.bf16.msra.mxu0 0
    %3035 = vmatprep.subr.bf16.mxu0 0
    %3036 = vmatpush1.bf16.msra.mxu0 0
    %3037 = vmatprep.subr.bf16.mxu0 0
    %3038 = vmatpush1.bf16.msra.mxu0 0
    %3039 = vmatprep.subr.bf16.mxu0 0
    %3040 = vmatpush1.bf16.msra.mxu0 0
    %3041 = vmatprep.subr.bf16.mxu0 0
    %3042 = vmatpush1.bf16.msra.mxu0 0
    %3043 = vmatprep.subr.bf16.mxu0 0
    %3044 = vmatpush1.bf16.msra.mxu0 0
    %3045 = vmatprep.subr.bf16.mxu0 0
    %3046 = vmatpush1.bf16.msra.mxu0 0
    %3047 = vmatprep.subr.bf16.mxu0 0
    %3048 = vmatpush1.bf16.msra.mxu0 0
    %3049 = vmatprep.subr.bf16.mxu0 0
    %3050 = vmatpush1.bf16.msra.mxu0 0
    %3051 = vmatprep.subr.bf16.mxu0 0
    %3052 = vmatpush1.bf16.msra.mxu0 0
    %3053 = vmatprep.mubr.bf16.mxu0 0
    %3054 = vmatmul.mubr.bf16.gmra.mrb[0].mxu0 %v3019
    %v3055 = vpop.f32.mrb[0].mxu0
    %v3056 = vadd.f32 %v2971, %v3055
    %v3057 = vpop.f32.mrb[0].mxu0
    %v3058 = vadd.f32 %v2975, %v3057
    %v3059 = vpop.f32.mrb[0].mxu0
    %v3060 = vadd.f32 %v2971, %v3059
    %v3061 = vpop.f32.mrb[0].mxu0
    %v3062 = vadd.f32 %v2975, %v3061
    %3063 = vdwg.mxu0
    %v3064 = vmul.f32 %v3056, -1.702
    %v3065 = vmul.f32 %v3058, -1.702
    %v3066 = vmul.f32 %v3060, -1.702
    %v3067 = vmul.f32 %v3062, -1.702
    %v3068 = vmul.f32 %v3064, 1.442695
    %v3069 = vpow.pop %v3068
    %v3070 = vmul.f32 %v3065, 1.442695
    %v3071 = vpow.pop %v3070
    %v3072 = vmul.f32 %v3066, 1.442695
    %v3073 = vpow.pop %v3072
    %v3074 = vmul.f32 %v3067, 1.442695
    %v3075 = vpow.pop %v3074
    %v3076 = vadd.f32 %v3069, 1.0
    %v3077 = vadd.f32 %v3071, 1.0
    %v3078 = vadd.f32 %v3073, 1.0
    %v3079 = vadd.f32 %v3075, 1.0
    %v3080 = vrcp.pop %v3076
    %v3081 = vrcp.pop %v3077
    %v3082 = vrcp.pop %v3078
    %v3083 = vrcp.pop %v3079
    %v3084 = vmul.f32 %v3056, %v3080
    %v3085 = vmul.f32 %v3058, %v3081
    %v3086 = vmul.f32 %v3060, %v3082
    %v3087 = vmul.f32 %v3062, %v3083
    %s3088 = scalar_lea.vmem %s8, 128
    %v3089 = vld [vmem:[%s3088] sm:$0xf]
    %v3090 = vld [vmem:[%s3088 + $0x4] sm:$0xf]
    %v3091 = vld [vmem:[%s3088 + $0x8] sm:$0xf]
    %v3092 = vld [vmem:[%s3088 + $0xc] sm:$0xf]
    %v3093 = vld [vmem:[%s3088 + $0x10] sm:$0xf]
    %v3094 = vld [vmem:[%s3088 + $0x14] sm:$0xf]
    %v3095 = vld [vmem:[%s3088 + $0x18] sm:$0xf]
    %v3096 = vld [vmem:[%s3088 + $0x1c] sm:$0xf]
    %v3097 = vld [vmem:[%s3088 + $0x20] sm:$0xf]
    %v3098 = vld [vmem:[%s3088 + $0x24] sm:$0xf]
    %v3099 = vld [vmem:[%s3088 + $0x28] sm:$0xf]
    %v3100 = vld [vmem:[%s3088 + $0x2c] sm:$0xf]
    %v3101 = vld [vmem:[%s3088 + $0x30] sm:$0xf]
    %v3102 = vld [vmem:[%s3088 + $0x34] sm:$0xf]
    %v3103 = vld [vmem:[%s3088 + $0x38] sm:$0xf]
    %v3104 = vld [vmem:[%s3088 + $0x3c] sm:$0xf]
    %v3105 = vld [vmem:[%s3088 + $0x40] sm:$0xf]
    %v3106 = vld [vmem:[%s3088 + $0x44] sm:$0xf]
    %v3107 = vld [vmem:[%s3088 + $0x48] sm:$0xf]
    %v3108 = vld [vmem:[%s3088 + $0x4c] sm:$0xf]
    %v3109 = vld [vmem:[%s3088 + $0x50] sm:$0xf]
    %v3110 = vld [vmem:[%s3088 + $0x54] sm:$0xf]
    %v3111 = vld [vmem:[%s3088 + $0x58] sm:$0xf]
    %v3112 = vld [vmem:[%s3088 + $0x5c] sm:$0xf]
    %v3113 = vld [vmem:[%s3088 + $0x60] sm:$0xf]
    %v3114 = vld [vmem:[%s3088 + $0x64] sm:$0xf]
    %v3115 = vld [vmem:[%s3088 + $0x68] sm:$0xf]
    %v3116 = vld [vmem:[%s3088 + $0x6c] sm:$0xf]
    %v3117 = vld [vmem:[%s3088 + $0x70] sm:$0xf]
    %v3118 = vld [vmem:[%s3088 + $0x74] sm:$0xf]
    %v3119 = vld [vmem:[%s3088 + $0x78] sm:$0xf]
    %v3120 = vld [vmem:[%s3088 + $0x7c] sm:$0xf]
    %v3121 = vpack.c.bf16 %v3086, %v3084
    %v3122 = vpack.c.bf16 %v3087, %v3085
    %v3155 = vunpack.c.l.b16 %v3089
    %v3156 = vunpack.c.l.b16 %v3090
    %v3157 = vunpack.c.l.b16 %v3091
    %v3158 = vunpack.c.l.b16 %v3092
    %v3159 = vunpack.c.l.b16 %v3093
    %v3160 = vunpack.c.l.b16 %v3094
    %v3161 = vunpack.c.l.b16 %v3095
    %v3162 = vunpack.c.l.b16 %v3096
    %v3163 = vunpack.c.l.b16 %v3097
    %v3164 = vunpack.c.l.b16 %v3098
    %v3165 = vunpack.c.l.b16 %v3099
    %v3166 = vunpack.c.l.b16 %v3100
    %v3167 = vunpack.c.l.b16 %v3101
    %v3168 = vunpack.c.l.b16 %v3102
    %v3169 = vunpack.c.l.b16 %v3103
    %v3170 = vunpack.c.l.b16 %v3104
    %v3171 = vunpack.c.l.b16 %v3105
    %v3172 = vunpack.c.l.b16 %v3106
    %v3173 = vunpack.c.l.b16 %v3107
    %v3174 = vunpack.c.l.b16 %v3108
    %v3175 = vunpack.c.l.b16 %v3109
    %v3176 = vunpack.c.l.b16 %v3110
    %v3177 = vunpack.c.l.b16 %v3111
    %v3178 = vunpack.c.l.b16 %v3112
    %v3179 = vunpack.c.l.b16 %v3113
    %v3180 = vunpack.c.l.b16 %v3114
    %v3181 = vunpack.c.l.b16 %v3115
    %v3182 = vunpack.c.l.b16 %v3116
    %v3183 = vunpack.c.l.b16 %v3117
    %v3184 = vunpack.c.l.b16 %v3118
    %v3185 = vunpack.c.l.b16 %v3119
    %v3186 = vunpack.c.l.b16 %v3120
    %v3187 = vpack.c.b16 %v3156, %v3155
    %v3188 = vpack.c.b16 %v3158, %v3157
    %v3189 = vpack.c.b16 %v3160, %v3159
    %v3190 = vpack.c.b16 %v3162, %v3161
    %v3191 = vpack.c.b16 %v3164, %v3163
    %v3192 = vpack.c.b16 %v3166, %v3165
    %v3193 = vpack.c.b16 %v3168, %v3167
    %v3194 = vpack.c.b16 %v3170, %v3169
    %v3195 = vpack.c.b16 %v3172, %v3171
    %v3196 = vpack.c.b16 %v3174, %v3173
    %v3197 = vpack.c.b16 %v3176, %v3175
    %v3198 = vpack.c.b16 %v3178, %v3177
    %v3199 = vpack.c.b16 %v3180, %v3179
    %v3200 = vpack.c.b16 %v3182, %v3181
    %v3201 = vpack.c.b16 %v3184, %v3183
    %v3202 = vpack.c.b16 %v3186, %v3185
    %3219 = vmatprep.subr.bf16.mxu0 0
    %3220 = vmatpush1.bf16.msra.mxu0 %v3187
    %3221 = vmatprep.subr.bf16.mxu0 0
    %3222 = vmatpush1.bf16.msra.mxu0 %v3188
    %3223 = vmatprep.subr.bf16.mxu0 0
    %3224 = vmatpush1.bf16.msra.mxu0 %v3189
    %3225 = vmatprep.subr.bf16.mxu0 0
    %3226 = vmatpush1.bf16.msra.mxu0 %v3190
    %3227 = vmatprep.subr.bf16.mxu0 0
    %3228 = vmatpush1.bf16.msra.mxu0 %v3191
    %3229 = vmatprep.subr.bf16.mxu0 0
    %3230 = vmatpush1.bf16.msra.mxu0 %v3192
    %3231 = vmatprep.subr.bf16.mxu0 0
    %3232 = vmatpush1.bf16.msra.mxu0 %v3193
    %3233 = vmatprep.subr.bf16.mxu0 0
    %3234 = vmatpush1.bf16.msra.mxu0 %v3194
    %3235 = vmatprep.subr.bf16.mxu0 0
    %3236 = vmatpush1.bf16.msra.mxu0 %v3195
    %3237 = vmatprep.subr.bf16.mxu0 0
    %3238 = vmatpush1.bf16.msra.mxu0 %v3196
    %3239 = vmatprep.subr.bf16.mxu0 0
    %3240 = vmatpush1.bf16.msra.mxu0 %v3197
    %3241 = vmatprep.subr.bf16.mxu0 0
    %3242 = vmatpush1.bf16.msra.mxu0 %v3198
    %3243 = vmatprep.subr.bf16.mxu0 0
    %3244 = vmatpush1.bf16.msra.mxu0 %v3199
    %3245 = vmatprep.subr.bf16.mxu0 0
    %3246 = vmatpush1.bf16.msra.mxu0 %v3200
    %3247 = vmatprep.subr.bf16.mxu0 0
    %3248 = vmatpush1.bf16.msra.mxu0 %v3201
    %3249 = vmatprep.subr.bf16.mxu0 0
    %3250 = vmatpush1.bf16.msra.mxu0 %v3202
    %3251 = vmatprep.mubr.bf16.mxu0 %v3122
    %3252 = vmatmul.mubr.bf16.gmra.mrb[0].mxu0 %v3121
    %v3253 = vpop.f32.mrb[0].mxu0
    %v3254 = vadd.f32 0.0, %v3253
    %v3255 = vpop.f32.mrb[0].mxu0
    %v3256 = vpop.f32.mrb[0].mxu0
    %v3257 = vadd.f32 0.0, %v3256
    %v3258 = vpop.f32.mrb[0].mxu0
    %3259 = vdwg.mxu0
    %v3260 = vadd.f32 %v2915, %v3254
    %v3261 = vadd.f32 %v2916, %v3257
    %v3262 = vlaneseq
    %v3263 = vshrl.u32 %v3262, 7
    %v3264 = vsub.s32 5, %v3263
    %v3265 = vrot.slane %v1661, %v3264
    %v3266 = vadd.f32 %v3260, %v3265
    %v3267 = vadd.f32 %v3261, %v3265
    %v3268 = vld [vmem:[%s2] sm:$0x3]
    %v3269 = vmul.u32 %v49, 8
    %v3270 = vadd.s32 %v3268, %v3269
    %3271 = vset.pattern.permute.xlu0 0
    %3272 = vperm.xlu0 %3271, %v3270
    %v3273 = vpop.permute.xlu0 %3272
    %vm3274 = vcmp.eq.s32.totalorder %v51, %v3273
    %v3275 = vsel %vm3274, 1, 0
    %v3276 = vcvt.s32.f32 %v3275
    %v3278 = vsel %vm209, %v3276, 0
    %3280 = vmatprep.subr.mxu0 0.0
    %3281 = vmatpush1.msra.mxu0 %v3266
    %3282 = vmatprep.subr.mxu0 0.0
    %3283 = vmatpush1.msra.mxu0 %v3267
    %3284 = vmatprep.subr.mxu0 0.0
    %3285 = vmatpush1.msra.mxu0 0.0
    %3286 = vmatprep.subr.mxu0 0.0
    %3287 = vmatpush1.msra.mxu0 0.0
    %3288 = vmatprep.subr.mxu0 0.0
    %3289 = vmatpush1.msra.mxu0 0.0
    %3290 = vmatprep.subr.mxu0 0.0
    %3291 = vmatpush1.msra.mxu0 0.0
    %3292 = vmatprep.subr.mxu0 0.0
    %3293 = vmatpush1.msra.mxu0 0.0
    %3294 = vmatprep.subr.mxu0 0.0
    %3295 = vmatpush1.msra.mxu0 0.0
    %3296 = vmatprep.subr.mxu0 0.0
    %3297 = vmatpush1.msra.mxu0 0.0
    %3298 = vmatprep.subr.mxu0 0.0
    %3299 = vmatpush1.msra.mxu0 0.0
    %3300 = vmatprep.subr.mxu0 0.0
    %3301 = vmatpush1.msra.mxu0 0.0
    %3302 = vmatprep.subr.mxu0 0.0
    %3303 = vmatpush1.msra.mxu0 0.0
    %3304 = vmatprep.subr.mxu0 0.0
    %3305 = vmatpush1.msra.mxu0 0.0
    %3306 = vmatprep.subr.mxu0 0.0
    %3307 = vmatpush1.msra.mxu0 0.0
    %3308 = vmatprep.subr.mxu0 0.0
    %3309 = vmatpush1.msra.mxu0 0.0
    %3310 = vmatprep.subr.mxu0 0.0
    %3311 = vmatpush1.msra.mxu0 0.0
    %3312 = vmatprep.subr.mxu0 0.0
    %3313 = vmatpush1.msra.mxu0 0.0
    %3314 = vmatprep.subr.mxu0 0.0
    %3315 = vmatpush1.msra.mxu0 0.0
    %3316 = vmatprep.subr.mxu0 0.0
    %3317 = vmatpush1.msra.mxu0 0.0
    %3318 = vmatprep.subr.mxu0 0.0
    %3319 = vmatpush1.msra.mxu0 0.0
    %3320 = vmatprep.subr.mxu0 0.0
    %3321 = vmatpush1.msra.mxu0 0.0
    %3322 = vmatprep.subr.mxu0 0.0
    %3323 = vmatpush1.msra.mxu0 0.0
    %3324 = vmatprep.subr.mxu0 0.0
    %3325 = vmatpush1.msra.mxu0 0.0
    %3326 = vmatprep.subr.mxu0 0.0
    %3327 = vmatpush1.msra.mxu0 0.0
    %3328 = vmatprep.subr.mxu0 0.0
    %3329 = vmatpush1.msra.mxu0 0.0
    %3330 = vmatprep.subr.mxu0 0.0
    %3331 = vmatpush1.msra.mxu0 0.0
    %3332 = vmatprep.subr.mxu0 0.0
    %3333 = vmatpush1.msra.mxu0 0.0
    %3334 = vmatprep.subr.mxu0 0.0
    %3335 = vmatpush1.msra.mxu0 0.0
    %3336 = vmatprep.subr.mxu0 0.0
    %3337 = vmatpush1.msra.mxu0 0.0
    %3338 = vmatprep.subr.mxu0 0.0
    %3339 = vmatpush1.msra.mxu0 0.0
    %3340 = vmatprep.subr.mxu0 0.0
    %3341 = vmatpush1.msra.mxu0 0.0
    %3342 = vmatprep.subr.mxu0 0.0
    %3343 = vmatpush1.msra.mxu0 0.0
    %3344 = vmatprep.mubr.f32.mxu0 0.0
    %3345 = vmatmul.mubr.f32.gmra.mrb[0].mxu0 %v3278
    %v3346 = vpop.f32.mrb[0].mxu0
    %v3347 = vadd.f32 0.0, %v3346
    %v3348 = vpop.f32.mrb[0].mxu0
    %3349 = vdwg.mxu0
    %v3350 = vld [vmem:[%s10] sm:$0x1]
    %v3351 = vld [vmem:[%s10 + $0x1] sm:$0x1]
    %vm3352 = vcmask 517120
    %v3353 = vsel %vm3352, %v3347, 0.0
    %3354 = vadd.xlane.f32.xlu0 %v3353
    %v3355 = vpop.xlane.xlu0 %3354
    %v3356 = vmul.f32 %v3355, %v62
    %v3357 = vsub.f32 %v3347, %v3356
    %v3358 = vmul.f32 %v3357, %v3357
    %v3359 = vsel %vm3352, %v3358, 0.0
    %3360 = vadd.xlane.f32.xlu0 %v3359
    %v3361 = vpop.xlane.xlu0 %3360
    %v3362 = vmul.f32 %v3361, %v62
    %v3363 = vadd.f32 %v3362, 1e-05
    %v3364 = vrsqrt.pop %v3363
    %v3365 = vmul.f32 %v3357, %v3364
    %v3366 = vlaneseq
    %v3367 = vshrl.u32 %v3366, 7
    %v3368 = vsub.s32 0, %v3367
    %v3369 = vrot.slane %v3350, %v3368
    %v3370 = vmul.f32 %v3365, %v3369
    %v3371 = vlaneseq
    %v3372 = vshrl.u32 %v3371, 7
    %v3373 = vsub.s32 0, %v3372
    %v3374 = vrot.slane %v3351, %v3373
    %v3375 = vadd.f32 %v3370, %v3374
    %v3376 = vld [vmem:[%s11] sm:$0xff]
    %v3377 = vld [vmem:[%s11 + $0x8] sm:$0xff]
    %v3378 = vld [vmem:[%s11 + $0x10] sm:$0xff]
    %v3379 = vld [vmem:[%s11 + $0x18] sm:$0xff]
    %v3380 = vld [vmem:[%s11 + $0x20] sm:$0xff]
    %v3381 = vld [vmem:[%s11 + $0x28] sm:$0xff]
    %v3382 = vld [vmem:[%s11 + $0x30] sm:$0xff]
    %v3383 = vld [vmem:[%s11 + $0x38] sm:$0xff]
    %v3385 = vsel %vm55, %v3375, 0
    %3387 = vmatprep.subr.mxu0 0.0
    %3388 = vmatpush1.msra.mxu0 %v3376
    %3389 = vmatprep.subr.mxu0 0.0
    %3390 = vmatpush1.msra.mxu0 %v3377
    %3391 = vmatprep.subr.mxu0 0.0
    %3392 = vmatpush1.msra.mxu0 %v3378
    %3393 = vmatprep.subr.mxu0 0.0
    %3394 = vmatpush1.msra.mxu0 %v3379
    %3395 = vmatprep.subr.mxu0 0.0
    %3396 = vmatpush1.msra.mxu0 %v3380
    %3397 = vmatprep.subr.mxu0 0.0
    %3398 = vmatpush1.msra.mxu0 %v3381
    %3399 = vmatprep.subr.mxu0 0.0
    %3400 = vmatpush1.msra.mxu0 %v3382
    %3401 = vmatprep.subr.mxu0 0.0
    %3402 = vmatpush1.msra.mxu0 %v3383
    %3403 = vmatprep.subr.mxu0 0.0
    %3404 = vmatpush1.msra.mxu0 0.0
    %3405 = vmatprep.subr.mxu0 0.0
    %3406 = vmatpush1.msra.mxu0 0.0
    %3407 = vmatprep.subr.mxu0 0.0
    %3408 = vmatpush1.msra.mxu0 0.0
    %3409 = vmatprep.subr.mxu0 0.0
    %3410 = vmatpush1.msra.mxu0 0.0
    %3411 = vmatprep.subr.mxu0 0.0
    %3412 = vmatpush1.msra.mxu0 0.0
    %3413 = vmatprep.subr.mxu0 0.0
    %3414 = vmatpush1.msra.mxu0 0.0
    %3415 = vmatprep.subr.mxu0 0.0
    %3416 = vmatpush1.msra.mxu0 0.0
    %3417 = vmatprep.subr.mxu0 0.0
    %3418 = vmatpush1.msra.mxu0 0.0
    %3419 = vmatprep.subr.mxu0 0.0
    %3420 = vmatpush1.msra.mxu0 0.0
    %3421 = vmatprep.subr.mxu0 0.0
    %3422 = vmatpush1.msra.mxu0 0.0
    %3423 = vmatprep.subr.mxu0 0.0
    %3424 = vmatpush1.msra.mxu0 0.0
    %3425 = vmatprep.subr.mxu0 0.0
    %3426 = vmatpush1.msra.mxu0 0.0
    %3427 = vmatprep.subr.mxu0 0.0
    %3428 = vmatpush1.msra.mxu0 0.0
    %3429 = vmatprep.subr.mxu0 0.0
    %3430 = vmatpush1.msra.mxu0 0.0
    %3431 = vmatprep.subr.mxu0 0.0
    %3432 = vmatpush1.msra.mxu0 0.0
    %3433 = vmatprep.subr.mxu0 0.0
    %3434 = vmatpush1.msra.mxu0 0.0
    %3435 = vmatprep.subr.mxu0 0.0
    %3436 = vmatpush1.msra.mxu0 0.0
    %3437 = vmatprep.subr.mxu0 0.0
    %3438 = vmatpush1.msra.mxu0 0.0
    %3439 = vmatprep.subr.mxu0 0.0
    %3440 = vmatpush1.msra.mxu0 0.0
    %3441 = vmatprep.subr.mxu0 0.0
    %3442 = vmatpush1.msra.mxu0 0.0
    %3443 = vmatprep.subr.mxu0 0.0
    %3444 = vmatpush1.msra.mxu0 0.0
    %3445 = vmatprep.subr.mxu0 0.0
    %3446 = vmatpush1.msra.mxu0 0.0
    %3447 = vmatprep.subr.mxu0 0.0
    %3448 = vmatpush1.msra.mxu0 0.0
    %3449 = vmatprep.subr.mxu0 0.0
    %3450 = vmatpush1.msra.mxu0 0.0
    %3451 = vmatprep.mubr.f32.mxu0 0.0
    %3452 = vmatmul.mubr.f32.gmra.mrb[0].mxu0 %v3385
    %v3453 = vpop.f32.mrb[0].mxu0
    %v3454 = vadd.f32 0.0, %v3453
    %v3455 = vpop.f32.mrb[0].mxu0
    %3456 = vdwg.mxu0
    %vm3457 = vcmask 254976
    %3458 = vst.msk [vmem:[#allocation2] sm:$0x3] %vm3457, %v3454
    // Predicated region
    $region50: #{fwd.1} parent=1 // pred_check
      _
    $region51: #{fwd.1} parent=1 // pred_check_branch
      %3460 = sbr.rel (0) target = $region53
    $region52: #{fwd.1} parent=1 // pred_region
      %s3462 = ssub.s32 32, 32
      %3463 = vsyncadd [#allocation3], %s3462
      %s3465 = sshll.u32 [#allocation2], 4
      %s3466 = int_to_ptr.vmem [resolvable:$true] %s3465
      %3468 = dma.vmem_to_hbm [thread:$0]  %s3466, 32, %s12, [#allocation3]
    $region53: #{fwd.1} parent=1 // pred_fallthru
      _
    // Predicated region
    $region54: #{fwd.1} parent=1 // pred_check
      _
    $region55: #{fwd.1} parent=1 // pred_check_branch
      %3470 = sbr.rel (0) target = $region57
    $region56: #{fwd.1} parent=1 // pred_region
      %3471 = dma.done [#allocation3], 32
    $region57: #{fwd.1} parent=1 // pred_fallthru
      _
    %3472 = vsyncpa [#allocation3], 1

</llo_original>
